<compile_context>
chip_gen: v7x
topology: tpu7x:2x2x1
jax: 0.10.0
libtpu: 0.0.40
codegen_flags: <defaults>
</compile_context>

<pallas_src>
import jax
import jax.numpy as jnp
from jax.experimental import pallas as pl
from jax.experimental.pallas import tpu as pltpu

N = 2          # batch
C_IN = 3       # input_feat
C_OUT = 3      # output_feat
T = 8          # obs_len (== head conv in-channels)
V = 5          # graph nodes (Conv1d(15,1,1) requires V * C_OUT == 15)
KT = 3         # temporal kernel size
PRED = 1       # pred_seq_len


def _tree_sum(terms):
    """Balanced pairwise sum -> short dependency chain (ILP for the VALU)."""
    terms = list(terms)
    while len(terms) > 1:
        nxt = [terms[i] + terms[i + 1] for i in range(0, len(terms) - 1, 2)]
        if len(terms) % 2:
            nxt.append(terms[-1])
        terms = nxt
    return terms[0]


# ---------------- fused Pallas kernel: st_gcn block + tpcnn head ----------------
def _fused_kernel(x_ref, a_ref, a2_ref,
                  s1_ref, b1_ref, alpha1_ref,
                  wt_ref, bt_ref, s2_ref, b2_ref, alpha2_ref,
                  wtp_ref, btp_ref, alpha3_ref, wout_ref, bout_ref,
                  out_ref):
    f32 = jnp.float32
    x = x_ref[...]                                   # (N, C, T, V)
    # A / A2 arrive pre-transposed to (V, T, V); the lamda/beta mix stays in-kernel.
    aeff = 0.4 * a_ref[...] + 0.6 * a2_ref[...]      # (V, T, V), aeff[v,t,w]

    alpha1 = alpha1_ref[0]
    alpha2 = alpha2_ref[0]
    alpha3 = alpha3_ref[0]

    # hoist all conv weights: one SMEM scalar read each, reused at trace time
    wt = [wt_ref[k] for k in range(C_OUT * C_OUT * KT)]      # 27
    wtp = [wtp_ref[k] for k in range(T * 3 * 3)]             # 72

    # ---- graph conv: g[n,c,t,w] = sum_v x[n,c,t,v] * aeff[v,t,w] ------------
    # unrolled over the reduced index v: broadcast-multiply-accumulate only.
    g = _tree_sum([x[:, :, :, v:v + 1] * aeff[v:v + 1] for v in range(V)])  # (N,C,T,V)

    # ---- tcn prefix: BatchNorm2d (folded) + PReLU, per channel --------------
    zrow_t = jnp.zeros((N, 1, V), f32)
    hpad = []                                        # per-channel (N, T+2, V), in registers
    for c in range(C_OUT):
        hc = s1_ref[c] * g[:, c, :, :] + b1_ref[c]
        hc = jnp.where(hc >= 0, hc, alpha1 * hc)
        hpad.append(jnp.concatenate([zrow_t, hc, zrow_t], axis=1))

    # ---- temporal (KT,1) conv + BatchNorm2d + identity residual + PReLU -----
    # TODO(synk): nn.Dropout(p=0) is the identity and is omitted.
    ys = []                                          # per-channel (N, T, V)
    for o in range(C_OUT):
        taps = [wt[o * (C_OUT * KT) + i * KT + kt] * hpad[i][:, kt:kt + T, :]
                for i in range(C_OUT) for kt in range(KT)]
        y = s2_ref[o] * (_tree_sum(taps) + bt_ref[o]) + b2_ref[o]
        y = y + x[:, o, :, :]                        # residual (C_in == C_out, stride 1)
        y = jnp.where(y >= 0, y, alpha2 * y)
        ys.append(y)

    # ---- head: Conv2d(T->1, 3x3, pad 1) + PReLU + Conv1d(15->1, 1) ----------
    # torch .view(N,T,C,V) reinterpretation resolved as index bookkeeping:
    # head plane t', spatial row c'  ->  ys[g//T][:, g%T, :]  with g = t'*C + c'.
    zlane = jnp.zeros((N, 1, 1), f32)
    row_acc = [[] for _ in range(C_OUT)]             # contributions per output row
    for ci in range(T):                              # head in-channel  (= t')
        for rr in range(C_OUT):                      # input spatial row (= c')
            gidx = ci * C_OUT + rr
            row = ys[gidx // T][:, gidx % T:gidx % T + 1, :]          # (N, 1, V)
            rowp = jnp.concatenate([zlane, row, zlane], axis=2)       # (N, 1, V+2)
            win = [rowp[:, :, kw:kw + V] for kw in range(3)]
            for cp in range(max(0, rr - 1), min(C_OUT, rr + 2)):      # output rows fed
                kh = rr - cp + 1
                row_acc[cp].append(_tree_sum(
                    [wtp[ci * 9 + kh * 3 + kw] * win[kw] for kw in range(3)]))

    # PReLU then the 15->1 Conv1d (weighted sum of the row-major flattened plane).
    wout = wout_ref[...]                             # (C_OUT, V)
    acc = None
    for cp in range(C_OUT):
        z = _tree_sum(row_acc[cp]) + btp_ref[0]
        z = jnp.where(z >= 0, z, alpha3 * z)
        term = wout[cp:cp + 1, :] * z                # (1,V) * (N,1,V) -> (N,1,V)
        acc = term if acc is None else acc + term
    out_ref[...] = jnp.sum(acc, axis=2, keepdims=True) + bout_ref[0]   # (N, 1, 1)


def forward(v, a, a2, p):
    vmem = pl.BlockSpec(memory_space=pltpu.MemorySpace.VMEM)
    smem = pl.BlockSpec(memory_space=pltpu.MemorySpace.SMEM)
    # layout plumbing only: put the reduced node index of A/A2 on the leading axis
    a_t = jnp.transpose(a, (1, 0, 2))
    a2_t = jnp.transpose(a2, (1, 0, 2))
    out = pl.pallas_call(
        _fused_kernel,
        in_specs=[vmem, vmem, vmem,                  # x, A^T, A2^T
                  smem, smem, smem,                  # s1, b1, alpha1
                  smem, smem, smem, smem, smem,      # wt, bt, s2, b2, alpha2
                  smem, smem, smem,                  # wtp, btp, alpha3
                  vmem, smem],                       # wout2d, bout
        out_specs=vmem,
        out_shape=jax.ShapeDtypeStruct((N, PRED, 1), jnp.float32),
    )(v, a_t, a2_t,
      p["s1"], p["b1"], p["alpha1"],
      p["wt"], p["bt"], p["s2"], p["b2"], p["alpha2"],
      p["wtp"], p["btp"], p["alpha3"], p["wout2d"], p["bout"])
    return out, a


# ---------------- parameter init (deterministic, synthetic) ----------------
def init_params(key):
    ks = jax.random.split(key, 14)
    eps = 1e-5

    def bn(kg, kb, km, kv, c):
        # BatchNorm2d in inference mode, folded to y = scale*x + shift
        gamma = 1.0 + 0.1 * jax.random.normal(kg, (c,), jnp.float32)
        beta = 0.1 * jax.random.normal(kb, (c,), jnp.float32)
        mean = 0.1 * jax.random.normal(km, (c,), jnp.float32)
        var = 1.0 + 0.1 * jnp.abs(jax.random.normal(kv, (c,), jnp.float32))
        scale = gamma / jnp.sqrt(var + eps)
        shift = beta - mean * scale
        return scale, shift

    s1, b1 = bn(ks[0], ks[1], ks[2], ks[3], C_OUT)    # tcn BatchNorm2d #1
    s2, b2 = bn(ks[4], ks[5], ks[6], ks[7], C_OUT)    # tcn BatchNorm2d #2

    wt = 0.2 * jax.random.normal(ks[8], (C_OUT, C_OUT, KT), jnp.float32)  # Conv2d (3,1)
    bt = 0.1 * jax.random.normal(ks[9], (C_OUT,), jnp.float32)
    wtp = 0.2 * jax.random.normal(ks[10], (T, 3, 3), jnp.float32)         # Conv2d(T->1, 3x3)
    btp = 0.1 * jax.random.normal(ks[11], (1,), jnp.float32)
    wout = 0.2 * jax.random.normal(ks[12], (C_OUT * V,), jnp.float32)     # Conv1d(15->1,1)
    bout = 0.1 * jax.random.normal(ks[13], (1,), jnp.float32)

    return {
        "s1": s1, "b1": b1, "alpha1": jnp.array([0.25], jnp.float32),  # PReLU in tcn
        "wt": wt.reshape(-1), "bt": bt,
        "s2": s2, "b2": b2, "alpha2": jnp.array([0.2], jnp.float32),   # st_gcn.prelu
        "wtp": wtp.reshape(-1), "btp": btp,
        "alpha3": jnp.array([0.3], jnp.float32),                       # prelus[0]
        "wout2d": wout.reshape(C_OUT, V), "wout": wout, "bout": bout,
    }


# ---------------- pure-JAX reference for validation ----------------
def reference(v, a, a2, p):
    aeff = 0.4 * a + 0.6 * a2
    g = jnp.einsum("nctv,tvw->nctw", v, aeff)
    h = p["s1"].reshape(1, -1, 1, 1) * g + p["b1"].reshape(1, -1, 1, 1)
    h = jnp.where(h >= 0, h, p["alpha1"][0] * h)
    hp = jnp.pad(h, ((0, 0), (0, 0), (1, 1), (0, 0)))
    wt = p["wt"].reshape(C_OUT, C_OUT, KT)
    y = jnp.stack(
        [sum(wt[o, i, kt] * hp[:, i, kt:kt + T, :]
             for i in range(C_OUT) for kt in range(KT)) + p["bt"][o]
         for o in range(C_OUT)], axis=1)
    y = p["s2"].reshape(1, -1, 1, 1) * y + p["b2"].reshape(1, -1, 1, 1)
    y = y + v
    y = jnp.where(y >= 0, y, p["alpha2"][0] * y)
    vr = y.reshape(N, T, C_OUT, V)
    vp = jnp.pad(vr, ((0, 0), (0, 0), (1, 1), (1, 1)))
    wtp = p["wtp"].reshape(T, 3, 3)
    z = sum(wtp[ci, kh, kw] * vp[:, ci, kh:kh + C_OUT, kw:kw + V]
            for ci in range(T) for kh in range(3) for kw in range(3)) + p["btp"][0]
    z = jnp.where(z >= 0, z, p["alpha3"][0] * z)
    flat = z.reshape(N, C_OUT * V)
    out = flat @ p["wout"] + p["bout"][0]
    return out.reshape(N, PRED, 1), a


if __name__ == "__main__":
    key = jax.random.PRNGKey(0)
    k1, k2, k3, kp = jax.random.split(key, 4)
    v = jax.random.normal(k1, (N, C_IN, T, V), jnp.float32)
    a = jax.random.normal(k2, (T, V, V), jnp.float32)
    a2 = jax.random.normal(k3, (T, V, V), jnp.float32)
    p = init_params(kp)

    out, a_ret = forward(v, a, a2, p)
    out = jax.block_until_ready(out)
    assert out.shape == (N, PRED, 1)

    ref, _ = reference(v, a, a2, p)
    if not jnp.allclose(out, ref, atol=1e-4, rtol=1e-4):
        raise AssertionError(f"Pallas/reference mismatch:\n{out}\nvs\n{ref}")

    print("KERNEL_OK")
</pallas_src>

<mosaic_0001>
module attributes {stable_mosaic.version = 11 : i64} {
  func.func @_fused_kernel(%arg0: memref<2x3x8x5xf32, #tpu.memory_space<vmem>>, %arg1: memref<5x8x5xf32, #tpu.memory_space<vmem>>, %arg2: memref<5x8x5xf32, #tpu.memory_space<vmem>>, %arg3: memref<3xf32, #tpu.memory_space<smem>>, %arg4: memref<3xf32, #tpu.memory_space<smem>>, %arg5: memref<1xf32, #tpu.memory_space<smem>>, %arg6: memref<27xf32, #tpu.memory_space<smem>>, %arg7: memref<3xf32, #tpu.memory_space<smem>>, %arg8: memref<3xf32, #tpu.memory_space<smem>>, %arg9: memref<3xf32, #tpu.memory_space<smem>>, %arg10: memref<1xf32, #tpu.memory_space<smem>>, %arg11: memref<72xf32, #tpu.memory_space<smem>>, %arg12: memref<1xf32, #tpu.memory_space<smem>>, %arg13: memref<1xf32, #tpu.memory_space<smem>>, %arg14: memref<3x5xf32, #tpu.memory_space<vmem>>, %arg15: memref<1xf32, #tpu.memory_space<smem>>, %arg16: memref<2x1x1xf32, #tpu.memory_space<vmem>>) attributes {dimension_semantics = [], scalar_prefetch = 0 : i64, scratch_operands = 0 : i64, tpu.core_type = #tpu.core_type<tc>} {
    %c0 = arith.constant 0 : index
    %c0_0 = arith.constant 0 : index
    %c0_1 = arith.constant 0 : index
    %c0_2 = arith.constant 0 : index
    %0 = vector.load %arg0[%c0, %c0_0, %c0_1, %c0_2] : memref<2x3x8x5xf32, #tpu.memory_space<vmem>>, vector<2x3x8x5xf32>
    %c0_3 = arith.constant 0 : index
    %c0_4 = arith.constant 0 : index
    %c0_5 = arith.constant 0 : index
    %1 = vector.load %arg1[%c0_3, %c0_4, %c0_5] : memref<5x8x5xf32, #tpu.memory_space<vmem>>, vector<5x8x5xf32>
    %cst = arith.constant 4.000000e-01 : f32
    %2 = vector.broadcast %cst : f32 to vector<5x8x5xf32>
    %3 = arith.mulf %2, %1 : vector<5x8x5xf32>
    %c0_6 = arith.constant 0 : index
    %c0_7 = arith.constant 0 : index
    %c0_8 = arith.constant 0 : index
    %4 = vector.load %arg2[%c0_6, %c0_7, %c0_8] : memref<5x8x5xf32, #tpu.memory_space<vmem>>, vector<5x8x5xf32>
    %cst_9 = arith.constant 6.000000e-01 : f32
    %5 = vector.broadcast %cst_9 : f32 to vector<5x8x5xf32>
    %6 = arith.mulf %5, %4 : vector<5x8x5xf32>
    %7 = arith.addf %3, %6 : vector<5x8x5xf32>
    %c0_10 = arith.constant 0 : index
    %8 = memref.load %arg5[%c0_10] : memref<1xf32, #tpu.memory_space<smem>>
    %c0_11 = arith.constant 0 : index
    %9 = memref.load %arg10[%c0_11] : memref<1xf32, #tpu.memory_space<smem>>
    %c0_12 = arith.constant 0 : index
    %10 = memref.load %arg13[%c0_12] : memref<1xf32, #tpu.memory_space<smem>>
    %c0_13 = arith.constant 0 : index
    %11 = memref.load %arg6[%c0_13] : memref<27xf32, #tpu.memory_space<smem>>
    %c1 = arith.constant 1 : index
    %12 = memref.load %arg6[%c1] : memref<27xf32, #tpu.memory_space<smem>>
    %c2 = arith.constant 2 : index
    %13 = memref.load %arg6[%c2] : memref<27xf32, #tpu.memory_space<smem>>
    %c3 = arith.constant 3 : index
    %14 = memref.load %arg6[%c3] : memref<27xf32, #tpu.memory_space<smem>>
    %c4 = arith.constant 4 : index
    %15 = memref.load %arg6[%c4] : memref<27xf32, #tpu.memory_space<smem>>
    %c5 = arith.constant 5 : index
    %16 = memref.load %arg6[%c5] : memref<27xf32, #tpu.memory_space<smem>>
    %c6 = arith.constant 6 : index
    %17 = memref.load %arg6[%c6] : memref<27xf32, #tpu.memory_space<smem>>
    %c7 = arith.constant 7 : index
    %18 = memref.load %arg6[%c7] : memref<27xf32, #tpu.memory_space<smem>>
    %c8 = arith.constant 8 : index
    %19 = memref.load %arg6[%c8] : memref<27xf32, #tpu.memory_space<smem>>
    %c9 = arith.constant 9 : index
    %20 = memref.load %arg6[%c9] : memref<27xf32, #tpu.memory_space<smem>>
    %c10 = arith.constant 10 : index
    %21 = memref.load %arg6[%c10] : memref<27xf32, #tpu.memory_space<smem>>
    %c11 = arith.constant 11 : index
    %22 = memref.load %arg6[%c11] : memref<27xf32, #tpu.memory_space<smem>>
    %c12 = arith.constant 12 : index
    %23 = memref.load %arg6[%c12] : memref<27xf32, #tpu.memory_space<smem>>
    %c13 = arith.constant 13 : index
    %24 = memref.load %arg6[%c13] : memref<27xf32, #tpu.memory_space<smem>>
    %c14 = arith.constant 14 : index
    %25 = memref.load %arg6[%c14] : memref<27xf32, #tpu.memory_space<smem>>
    %c15 = arith.constant 15 : index
    %26 = memref.load %arg6[%c15] : memref<27xf32, #tpu.memory_space<smem>>
    %c16 = arith.constant 16 : index
    %27 = memref.load %arg6[%c16] : memref<27xf32, #tpu.memory_space<smem>>
    %c17 = arith.constant 17 : index
    %28 = memref.load %arg6[%c17] : memref<27xf32, #tpu.memory_space<smem>>
    %c18 = arith.constant 18 : index
    %29 = memref.load %arg6[%c18] : memref<27xf32, #tpu.memory_space<smem>>
    %c19 = arith.constant 19 : index
    %30 = memref.load %arg6[%c19] : memref<27xf32, #tpu.memory_space<smem>>
    %c20 = arith.constant 20 : index
    %31 = memref.load %arg6[%c20] : memref<27xf32, #tpu.memory_space<smem>>
    %c21 = arith.constant 21 : index
    %32 = memref.load %arg6[%c21] : memref<27xf32, #tpu.memory_space<smem>>
    %c22 = arith.constant 22 : index
    %33 = memref.load %arg6[%c22] : memref<27xf32, #tpu.memory_space<smem>>
    %c23 = arith.constant 23 : index
    %34 = memref.load %arg6[%c23] : memref<27xf32, #tpu.memory_space<smem>>
    %c24 = arith.constant 24 : index
    %35 = memref.load %arg6[%c24] : memref<27xf32, #tpu.memory_space<smem>>
    %c25 = arith.constant 25 : index
    %36 = memref.load %arg6[%c25] : memref<27xf32, #tpu.memory_space<smem>>
    %c26 = arith.constant 26 : index
    %37 = memref.load %arg6[%c26] : memref<27xf32, #tpu.memory_space<smem>>
    %c0_14 = arith.constant 0 : index
    %38 = memref.load %arg11[%c0_14] : memref<72xf32, #tpu.memory_space<smem>>
    %c1_15 = arith.constant 1 : index
    %39 = memref.load %arg11[%c1_15] : memref<72xf32, #tpu.memory_space<smem>>
    %c2_16 = arith.constant 2 : index
    %40 = memref.load %arg11[%c2_16] : memref<72xf32, #tpu.memory_space<smem>>
    %c3_17 = arith.constant 3 : index
    %41 = memref.load %arg11[%c3_17] : memref<72xf32, #tpu.memory_space<smem>>
    %c4_18 = arith.constant 4 : index
    %42 = memref.load %arg11[%c4_18] : memref<72xf32, #tpu.memory_space<smem>>
    %c5_19 = arith.constant 5 : index
    %43 = memref.load %arg11[%c5_19] : memref<72xf32, #tpu.memory_space<smem>>
    %c6_20 = arith.constant 6 : index
    %44 = memref.load %arg11[%c6_20] : memref<72xf32, #tpu.memory_space<smem>>
    %c7_21 = arith.constant 7 : index
    %45 = memref.load %arg11[%c7_21] : memref<72xf32, #tpu.memory_space<smem>>
    %c8_22 = arith.constant 8 : index
    %46 = memref.load %arg11[%c8_22] : memref<72xf32, #tpu.memory_space<smem>>
    %c9_23 = arith.constant 9 : index
    %47 = memref.load %arg11[%c9_23] : memref<72xf32, #tpu.memory_space<smem>>
    %c10_24 = arith.constant 10 : index
    %48 = memref.load %arg11[%c10_24] : memref<72xf32, #tpu.memory_space<smem>>
    %c11_25 = arith.constant 11 : index
    %49 = memref.load %arg11[%c11_25] : memref<72xf32, #tpu.memory_space<smem>>
    %c12_26 = arith.constant 12 : index
    %50 = memref.load %arg11[%c12_26] : memref<72xf32, #tpu.memory_space<smem>>
    %c13_27 = arith.constant 13 : index
    %51 = memref.load %arg11[%c13_27] : memref<72xf32, #tpu.memory_space<smem>>
    %c14_28 = arith.constant 14 : index
    %52 = memref.load %arg11[%c14_28] : memref<72xf32, #tpu.memory_space<smem>>
    %c15_29 = arith.constant 15 : index
    %53 = memref.load %arg11[%c15_29] : memref<72xf32, #tpu.memory_space<smem>>
    %c16_30 = arith.constant 16 : index
    %54 = memref.load %arg11[%c16_30] : memref<72xf32, #tpu.memory_space<smem>>
    %c17_31 = arith.constant 17 : index
    %55 = memref.load %arg11[%c17_31] : memref<72xf32, #tpu.memory_space<smem>>
    %c18_32 = arith.constant 18 : index
    %56 = memref.load %arg11[%c18_32] : memref<72xf32, #tpu.memory_space<smem>>
    %c19_33 = arith.constant 19 : index
    %57 = memref.load %arg11[%c19_33] : memref<72xf32, #tpu.memory_space<smem>>
    %c20_34 = arith.constant 20 : index
    %58 = memref.load %arg11[%c20_34] : memref<72xf32, #tpu.memory_space<smem>>
    %c21_35 = arith.constant 21 : index
    %59 = memref.load %arg11[%c21_35] : memref<72xf32, #tpu.memory_space<smem>>
    %c22_36 = arith.constant 22 : index
    %60 = memref.load %arg11[%c22_36] : memref<72xf32, #tpu.memory_space<smem>>
    %c23_37 = arith.constant 23 : index
    %61 = memref.load %arg11[%c23_37] : memref<72xf32, #tpu.memory_space<smem>>
    %c24_38 = arith.constant 24 : index
    %62 = memref.load %arg11[%c24_38] : memref<72xf32, #tpu.memory_space<smem>>
    %c25_39 = arith.constant 25 : index
    %63 = memref.load %arg11[%c25_39] : memref<72xf32, #tpu.memory_space<smem>>
    %c26_40 = arith.constant 26 : index
    %64 = memref.load %arg11[%c26_40] : memref<72xf32, #tpu.memory_space<smem>>
    %c27 = arith.constant 27 : index
    %65 = memref.load %arg11[%c27] : memref<72xf32, #tpu.memory_space<smem>>
    %c28 = arith.constant 28 : index
    %66 = memref.load %arg11[%c28] : memref<72xf32, #tpu.memory_space<smem>>
    %c29 = arith.constant 29 : index
    %67 = memref.load %arg11[%c29] : memref<72xf32, #tpu.memory_space<smem>>
    %c30 = arith.constant 30 : index
    %68 = memref.load %arg11[%c30] : memref<72xf32, #tpu.memory_space<smem>>
    %c31 = arith.constant 31 : index
    %69 = memref.load %arg11[%c31] : memref<72xf32, #tpu.memory_space<smem>>
    %c32 = arith.constant 32 : index
    %70 = memref.load %arg11[%c32] : memref<72xf32, #tpu.memory_space<smem>>
    %c33 = arith.constant 33 : index
    %71 = memref.load %arg11[%c33] : memref<72xf32, #tpu.memory_space<smem>>
    %c34 = arith.constant 34 : index
    %72 = memref.load %arg11[%c34] : memref<72xf32, #tpu.memory_space<smem>>
    %c35 = arith.constant 35 : index
    %73 = memref.load %arg11[%c35] : memref<72xf32, #tpu.memory_space<smem>>
    %c36 = arith.constant 36 : index
    %74 = memref.load %arg11[%c36] : memref<72xf32, #tpu.memory_space<smem>>
    %c37 = arith.constant 37 : index
    %75 = memref.load %arg11[%c37] : memref<72xf32, #tpu.memory_space<smem>>
    %c38 = arith.constant 38 : index
    %76 = memref.load %arg11[%c38] : memref<72xf32, #tpu.memory_space<smem>>
    %c39 = arith.constant 39 : index
    %77 = memref.load %arg11[%c39] : memref<72xf32, #tpu.memory_space<smem>>
    %c40 = arith.constant 40 : index
    %78 = memref.load %arg11[%c40] : memref<72xf32, #tpu.memory_space<smem>>
    %c41 = arith.constant 41 : index
    %79 = memref.load %arg11[%c41] : memref<72xf32, #tpu.memory_space<smem>>
    %c42 = arith.constant 42 : index
    %80 = memref.load %arg11[%c42] : memref<72xf32, #tpu.memory_space<smem>>
    %c43 = arith.constant 43 : index
    %81 = memref.load %arg11[%c43] : memref<72xf32, #tpu.memory_space<smem>>
    %c44 = arith.constant 44 : index
    %82 = memref.load %arg11[%c44] : memref<72xf32, #tpu.memory_space<smem>>
    %c45 = arith.constant 45 : index
    %83 = memref.load %arg11[%c45] : memref<72xf32, #tpu.memory_space<smem>>
    %c46 = arith.constant 46 : index
    %84 = memref.load %arg11[%c46] : memref<72xf32, #tpu.memory_space<smem>>
    %c47 = arith.constant 47 : index
    %85 = memref.load %arg11[%c47] : memref<72xf32, #tpu.memory_space<smem>>
    %c48 = arith.constant 48 : index
    %86 = memref.load %arg11[%c48] : memref<72xf32, #tpu.memory_space<smem>>
    %c49 = arith.constant 49 : index
    %87 = memref.load %arg11[%c49] : memref<72xf32, #tpu.memory_space<smem>>
    %c50 = arith.constant 50 : index
    %88 = memref.load %arg11[%c50] : memref<72xf32, #tpu.memory_space<smem>>
    %c51 = arith.constant 51 : index
    %89 = memref.load %arg11[%c51] : memref<72xf32, #tpu.memory_space<smem>>
    %c52 = arith.constant 52 : index
    %90 = memref.load %arg11[%c52] : memref<72xf32, #tpu.memory_space<smem>>
    %c53 = arith.constant 53 : index
    %91 = memref.load %arg11[%c53] : memref<72xf32, #tpu.memory_space<smem>>
    %c54 = arith.constant 54 : index
    %92 = memref.load %arg11[%c54] : memref<72xf32, #tpu.memory_space<smem>>
    %c55 = arith.constant 55 : index
    %93 = memref.load %arg11[%c55] : memref<72xf32, #tpu.memory_space<smem>>
    %c56 = arith.constant 56 : index
    %94 = memref.load %arg11[%c56] : memref<72xf32, #tpu.memory_space<smem>>
    %c57 = arith.constant 57 : index
    %95 = memref.load %arg11[%c57] : memref<72xf32, #tpu.memory_space<smem>>
    %c58 = arith.constant 58 : index
    %96 = memref.load %arg11[%c58] : memref<72xf32, #tpu.memory_space<smem>>
    %c59 = arith.constant 59 : index
    %97 = memref.load %arg11[%c59] : memref<72xf32, #tpu.memory_space<smem>>
    %c60 = arith.constant 60 : index
    %98 = memref.load %arg11[%c60] : memref<72xf32, #tpu.memory_space<smem>>
    %c61 = arith.constant 61 : index
    %99 = memref.load %arg11[%c61] : memref<72xf32, #tpu.memory_space<smem>>
    %c62 = arith.constant 62 : index
    %100 = memref.load %arg11[%c62] : memref<72xf32, #tpu.memory_space<smem>>
    %c63 = arith.constant 63 : index
    %101 = memref.load %arg11[%c63] : memref<72xf32, #tpu.memory_space<smem>>
    %c64 = arith.constant 64 : index
    %102 = memref.load %arg11[%c64] : memref<72xf32, #tpu.memory_space<smem>>
    %c65 = arith.constant 65 : index
    %103 = memref.load %arg11[%c65] : memref<72xf32, #tpu.memory_space<smem>>
    %c66 = arith.constant 66 : index
    %104 = memref.load %arg11[%c66] : memref<72xf32, #tpu.memory_space<smem>>
    %c67 = arith.constant 67 : index
    %105 = memref.load %arg11[%c67] : memref<72xf32, #tpu.memory_space<smem>>
    %c68 = arith.constant 68 : index
    %106 = memref.load %arg11[%c68] : memref<72xf32, #tpu.memory_space<smem>>
    %c69 = arith.constant 69 : index
    %107 = memref.load %arg11[%c69] : memref<72xf32, #tpu.memory_space<smem>>
    %c70 = arith.constant 70 : index
    %108 = memref.load %arg11[%c70] : memref<72xf32, #tpu.memory_space<smem>>
    %c71 = arith.constant 71 : index
    %109 = memref.load %arg11[%c71] : memref<72xf32, #tpu.memory_space<smem>>
    %110 = vector.extract_strided_slice %0 {offsets = [0, 0, 0, 0], sizes = [2, 3, 8, 1], strides = [1, 1, 1, 1]} : vector<2x3x8x5xf32> to vector<2x3x8x1xf32>
    %111 = vector.extract_strided_slice %7 {offsets = [0, 0, 0], sizes = [1, 8, 5], strides = [1, 1, 1]} : vector<5x8x5xf32> to vector<1x8x5xf32>
    %112 = vector.shape_cast %111 : vector<1x8x5xf32> to vector<1x1x8x5xf32>
    %113 = vector.broadcast %110 : vector<2x3x8x1xf32> to vector<2x3x8x5xf32>
    %114 = vector.broadcast %112 : vector<1x1x8x5xf32> to vector<2x3x8x5xf32>
    %115 = arith.mulf %113, %114 : vector<2x3x8x5xf32>
    %116 = vector.extract_strided_slice %0 {offsets = [0, 0, 0, 1], sizes = [2, 3, 8, 1], strides = [1, 1, 1, 1]} : vector<2x3x8x5xf32> to vector<2x3x8x1xf32>
    %117 = vector.extract_strided_slice %7 {offsets = [1, 0, 0], sizes = [1, 8, 5], strides = [1, 1, 1]} : vector<5x8x5xf32> to vector<1x8x5xf32>
    %118 = vector.shape_cast %117 : vector<1x8x5xf32> to vector<1x1x8x5xf32>
    %119 = vector.broadcast %116 : vector<2x3x8x1xf32> to vector<2x3x8x5xf32>
    %120 = vector.broadcast %118 : vector<1x1x8x5xf32> to vector<2x3x8x5xf32>
    %121 = arith.mulf %119, %120 : vector<2x3x8x5xf32>
    %122 = vector.extract_strided_slice %0 {offsets = [0, 0, 0, 2], sizes = [2, 3, 8, 1], strides = [1, 1, 1, 1]} : vector<2x3x8x5xf32> to vector<2x3x8x1xf32>
    %123 = vector.extract_strided_slice %7 {offsets = [2, 0, 0], sizes = [1, 8, 5], strides = [1, 1, 1]} : vector<5x8x5xf32> to vector<1x8x5xf32>
    %124 = vector.shape_cast %123 : vector<1x8x5xf32> to vector<1x1x8x5xf32>
    %125 = vector.broadcast %122 : vector<2x3x8x1xf32> to vector<2x3x8x5xf32>
    %126 = vector.broadcast %124 : vector<1x1x8x5xf32> to vector<2x3x8x5xf32>
    %127 = arith.mulf %125, %126 : vector<2x3x8x5xf32>
    %128 = vector.extract_strided_slice %0 {offsets = [0, 0, 0, 3], sizes = [2, 3, 8, 1], strides = [1, 1, 1, 1]} : vector<2x3x8x5xf32> to vector<2x3x8x1xf32>
    %129 = vector.extract_strided_slice %7 {offsets = [3, 0, 0], sizes = [1, 8, 5], strides = [1, 1, 1]} : vector<5x8x5xf32> to vector<1x8x5xf32>
    %130 = vector.shape_cast %129 : vector<1x8x5xf32> to vector<1x1x8x5xf32>
    %131 = vector.broadcast %128 : vector<2x3x8x1xf32> to vector<2x3x8x5xf32>
    %132 = vector.broadcast %130 : vector<1x1x8x5xf32> to vector<2x3x8x5xf32>
    %133 = arith.mulf %131, %132 : vector<2x3x8x5xf32>
    %134 = vector.extract_strided_slice %0 {offsets = [0, 0, 0, 4], sizes = [2, 3, 8, 1], strides = [1, 1, 1, 1]} : vector<2x3x8x5xf32> to vector<2x3x8x1xf32>
    %135 = vector.extract_strided_slice %7 {offsets = [4, 0, 0], sizes = [1, 8, 5], strides = [1, 1, 1]} : vector<5x8x5xf32> to vector<1x8x5xf32>
    %136 = vector.shape_cast %135 : vector<1x8x5xf32> to vector<1x1x8x5xf32>
    %137 = vector.broadcast %134 : vector<2x3x8x1xf32> to vector<2x3x8x5xf32>
    %138 = vector.broadcast %136 : vector<1x1x8x5xf32> to vector<2x3x8x5xf32>
    %139 = arith.mulf %137, %138 : vector<2x3x8x5xf32>
    %140 = arith.addf %115, %121 : vector<2x3x8x5xf32>
    %141 = arith.addf %127, %133 : vector<2x3x8x5xf32>
    %142 = arith.addf %140, %141 : vector<2x3x8x5xf32>
    %143 = arith.addf %142, %139 : vector<2x3x8x5xf32>
    %cst_41 = arith.constant 0.000000e+00 : f32
    %144 = vector.broadcast %cst_41 : f32 to vector<2x1x5xf32>
    %c0_42 = arith.constant 0 : index
    %145 = memref.load %arg3[%c0_42] : memref<3xf32, #tpu.memory_space<smem>>
    %146 = vector.extract_strided_slice %143 {offsets = [0, 0, 0, 0], sizes = [2, 1, 8, 5], strides = [1, 1, 1, 1]} : vector<2x3x8x5xf32> to vector<2x1x8x5xf32>
    %147 = vector.shape_cast %146 : vector<2x1x8x5xf32> to vector<2x8x5xf32>
    %148 = vector.broadcast %145 : f32 to vector<2x8x5xf32>
    %149 = arith.mulf %148, %147 : vector<2x8x5xf32>
    %c0_43 = arith.constant 0 : index
    %150 = memref.load %arg4[%c0_43] : memref<3xf32, #tpu.memory_space<smem>>
    %151 = vector.broadcast %150 : f32 to vector<2x8x5xf32>
    %152 = arith.addf %149, %151 : vector<2x8x5xf32>
    %cst_44 = arith.constant 0.000000e+00 : f32
    %153 = vector.broadcast %cst_44 : f32 to vector<2x8x5xf32>
    %154 = arith.cmpf oge, %152, %153 : vector<2x8x5xf32>
    %155 = vector.broadcast %8 : f32 to vector<2x8x5xf32>
    %156 = arith.mulf %155, %152 : vector<2x8x5xf32>
    %157 = arith.select %154, %152, %156 : vector<2x8x5xi1>, vector<2x8x5xf32>
    %158 = tpu.concatenate %144, %157, %144 in 1 : vector<2x1x5xf32>, vector<2x8x5xf32>, vector<2x1x5xf32> -> vector<2x10x5xf32>
    %c1_45 = arith.constant 1 : index
    %159 = memref.load %arg3[%c1_45] : memref<3xf32, #tpu.memory_space<smem>>
    %160 = vector.extract_strided_slice %143 {offsets = [0, 1, 0, 0], sizes = [2, 1, 8, 5], strides = [1, 1, 1, 1]} : vector<2x3x8x5xf32> to vector<2x1x8x5xf32>
    %161 = vector.shape_cast %160 : vector<2x1x8x5xf32> to vector<2x8x5xf32>
    %162 = vector.broadcast %159 : f32 to vector<2x8x5xf32>
    %163 = arith.mulf %162, %161 : vector<2x8x5xf32>
    %c1_46 = arith.constant 1 : index
    %164 = memref.load %arg4[%c1_46] : memref<3xf32, #tpu.memory_space<smem>>
    %165 = vector.broadcast %164 : f32 to vector<2x8x5xf32>
    %166 = arith.addf %163, %165 : vector<2x8x5xf32>
    %cst_47 = arith.constant 0.000000e+00 : f32
    %167 = vector.broadcast %cst_47 : f32 to vector<2x8x5xf32>
    %168 = arith.cmpf oge, %166, %167 : vector<2x8x5xf32>
    %169 = vector.broadcast %8 : f32 to vector<2x8x5xf32>
    %170 = arith.mulf %169, %166 : vector<2x8x5xf32>
    %171 = arith.select %168, %166, %170 : vector<2x8x5xi1>, vector<2x8x5xf32>
    %172 = tpu.concatenate %144, %171, %144 in 1 : vector<2x1x5xf32>, vector<2x8x5xf32>, vector<2x1x5xf32> -> vector<2x10x5xf32>
    %c2_48 = arith.constant 2 : index
    %173 = memref.load %arg3[%c2_48] : memref<3xf32, #tpu.memory_space<smem>>
    %174 = vector.extract_strided_slice %143 {offsets = [0, 2, 0, 0], sizes = [2, 1, 8, 5], strides = [1, 1, 1, 1]} : vector<2x3x8x5xf32> to vector<2x1x8x5xf32>
    %175 = vector.shape_cast %174 : vector<2x1x8x5xf32> to vector<2x8x5xf32>
    %176 = vector.broadcast %173 : f32 to vector<2x8x5xf32>
    %177 = arith.mulf %176, %175 : vector<2x8x5xf32>
    %c2_49 = arith.constant 2 : index
    %178 = memref.load %arg4[%c2_49] : memref<3xf32, #tpu.memory_space<smem>>
    %179 = vector.broadcast %178 : f32 to vector<2x8x5xf32>
    %180 = arith.addf %177, %179 : vector<2x8x5xf32>
    %cst_50 = arith.constant 0.000000e+00 : f32
    %181 = vector.broadcast %cst_50 : f32 to vector<2x8x5xf32>
    %182 = arith.cmpf oge, %180, %181 : vector<2x8x5xf32>
    %183 = vector.broadcast %8 : f32 to vector<2x8x5xf32>
    %184 = arith.mulf %183, %180 : vector<2x8x5xf32>
    %185 = arith.select %182, %180, %184 : vector<2x8x5xi1>, vector<2x8x5xf32>
    %186 = tpu.concatenate %144, %185, %144 in 1 : vector<2x1x5xf32>, vector<2x8x5xf32>, vector<2x1x5xf32> -> vector<2x10x5xf32>
    %187 = vector.extract_strided_slice %158 {offsets = [0, 0, 0], sizes = [2, 8, 5], strides = [1, 1, 1]} : vector<2x10x5xf32> to vector<2x8x5xf32>
    %188 = vector.broadcast %11 : f32 to vector<2x8x5xf32>
    %189 = arith.mulf %188, %187 : vector<2x8x5xf32>
    %190 = vector.extract_strided_slice %158 {offsets = [0, 1, 0], sizes = [2, 8, 5], strides = [1, 1, 1]} : vector<2x10x5xf32> to vector<2x8x5xf32>
    %191 = vector.broadcast %12 : f32 to vector<2x8x5xf32>
    %192 = arith.mulf %191, %190 : vector<2x8x5xf32>
    %193 = vector.extract_strided_slice %158 {offsets = [0, 2, 0], sizes = [2, 8, 5], strides = [1, 1, 1]} : vector<2x10x5xf32> to vector<2x8x5xf32>
    %194 = vector.broadcast %13 : f32 to vector<2x8x5xf32>
    %195 = arith.mulf %194, %193 : vector<2x8x5xf32>
    %196 = vector.extract_strided_slice %172 {offsets = [0, 0, 0], sizes = [2, 8, 5], strides = [1, 1, 1]} : vector<2x10x5xf32> to vector<2x8x5xf32>
    %197 = vector.broadcast %14 : f32 to vector<2x8x5xf32>
    %198 = arith.mulf %197, %196 : vector<2x8x5xf32>
    %199 = vector.extract_strided_slice %172 {offsets = [0, 1, 0], sizes = [2, 8, 5], strides = [1, 1, 1]} : vector<2x10x5xf32> to vector<2x8x5xf32>
    %200 = vector.broadcast %15 : f32 to vector<2x8x5xf32>
    %201 = arith.mulf %200, %199 : vector<2x8x5xf32>
    %202 = vector.extract_strided_slice %172 {offsets = [0, 2, 0], sizes = [2, 8, 5], strides = [1, 1, 1]} : vector<2x10x5xf32> to vector<2x8x5xf32>
    %203 = vector.broadcast %16 : f32 to vector<2x8x5xf32>
    %204 = arith.mulf %203, %202 : vector<2x8x5xf32>
    %205 = vector.extract_strided_slice %186 {offsets = [0, 0, 0], sizes = [2, 8, 5], strides = [1, 1, 1]} : vector<2x10x5xf32> to vector<2x8x5xf32>
    %206 = vector.broadcast %17 : f32 to vector<2x8x5xf32>
    %207 = arith.mulf %206, %205 : vector<2x8x5xf32>
    %208 = vector.extract_strided_slice %186 {offsets = [0, 1, 0], sizes = [2, 8, 5], strides = [1, 1, 1]} : vector<2x10x5xf32> to vector<2x8x5xf32>
    %209 = vector.broadcast %18 : f32 to vector<2x8x5xf32>
    %210 = arith.mulf %209, %208 : vector<2x8x5xf32>
    %211 = vector.extract_strided_slice %186 {offsets = [0, 2, 0], sizes = [2, 8, 5], strides = [1, 1, 1]} : vector<2x10x5xf32> to vector<2x8x5xf32>
    %212 = vector.broadcast %19 : f32 to vector<2x8x5xf32>
    %213 = arith.mulf %212, %211 : vector<2x8x5xf32>
    %c0_51 = arith.constant 0 : index
    %214 = memref.load %arg8[%c0_51] : memref<3xf32, #tpu.memory_space<smem>>
    %215 = arith.addf %189, %192 : vector<2x8x5xf32>
    %216 = arith.addf %195, %198 : vector<2x8x5xf32>
    %217 = arith.addf %201, %204 : vector<2x8x5xf32>
    %218 = arith.addf %207, %210 : vector<2x8x5xf32>
    %219 = arith.addf %215, %216 : vector<2x8x5xf32>
    %220 = arith.addf %217, %218 : vector<2x8x5xf32>
    %221 = arith.addf %219, %220 : vector<2x8x5xf32>
    %222 = arith.addf %221, %213 : vector<2x8x5xf32>
    %c0_52 = arith.constant 0 : index
    %223 = memref.load %arg7[%c0_52] : memref<3xf32, #tpu.memory_space<smem>>
    %224 = vector.broadcast %223 : f32 to vector<2x8x5xf32>
    %225 = arith.addf %222, %224 : vector<2x8x5xf32>
    %226 = vector.broadcast %214 : f32 to vector<2x8x5xf32>
    %227 = arith.mulf %226, %225 : vector<2x8x5xf32>
    %c0_53 = arith.constant 0 : index
    %228 = memref.load %arg9[%c0_53] : memref<3xf32, #tpu.memory_space<smem>>
    %229 = vector.broadcast %228 : f32 to vector<2x8x5xf32>
    %230 = arith.addf %227, %229 : vector<2x8x5xf32>
    %231 = vector.extract_strided_slice %0 {offsets = [0, 0, 0, 0], sizes = [2, 1, 8, 5], strides = [1, 1, 1, 1]} : vector<2x3x8x5xf32> to vector<2x1x8x5xf32>
    %232 = vector.shape_cast %231 : vector<2x1x8x5xf32> to vector<2x8x5xf32>
    %233 = arith.addf %230, %232 : vector<2x8x5xf32>
    %cst_54 = arith.constant 0.000000e+00 : f32
    %234 = vector.broadcast %cst_54 : f32 to vector<2x8x5xf32>
    %235 = arith.cmpf oge, %233, %234 : vector<2x8x5xf32>
    %236 = vector.broadcast %9 : f32 to vector<2x8x5xf32>
    %237 = arith.mulf %236, %233 : vector<2x8x5xf32>
    %238 = arith.select %235, %233, %237 : vector<2x8x5xi1>, vector<2x8x5xf32>
    %239 = vector.extract_strided_slice %158 {offsets = [0, 0, 0], sizes = [2, 8, 5], strides = [1, 1, 1]} : vector<2x10x5xf32> to vector<2x8x5xf32>
    %240 = vector.broadcast %20 : f32 to vector<2x8x5xf32>
    %241 = arith.mulf %240, %239 : vector<2x8x5xf32>
    %242 = vector.extract_strided_slice %158 {offsets = [0, 1, 0], sizes = [2, 8, 5], strides = [1, 1, 1]} : vector<2x10x5xf32> to vector<2x8x5xf32>
    %243 = vector.broadcast %21 : f32 to vector<2x8x5xf32>
    %244 = arith.mulf %243, %242 : vector<2x8x5xf32>
    %245 = vector.extract_strided_slice %158 {offsets = [0, 2, 0], sizes = [2, 8, 5], strides = [1, 1, 1]} : vector<2x10x5xf32> to vector<2x8x5xf32>
    %246 = vector.broadcast %22 : f32 to vector<2x8x5xf32>
    %247 = arith.mulf %246, %245 : vector<2x8x5xf32>
    %248 = vector.extract_strided_slice %172 {offsets = [0, 0, 0], sizes = [2, 8, 5], strides = [1, 1, 1]} : vector<2x10x5xf32> to vector<2x8x5xf32>
    %249 = vector.broadcast %23 : f32 to vector<2x8x5xf32>
    %250 = arith.mulf %249, %248 : vector<2x8x5xf32>
    %251 = vector.extract_strided_slice %172 {offsets = [0, 1, 0], sizes = [2, 8, 5], strides = [1, 1, 1]} : vector<2x10x5xf32> to vector<2x8x5xf32>
    %252 = vector.broadcast %24 : f32 to vector<2x8x5xf32>
    %253 = arith.mulf %252, %251 : vector<2x8x5xf32>
    %254 = vector.extract_strided_slice %172 {offsets = [0, 2, 0], sizes = [2, 8, 5], strides = [1, 1, 1]} : vector<2x10x5xf32> to vector<2x8x5xf32>
    %255 = vector.broadcast %25 : f32 to vector<2x8x5xf32>
    %256 = arith.mulf %255, %254 : vector<2x8x5xf32>
    %257 = vector.extract_strided_slice %186 {offsets = [0, 0, 0], sizes = [2, 8, 5], strides = [1, 1, 1]} : vector<2x10x5xf32> to vector<2x8x5xf32>
    %258 = vector.broadcast %26 : f32 to vector<2x8x5xf32>
    %259 = arith.mulf %258, %257 : vector<2x8x5xf32>
    %260 = vector.extract_strided_slice %186 {offsets = [0, 1, 0], sizes = [2, 8, 5], strides = [1, 1, 1]} : vector<2x10x5xf32> to vector<2x8x5xf32>
    %261 = vector.broadcast %27 : f32 to vector<2x8x5xf32>
    %262 = arith.mulf %261, %260 : vector<2x8x5xf32>
    %263 = vector.extract_strided_slice %186 {offsets = [0, 2, 0], sizes = [2, 8, 5], strides = [1, 1, 1]} : vector<2x10x5xf32> to vector<2x8x5xf32>
    %264 = vector.broadcast %28 : f32 to vector<2x8x5xf32>
    %265 = arith.mulf %264, %263 : vector<2x8x5xf32>
    %c1_55 = arith.constant 1 : index
    %266 = memref.load %arg8[%c1_55] : memref<3xf32, #tpu.memory_space<smem>>
    %267 = arith.addf %241, %244 : vector<2x8x5xf32>
    %268 = arith.addf %247, %250 : vector<2x8x5xf32>
    %269 = arith.addf %253, %256 : vector<2x8x5xf32>
    %270 = arith.addf %259, %262 : vector<2x8x5xf32>
    %271 = arith.addf %267, %268 : vector<2x8x5xf32>
    %272 = arith.addf %269, %270 : vector<2x8x5xf32>
    %273 = arith.addf %271, %272 : vector<2x8x5xf32>
    %274 = arith.addf %273, %265 : vector<2x8x5xf32>
    %c1_56 = arith.constant 1 : index
    %275 = memref.load %arg7[%c1_56] : memref<3xf32, #tpu.memory_space<smem>>
    %276 = vector.broadcast %275 : f32 to vector<2x8x5xf32>
    %277 = arith.addf %274, %276 : vector<2x8x5xf32>
    %278 = vector.broadcast %266 : f32 to vector<2x8x5xf32>
    %279 = arith.mulf %278, %277 : vector<2x8x5xf32>
    %c1_57 = arith.constant 1 : index
    %280 = memref.load %arg9[%c1_57] : memref<3xf32, #tpu.memory_space<smem>>
    %281 = vector.broadcast %280 : f32 to vector<2x8x5xf32>
    %282 = arith.addf %279, %281 : vector<2x8x5xf32>
    %283 = vector.extract_strided_slice %0 {offsets = [0, 1, 0, 0], sizes = [2, 1, 8, 5], strides = [1, 1, 1, 1]} : vector<2x3x8x5xf32> to vector<2x1x8x5xf32>
    %284 = vector.shape_cast %283 : vector<2x1x8x5xf32> to vector<2x8x5xf32>
    %285 = arith.addf %282, %284 : vector<2x8x5xf32>
    %cst_58 = arith.constant 0.000000e+00 : f32
    %286 = vector.broadcast %cst_58 : f32 to vector<2x8x5xf32>
    %287 = arith.cmpf oge, %285, %286 : vector<2x8x5xf32>
    %288 = vector.broadcast %9 : f32 to vector<2x8x5xf32>
    %289 = arith.mulf %288, %285 : vector<2x8x5xf32>
    %290 = arith.select %287, %285, %289 : vector<2x8x5xi1>, vector<2x8x5xf32>
    %291 = vector.extract_strided_slice %158 {offsets = [0, 0, 0], sizes = [2, 8, 5], strides = [1, 1, 1]} : vector<2x10x5xf32> to vector<2x8x5xf32>
    %292 = vector.broadcast %29 : f32 to vector<2x8x5xf32>
    %293 = arith.mulf %292, %291 : vector<2x8x5xf32>
    %294 = vector.extract_strided_slice %158 {offsets = [0, 1, 0], sizes = [2, 8, 5], strides = [1, 1, 1]} : vector<2x10x5xf32> to vector<2x8x5xf32>
    %295 = vector.broadcast %30 : f32 to vector<2x8x5xf32>
    %296 = arith.mulf %295, %294 : vector<2x8x5xf32>
    %297 = vector.extract_strided_slice %158 {offsets = [0, 2, 0], sizes = [2, 8, 5], strides = [1, 1, 1]} : vector<2x10x5xf32> to vector<2x8x5xf32>
    %298 = vector.broadcast %31 : f32 to vector<2x8x5xf32>
    %299 = arith.mulf %298, %297 : vector<2x8x5xf32>
    %300 = vector.extract_strided_slice %172 {offsets = [0, 0, 0], sizes = [2, 8, 5], strides = [1, 1, 1]} : vector<2x10x5xf32> to vector<2x8x5xf32>
    %301 = vector.broadcast %32 : f32 to vector<2x8x5xf32>
    %302 = arith.mulf %301, %300 : vector<2x8x5xf32>
    %303 = vector.extract_strided_slice %172 {offsets = [0, 1, 0], sizes = [2, 8, 5], strides = [1, 1, 1]} : vector<2x10x5xf32> to vector<2x8x5xf32>
    %304 = vector.broadcast %33 : f32 to vector<2x8x5xf32>
    %305 = arith.mulf %304, %303 : vector<2x8x5xf32>
    %306 = vector.extract_strided_slice %172 {offsets = [0, 2, 0], sizes = [2, 8, 5], strides = [1, 1, 1]} : vector<2x10x5xf32> to vector<2x8x5xf32>
    %307 = vector.broadcast %34 : f32 to vector<2x8x5xf32>
    %308 = arith.mulf %307, %306 : vector<2x8x5xf32>
    %309 = vector.extract_strided_slice %186 {offsets = [0, 0, 0], sizes = [2, 8, 5], strides = [1, 1, 1]} : vector<2x10x5xf32> to vector<2x8x5xf32>
    %310 = vector.broadcast %35 : f32 to vector<2x8x5xf32>
    %311 = arith.mulf %310, %309 : vector<2x8x5xf32>
    %312 = vector.extract_strided_slice %186 {offsets = [0, 1, 0], sizes = [2, 8, 5], strides = [1, 1, 1]} : vector<2x10x5xf32> to vector<2x8x5xf32>
    %313 = vector.broadcast %36 : f32 to vector<2x8x5xf32>
    %314 = arith.mulf %313, %312 : vector<2x8x5xf32>
    %315 = vector.extract_strided_slice %186 {offsets = [0, 2, 0], sizes = [2, 8, 5], strides = [1, 1, 1]} : vector<2x10x5xf32> to vector<2x8x5xf32>
    %316 = vector.broadcast %37 : f32 to vector<2x8x5xf32>
    %317 = arith.mulf %316, %315 : vector<2x8x5xf32>
    %c2_59 = arith.constant 2 : index
    %318 = memref.load %arg8[%c2_59] : memref<3xf32, #tpu.memory_space<smem>>
    %319 = arith.addf %293, %296 : vector<2x8x5xf32>
    %320 = arith.addf %299, %302 : vector<2x8x5xf32>
    %321 = arith.addf %305, %308 : vector<2x8x5xf32>
    %322 = arith.addf %311, %314 : vector<2x8x5xf32>
    %323 = arith.addf %319, %320 : vector<2x8x5xf32>
    %324 = arith.addf %321, %322 : vector<2x8x5xf32>
    %325 = arith.addf %323, %324 : vector<2x8x5xf32>
    %326 = arith.addf %325, %317 : vector<2x8x5xf32>
    %c2_60 = arith.constant 2 : index
    %327 = memref.load %arg7[%c2_60] : memref<3xf32, #tpu.memory_space<smem>>
    %328 = vector.broadcast %327 : f32 to vector<2x8x5xf32>
    %329 = arith.addf %326, %328 : vector<2x8x5xf32>
    %330 = vector.broadcast %318 : f32 to vector<2x8x5xf32>
    %331 = arith.mulf %330, %329 : vector<2x8x5xf32>
    %c2_61 = arith.constant 2 : index
    %332 = memref.load %arg9[%c2_61] : memref<3xf32, #tpu.memory_space<smem>>
    %333 = vector.broadcast %332 : f32 to vector<2x8x5xf32>
    %334 = arith.addf %331, %333 : vector<2x8x5xf32>
    %335 = vector.extract_strided_slice %0 {offsets = [0, 2, 0, 0], sizes = [2, 1, 8, 5], strides = [1, 1, 1, 1]} : vector<2x3x8x5xf32> to vector<2x1x8x5xf32>
    %336 = vector.shape_cast %335 : vector<2x1x8x5xf32> to vector<2x8x5xf32>
    %337 = arith.addf %334, %336 : vector<2x8x5xf32>
    %cst_62 = arith.constant 0.000000e+00 : f32
    %338 = vector.broadcast %cst_62 : f32 to vector<2x8x5xf32>
    %339 = arith.cmpf oge, %337, %338 : vector<2x8x5xf32>
    %340 = vector.broadcast %9 : f32 to vector<2x8x5xf32>
    %341 = arith.mulf %340, %337 : vector<2x8x5xf32>
    %342 = arith.select %339, %337, %341 : vector<2x8x5xi1>, vector<2x8x5xf32>
    %cst_63 = arith.constant 0.000000e+00 : f32
    %343 = vector.broadcast %cst_63 : f32 to vector<2x1x1xf32>
    %344 = vector.extract_strided_slice %238 {offsets = [0, 0, 0], sizes = [2, 1, 5], strides = [1, 1, 1]} : vector<2x8x5xf32> to vector<2x1x5xf32>
    %345 = tpu.concatenate %343, %344, %343 in 2 : vector<2x1x1xf32>, vector<2x1x5xf32>, vector<2x1x1xf32> -> vector<2x1x7xf32>
    %346 = vector.extract_strided_slice %345 {offsets = [0, 0, 0], sizes = [2, 1, 5], strides = [1, 1, 1]} : vector<2x1x7xf32> to vector<2x1x5xf32>
    %347 = vector.extract_strided_slice %345 {offsets = [0, 0, 1], sizes = [2, 1, 5], strides = [1, 1, 1]} : vector<2x1x7xf32> to vector<2x1x5xf32>
    %348 = vector.extract_strided_slice %345 {offsets = [0, 0, 2], sizes = [2, 1, 5], strides = [1, 1, 1]} : vector<2x1x7xf32> to vector<2x1x5xf32>
    %349 = vector.broadcast %41 : f32 to vector<2x1x5xf32>
    %350 = arith.mulf %349, %346 : vector<2x1x5xf32>
    %351 = vector.broadcast %42 : f32 to vector<2x1x5xf32>
    %352 = arith.mulf %351, %347 : vector<2x1x5xf32>
    %353 = vector.broadcast %43 : f32 to vector<2x1x5xf32>
    %354 = arith.mulf %353, %348 : vector<2x1x5xf32>
    %355 = arith.addf %350, %352 : vector<2x1x5xf32>
    %356 = arith.addf %355, %354 : vector<2x1x5xf32>
    %357 = vector.broadcast %38 : f32 to vector<2x1x5xf32>
    %358 = arith.mulf %357, %346 : vector<2x1x5xf32>
    %359 = vector.broadcast %39 : f32 to vector<2x1x5xf32>
    %360 = arith.mulf %359, %347 : vector<2x1x5xf32>
    %361 = vector.broadcast %40 : f32 to vector<2x1x5xf32>
    %362 = arith.mulf %361, %348 : vector<2x1x5xf32>
    %363 = arith.addf %358, %360 : vector<2x1x5xf32>
    %364 = arith.addf %363, %362 : vector<2x1x5xf32>
    %365 = vector.extract_strided_slice %238 {offsets = [0, 1, 0], sizes = [2, 1, 5], strides = [1, 1, 1]} : vector<2x8x5xf32> to vector<2x1x5xf32>
    %366 = tpu.concatenate %343, %365, %343 in 2 : vector<2x1x1xf32>, vector<2x1x5xf32>, vector<2x1x1xf32> -> vector<2x1x7xf32>
    %367 = vector.extract_strided_slice %366 {offsets = [0, 0, 0], sizes = [2, 1, 5], strides = [1, 1, 1]} : vector<2x1x7xf32> to vector<2x1x5xf32>
    %368 = vector.extract_strided_slice %366 {offsets = [0, 0, 1], sizes = [2, 1, 5], strides = [1, 1, 1]} : vector<2x1x7xf32> to vector<2x1x5xf32>
    %369 = vector.extract_strided_slice %366 {offsets = [0, 0, 2], sizes = [2, 1, 5], strides = [1, 1, 1]} : vector<2x1x7xf32> to vector<2x1x5xf32>
    %370 = vector.broadcast %44 : f32 to vector<2x1x5xf32>
    %371 = arith.mulf %370, %367 : vector<2x1x5xf32>
    %372 = vector.broadcast %45 : f32 to vector<2x1x5xf32>
    %373 = arith.mulf %372, %368 : vector<2x1x5xf32>
    %374 = vector.broadcast %46 : f32 to vector<2x1x5xf32>
    %375 = arith.mulf %374, %369 : vector<2x1x5xf32>
    %376 = arith.addf %371, %373 : vector<2x1x5xf32>
    %377 = arith.addf %376, %375 : vector<2x1x5xf32>
    %378 = vector.broadcast %41 : f32 to vector<2x1x5xf32>
    %379 = arith.mulf %378, %367 : vector<2x1x5xf32>
    %380 = vector.broadcast %42 : f32 to vector<2x1x5xf32>
    %381 = arith.mulf %380, %368 : vector<2x1x5xf32>
    %382 = vector.broadcast %43 : f32 to vector<2x1x5xf32>
    %383 = arith.mulf %382, %369 : vector<2x1x5xf32>
    %384 = arith.addf %379, %381 : vector<2x1x5xf32>
    %385 = arith.addf %384, %383 : vector<2x1x5xf32>
    %386 = vector.broadcast %38 : f32 to vector<2x1x5xf32>
    %387 = arith.mulf %386, %367 : vector<2x1x5xf32>
    %388 = vector.broadcast %39 : f32 to vector<2x1x5xf32>
    %389 = arith.mulf %388, %368 : vector<2x1x5xf32>
    %390 = vector.broadcast %40 : f32 to vector<2x1x5xf32>
    %391 = arith.mulf %390, %369 : vector<2x1x5xf32>
    %392 = arith.addf %387, %389 : vector<2x1x5xf32>
    %393 = arith.addf %392, %391 : vector<2x1x5xf32>
    %394 = vector.extract_strided_slice %238 {offsets = [0, 2, 0], sizes = [2, 1, 5], strides = [1, 1, 1]} : vector<2x8x5xf32> to vector<2x1x5xf32>
    %395 = tpu.concatenate %343, %394, %343 in 2 : vector<2x1x1xf32>, vector<2x1x5xf32>, vector<2x1x1xf32> -> vector<2x1x7xf32>
    %396 = vector.extract_strided_slice %395 {offsets = [0, 0, 0], sizes = [2, 1, 5], strides = [1, 1, 1]} : vector<2x1x7xf32> to vector<2x1x5xf32>
    %397 = vector.extract_strided_slice %395 {offsets = [0, 0, 1], sizes = [2, 1, 5], strides = [1, 1, 1]} : vector<2x1x7xf32> to vector<2x1x5xf32>
    %398 = vector.extract_strided_slice %395 {offsets = [0, 0, 2], sizes = [2, 1, 5], strides = [1, 1, 1]} : vector<2x1x7xf32> to vector<2x1x5xf32>
    %399 = vector.broadcast %44 : f32 to vector<2x1x5xf32>
    %400 = arith.mulf %399, %396 : vector<2x1x5xf32>
    %401 = vector.broadcast %45 : f32 to vector<2x1x5xf32>
    %402 = arith.mulf %401, %397 : vector<2x1x5xf32>
    %403 = vector.broadcast %46 : f32 to vector<2x1x5xf32>
    %404 = arith.mulf %403, %398 : vector<2x1x5xf32>
    %405 = arith.addf %400, %402 : vector<2x1x5xf32>
    %406 = arith.addf %405, %404 : vector<2x1x5xf32>
    %407 = vector.broadcast %41 : f32 to vector<2x1x5xf32>
    %408 = arith.mulf %407, %396 : vector<2x1x5xf32>
    %409 = vector.broadcast %42 : f32 to vector<2x1x5xf32>
    %410 = arith.mulf %409, %397 : vector<2x1x5xf32>
    %411 = vector.broadcast %43 : f32 to vector<2x1x5xf32>
    %412 = arith.mulf %411, %398 : vector<2x1x5xf32>
    %413 = arith.addf %408, %410 : vector<2x1x5xf32>
    %414 = arith.addf %413, %412 : vector<2x1x5xf32>
    %415 = vector.extract_strided_slice %238 {offsets = [0, 3, 0], sizes = [2, 1, 5], strides = [1, 1, 1]} : vector<2x8x5xf32> to vector<2x1x5xf32>
    %416 = tpu.concatenate %343, %415, %343 in 2 : vector<2x1x1xf32>, vector<2x1x5xf32>, vector<2x1x1xf32> -> vector<2x1x7xf32>
    %417 = vector.extract_strided_slice %416 {offsets = [0, 0, 0], sizes = [2, 1, 5], strides = [1, 1, 1]} : vector<2x1x7xf32> to vector<2x1x5xf32>
    %418 = vector.extract_strided_slice %416 {offsets = [0, 0, 1], sizes = [2, 1, 5], strides = [1, 1, 1]} : vector<2x1x7xf32> to vector<2x1x5xf32>
    %419 = vector.extract_strided_slice %416 {offsets = [0, 0, 2], sizes = [2, 1, 5], strides = [1, 1, 1]} : vector<2x1x7xf32> to vector<2x1x5xf32>
    %420 = vector.broadcast %50 : f32 to vector<2x1x5xf32>
    %421 = arith.mulf %420, %417 : vector<2x1x5xf32>
    %422 = vector.broadcast %51 : f32 to vector<2x1x5xf32>
    %423 = arith.mulf %422, %418 : vector<2x1x5xf32>
    %424 = vector.broadcast %52 : f32 to vector<2x1x5xf32>
    %425 = arith.mulf %424, %419 : vector<2x1x5xf32>
    %426 = arith.addf %421, %423 : vector<2x1x5xf32>
    %427 = arith.addf %426, %425 : vector<2x1x5xf32>
    %428 = vector.broadcast %47 : f32 to vector<2x1x5xf32>
    %429 = arith.mulf %428, %417 : vector<2x1x5xf32>
    %430 = vector.broadcast %48 : f32 to vector<2x1x5xf32>
    %431 = arith.mulf %430, %418 : vector<2x1x5xf32>
    %432 = vector.broadcast %49 : f32 to vector<2x1x5xf32>
    %433 = arith.mulf %432, %419 : vector<2x1x5xf32>
    %434 = arith.addf %429, %431 : vector<2x1x5xf32>
    %435 = arith.addf %434, %433 : vector<2x1x5xf32>
    %436 = vector.extract_strided_slice %238 {offsets = [0, 4, 0], sizes = [2, 1, 5], strides = [1, 1, 1]} : vector<2x8x5xf32> to vector<2x1x5xf32>
    %437 = tpu.concatenate %343, %436, %343 in 2 : vector<2x1x1xf32>, vector<2x1x5xf32>, vector<2x1x1xf32> -> vector<2x1x7xf32>
    %438 = vector.extract_strided_slice %437 {offsets = [0, 0, 0], sizes = [2, 1, 5], strides = [1, 1, 1]} : vector<2x1x7xf32> to vector<2x1x5xf32>
    %439 = vector.extract_strided_slice %437 {offsets = [0, 0, 1], sizes = [2, 1, 5], strides = [1, 1, 1]} : vector<2x1x7xf32> to vector<2x1x5xf32>
    %440 = vector.extract_strided_slice %437 {offsets = [0, 0, 2], sizes = [2, 1, 5], strides = [1, 1, 1]} : vector<2x1x7xf32> to vector<2x1x5xf32>
    %441 = vector.broadcast %53 : f32 to vector<2x1x5xf32>
    %442 = arith.mulf %441, %438 : vector<2x1x5xf32>
    %443 = vector.broadcast %54 : f32 to vector<2x1x5xf32>
    %444 = arith.mulf %443, %439 : vector<2x1x5xf32>
    %445 = vector.broadcast %55 : f32 to vector<2x1x5xf32>
    %446 = arith.mulf %445, %440 : vector<2x1x5xf32>
    %447 = arith.addf %442, %444 : vector<2x1x5xf32>
    %448 = arith.addf %447, %446 : vector<2x1x5xf32>
    %449 = vector.broadcast %50 : f32 to vector<2x1x5xf32>
    %450 = arith.mulf %449, %438 : vector<2x1x5xf32>
    %451 = vector.broadcast %51 : f32 to vector<2x1x5xf32>
    %452 = arith.mulf %451, %439 : vector<2x1x5xf32>
    %453 = vector.broadcast %52 : f32 to vector<2x1x5xf32>
    %454 = arith.mulf %453, %440 : vector<2x1x5xf32>
    %455 = arith.addf %450, %452 : vector<2x1x5xf32>
    %456 = arith.addf %455, %454 : vector<2x1x5xf32>
    %457 = vector.broadcast %47 : f32 to vector<2x1x5xf32>
    %458 = arith.mulf %457, %438 : vector<2x1x5xf32>
    %459 = vector.broadcast %48 : f32 to vector<2x1x5xf32>
    %460 = arith.mulf %459, %439 : vector<2x1x5xf32>
    %461 = vector.broadcast %49 : f32 to vector<2x1x5xf32>
    %462 = arith.mulf %461, %440 : vector<2x1x5xf32>
    %463 = arith.addf %458, %460 : vector<2x1x5xf32>
    %464 = arith.addf %463, %462 : vector<2x1x5xf32>
    %465 = vector.extract_strided_slice %238 {offsets = [0, 5, 0], sizes = [2, 1, 5], strides = [1, 1, 1]} : vector<2x8x5xf32> to vector<2x1x5xf32>
    %466 = tpu.concatenate %343, %465, %343 in 2 : vector<2x1x1xf32>, vector<2x1x5xf32>, vector<2x1x1xf32> -> vector<2x1x7xf32>
    %467 = vector.extract_strided_slice %466 {offsets = [0, 0, 0], sizes = [2, 1, 5], strides = [1, 1, 1]} : vector<2x1x7xf32> to vector<2x1x5xf32>
    %468 = vector.extract_strided_slice %466 {offsets = [0, 0, 1], sizes = [2, 1, 5], strides = [1, 1, 1]} : vector<2x1x7xf32> to vector<2x1x5xf32>
    %469 = vector.extract_strided_slice %466 {offsets = [0, 0, 2], sizes = [2, 1, 5], strides = [1, 1, 1]} : vector<2x1x7xf32> to vector<2x1x5xf32>
    %470 = vector.broadcast %53 : f32 to vector<2x1x5xf32>
    %471 = arith.mulf %470, %467 : vector<2x1x5xf32>
    %472 = vector.broadcast %54 : f32 to vector<2x1x5xf32>
    %473 = arith.mulf %472, %468 : vector<2x1x5xf32>
    %474 = vector.broadcast %55 : f32 to vector<2x1x5xf32>
    %475 = arith.mulf %474, %469 : vector<2x1x5xf32>
    %476 = arith.addf %471, %473 : vector<2x1x5xf32>
    %477 = arith.addf %476, %475 : vector<2x1x5xf32>
    %478 = vector.broadcast %50 : f32 to vector<2x1x5xf32>
    %479 = arith.mulf %478, %467 : vector<2x1x5xf32>
    %480 = vector.broadcast %51 : f32 to vector<2x1x5xf32>
    %481 = arith.mulf %480, %468 : vector<2x1x5xf32>
    %482 = vector.broadcast %52 : f32 to vector<2x1x5xf32>
    %483 = arith.mulf %482, %469 : vector<2x1x5xf32>
    %484 = arith.addf %479, %481 : vector<2x1x5xf32>
    %485 = arith.addf %484, %483 : vector<2x1x5xf32>
    %486 = vector.extract_strided_slice %238 {offsets = [0, 6, 0], sizes = [2, 1, 5], strides = [1, 1, 1]} : vector<2x8x5xf32> to vector<2x1x5xf32>
    %487 = tpu.concatenate %343, %486, %343 in 2 : vector<2x1x1xf32>, vector<2x1x5xf32>, vector<2x1x1xf32> -> vector<2x1x7xf32>
    %488 = vector.extract_strided_slice %487 {offsets = [0, 0, 0], sizes = [2, 1, 5], strides = [1, 1, 1]} : vector<2x1x7xf32> to vector<2x1x5xf32>
    %489 = vector.extract_strided_slice %487 {offsets = [0, 0, 1], sizes = [2, 1, 5], strides = [1, 1, 1]} : vector<2x1x7xf32> to vector<2x1x5xf32>
    %490 = vector.extract_strided_slice %487 {offsets = [0, 0, 2], sizes = [2, 1, 5], strides = [1, 1, 1]} : vector<2x1x7xf32> to vector<2x1x5xf32>
    %491 = vector.broadcast %59 : f32 to vector<2x1x5xf32>
    %492 = arith.mulf %491, %488 : vector<2x1x5xf32>
    %493 = vector.broadcast %60 : f32 to vector<2x1x5xf32>
    %494 = arith.mulf %493, %489 : vector<2x1x5xf32>
    %495 = vector.broadcast %61 : f32 to vector<2x1x5xf32>
    %496 = arith.mulf %495, %490 : vector<2x1x5xf32>
    %497 = arith.addf %492, %494 : vector<2x1x5xf32>
    %498 = arith.addf %497, %496 : vector<2x1x5xf32>
    %499 = vector.broadcast %56 : f32 to vector<2x1x5xf32>
    %500 = arith.mulf %499, %488 : vector<2x1x5xf32>
    %501 = vector.broadcast %57 : f32 to vector<2x1x5xf32>
    %502 = arith.mulf %501, %489 : vector<2x1x5xf32>
    %503 = vector.broadcast %58 : f32 to vector<2x1x5xf32>
    %504 = arith.mulf %503, %490 : vector<2x1x5xf32>
    %505 = arith.addf %500, %502 : vector<2x1x5xf32>
    %506 = arith.addf %505, %504 : vector<2x1x5xf32>
    %507 = vector.extract_strided_slice %238 {offsets = [0, 7, 0], sizes = [2, 1, 5], strides = [1, 1, 1]} : vector<2x8x5xf32> to vector<2x1x5xf32>
    %508 = tpu.concatenate %343, %507, %343 in 2 : vector<2x1x1xf32>, vector<2x1x5xf32>, vector<2x1x1xf32> -> vector<2x1x7xf32>
    %509 = vector.extract_strided_slice %508 {offsets = [0, 0, 0], sizes = [2, 1, 5], strides = [1, 1, 1]} : vector<2x1x7xf32> to vector<2x1x5xf32>
    %510 = vector.extract_strided_slice %508 {offsets = [0, 0, 1], sizes = [2, 1, 5], strides = [1, 1, 1]} : vector<2x1x7xf32> to vector<2x1x5xf32>
    %511 = vector.extract_strided_slice %508 {offsets = [0, 0, 2], sizes = [2, 1, 5], strides = [1, 1, 1]} : vector<2x1x7xf32> to vector<2x1x5xf32>
    %512 = vector.broadcast %62 : f32 to vector<2x1x5xf32>
    %513 = arith.mulf %512, %509 : vector<2x1x5xf32>
    %514 = vector.broadcast %63 : f32 to vector<2x1x5xf32>
    %515 = arith.mulf %514, %510 : vector<2x1x5xf32>
    %516 = vector.broadcast %64 : f32 to vector<2x1x5xf32>
    %517 = arith.mulf %516, %511 : vector<2x1x5xf32>
    %518 = arith.addf %513, %515 : vector<2x1x5xf32>
    %519 = arith.addf %518, %517 : vector<2x1x5xf32>
    %520 = vector.broadcast %59 : f32 to vector<2x1x5xf32>
    %521 = arith.mulf %520, %509 : vector<2x1x5xf32>
    %522 = vector.broadcast %60 : f32 to vector<2x1x5xf32>
    %523 = arith.mulf %522, %510 : vector<2x1x5xf32>
    %524 = vector.broadcast %61 : f32 to vector<2x1x5xf32>
    %525 = arith.mulf %524, %511 : vector<2x1x5xf32>
    %526 = arith.addf %521, %523 : vector<2x1x5xf32>
    %527 = arith.addf %526, %525 : vector<2x1x5xf32>
    %528 = vector.broadcast %56 : f32 to vector<2x1x5xf32>
    %529 = arith.mulf %528, %509 : vector<2x1x5xf32>
    %530 = vector.broadcast %57 : f32 to vector<2x1x5xf32>
    %531 = arith.mulf %530, %510 : vector<2x1x5xf32>
    %532 = vector.broadcast %58 : f32 to vector<2x1x5xf32>
    %533 = arith.mulf %532, %511 : vector<2x1x5xf32>
    %534 = arith.addf %529, %531 : vector<2x1x5xf32>
    %535 = arith.addf %534, %533 : vector<2x1x5xf32>
    %536 = vector.extract_strided_slice %290 {offsets = [0, 0, 0], sizes = [2, 1, 5], strides = [1, 1, 1]} : vector<2x8x5xf32> to vector<2x1x5xf32>
    %537 = tpu.concatenate %343, %536, %343 in 2 : vector<2x1x1xf32>, vector<2x1x5xf32>, vector<2x1x1xf32> -> vector<2x1x7xf32>
    %538 = vector.extract_strided_slice %537 {offsets = [0, 0, 0], sizes = [2, 1, 5], strides = [1, 1, 1]} : vector<2x1x7xf32> to vector<2x1x5xf32>
    %539 = vector.extract_strided_slice %537 {offsets = [0, 0, 1], sizes = [2, 1, 5], strides = [1, 1, 1]} : vector<2x1x7xf32> to vector<2x1x5xf32>
    %540 = vector.extract_strided_slice %537 {offsets = [0, 0, 2], sizes = [2, 1, 5], strides = [1, 1, 1]} : vector<2x1x7xf32> to vector<2x1x5xf32>
    %541 = vector.broadcast %62 : f32 to vector<2x1x5xf32>
    %542 = arith.mulf %541, %538 : vector<2x1x5xf32>
    %543 = vector.broadcast %63 : f32 to vector<2x1x5xf32>
    %544 = arith.mulf %543, %539 : vector<2x1x5xf32>
    %545 = vector.broadcast %64 : f32 to vector<2x1x5xf32>
    %546 = arith.mulf %545, %540 : vector<2x1x5xf32>
    %547 = arith.addf %542, %544 : vector<2x1x5xf32>
    %548 = arith.addf %547, %546 : vector<2x1x5xf32>
    %549 = vector.broadcast %59 : f32 to vector<2x1x5xf32>
    %550 = arith.mulf %549, %538 : vector<2x1x5xf32>
    %551 = vector.broadcast %60 : f32 to vector<2x1x5xf32>
    %552 = arith.mulf %551, %539 : vector<2x1x5xf32>
    %553 = vector.broadcast %61 : f32 to vector<2x1x5xf32>
    %554 = arith.mulf %553, %540 : vector<2x1x5xf32>
    %555 = arith.addf %550, %552 : vector<2x1x5xf32>
    %556 = arith.addf %555, %554 : vector<2x1x5xf32>
    %557 = vector.extract_strided_slice %290 {offsets = [0, 1, 0], sizes = [2, 1, 5], strides = [1, 1, 1]} : vector<2x8x5xf32> to vector<2x1x5xf32>
    %558 = tpu.concatenate %343, %557, %343 in 2 : vector<2x1x1xf32>, vector<2x1x5xf32>, vector<2x1x1xf32> -> vector<2x1x7xf32>
    %559 = vector.extract_strided_slice %558 {offsets = [0, 0, 0], sizes = [2, 1, 5], strides = [1, 1, 1]} : vector<2x1x7xf32> to vector<2x1x5xf32>
    %560 = vector.extract_strided_slice %558 {offsets = [0, 0, 1], sizes = [2, 1, 5], strides = [1, 1, 1]} : vector<2x1x7xf32> to vector<2x1x5xf32>
    %561 = vector.extract_strided_slice %558 {offsets = [0, 0, 2], sizes = [2, 1, 5], strides = [1, 1, 1]} : vector<2x1x7xf32> to vector<2x1x5xf32>
    %562 = vector.broadcast %68 : f32 to vector<2x1x5xf32>
    %563 = arith.mulf %562, %559 : vector<2x1x5xf32>
    %564 = vector.broadcast %69 : f32 to vector<2x1x5xf32>
    %565 = arith.mulf %564, %560 : vector<2x1x5xf32>
    %566 = vector.broadcast %70 : f32 to vector<2x1x5xf32>
    %567 = arith.mulf %566, %561 : vector<2x1x5xf32>
    %568 = arith.addf %563, %565 : vector<2x1x5xf32>
    %569 = arith.addf %568, %567 : vector<2x1x5xf32>
    %570 = vector.broadcast %65 : f32 to vector<2x1x5xf32>
    %571 = arith.mulf %570, %559 : vector<2x1x5xf32>
    %572 = vector.broadcast %66 : f32 to vector<2x1x5xf32>
    %573 = arith.mulf %572, %560 : vector<2x1x5xf32>
    %574 = vector.broadcast %67 : f32 to vector<2x1x5xf32>
    %575 = arith.mulf %574, %561 : vector<2x1x5xf32>
    %576 = arith.addf %571, %573 : vector<2x1x5xf32>
    %577 = arith.addf %576, %575 : vector<2x1x5xf32>
    %578 = vector.extract_strided_slice %290 {offsets = [0, 2, 0], sizes = [2, 1, 5], strides = [1, 1, 1]} : vector<2x8x5xf32> to vector<2x1x5xf32>
    %579 = tpu.concatenate %343, %578, %343 in 2 : vector<2x1x1xf32>, vector<2x1x5xf32>, vector<2x1x1xf32> -> vector<2x1x7xf32>
    %580 = vector.extract_strided_slice %579 {offsets = [0, 0, 0], sizes = [2, 1, 5], strides = [1, 1, 1]} : vector<2x1x7xf32> to vector<2x1x5xf32>
    %581 = vector.extract_strided_slice %579 {offsets = [0, 0, 1], sizes = [2, 1, 5], strides = [1, 1, 1]} : vector<2x1x7xf32> to vector<2x1x5xf32>
    %582 = vector.extract_strided_slice %579 {offsets = [0, 0, 2], sizes = [2, 1, 5], strides = [1, 1, 1]} : vector<2x1x7xf32> to vector<2x1x5xf32>
    %583 = vector.broadcast %71 : f32 to vector<2x1x5xf32>
    %584 = arith.mulf %583, %580 : vector<2x1x5xf32>
    %585 = vector.broadcast %72 : f32 to vector<2x1x5xf32>
    %586 = arith.mulf %585, %581 : vector<2x1x5xf32>
    %587 = vector.broadcast %73 : f32 to vector<2x1x5xf32>
    %588 = arith.mulf %587, %582 : vector<2x1x5xf32>
    %589 = arith.addf %584, %586 : vector<2x1x5xf32>
    %590 = arith.addf %589, %588 : vector<2x1x5xf32>
    %591 = vector.broadcast %68 : f32 to vector<2x1x5xf32>
    %592 = arith.mulf %591, %580 : vector<2x1x5xf32>
    %593 = vector.broadcast %69 : f32 to vector<2x1x5xf32>
    %594 = arith.mulf %593, %581 : vector<2x1x5xf32>
    %595 = vector.broadcast %70 : f32 to vector<2x1x5xf32>
    %596 = arith.mulf %595, %582 : vector<2x1x5xf32>
    %597 = arith.addf %592, %594 : vector<2x1x5xf32>
    %598 = arith.addf %597, %596 : vector<2x1x5xf32>
    %599 = vector.broadcast %65 : f32 to vector<2x1x5xf32>
    %600 = arith.mulf %599, %580 : vector<2x1x5xf32>
    %601 = vector.broadcast %66 : f32 to vector<2x1x5xf32>
    %602 = arith.mulf %601, %581 : vector<2x1x5xf32>
    %603 = vector.broadcast %67 : f32 to vector<2x1x5xf32>
    %604 = arith.mulf %603, %582 : vector<2x1x5xf32>
    %605 = arith.addf %600, %602 : vector<2x1x5xf32>
    %606 = arith.addf %605, %604 : vector<2x1x5xf32>
    %607 = vector.extract_strided_slice %290 {offsets = [0, 3, 0], sizes = [2, 1, 5], strides = [1, 1, 1]} : vector<2x8x5xf32> to vector<2x1x5xf32>
    %608 = tpu.concatenate %343, %607, %343 in 2 : vector<2x1x1xf32>, vector<2x1x5xf32>, vector<2x1x1xf32> -> vector<2x1x7xf32>
    %609 = vector.extract_strided_slice %608 {offsets = [0, 0, 0], sizes = [2, 1, 5], strides = [1, 1, 1]} : vector<2x1x7xf32> to vector<2x1x5xf32>
    %610 = vector.extract_strided_slice %608 {offsets = [0, 0, 1], sizes = [2, 1, 5], strides = [1, 1, 1]} : vector<2x1x7xf32> to vector<2x1x5xf32>
    %611 = vector.extract_strided_slice %608 {offsets = [0, 0, 2], sizes = [2, 1, 5], strides = [1, 1, 1]} : vector<2x1x7xf32> to vector<2x1x5xf32>
    %612 = vector.broadcast %71 : f32 to vector<2x1x5xf32>
    %613 = arith.mulf %612, %609 : vector<2x1x5xf32>
    %614 = vector.broadcast %72 : f32 to vector<2x1x5xf32>
    %615 = arith.mulf %614, %610 : vector<2x1x5xf32>
    %616 = vector.broadcast %73 : f32 to vector<2x1x5xf32>
    %617 = arith.mulf %616, %611 : vector<2x1x5xf32>
    %618 = arith.addf %613, %615 : vector<2x1x5xf32>
    %619 = arith.addf %618, %617 : vector<2x1x5xf32>
    %620 = vector.broadcast %68 : f32 to vector<2x1x5xf32>
    %621 = arith.mulf %620, %609 : vector<2x1x5xf32>
    %622 = vector.broadcast %69 : f32 to vector<2x1x5xf32>
    %623 = arith.mulf %622, %610 : vector<2x1x5xf32>
    %624 = vector.broadcast %70 : f32 to vector<2x1x5xf32>
    %625 = arith.mulf %624, %611 : vector<2x1x5xf32>
    %626 = arith.addf %621, %623 : vector<2x1x5xf32>
    %627 = arith.addf %626, %625 : vector<2x1x5xf32>
    %628 = vector.extract_strided_slice %290 {offsets = [0, 4, 0], sizes = [2, 1, 5], strides = [1, 1, 1]} : vector<2x8x5xf32> to vector<2x1x5xf32>
    %629 = tpu.concatenate %343, %628, %343 in 2 : vector<2x1x1xf32>, vector<2x1x5xf32>, vector<2x1x1xf32> -> vector<2x1x7xf32>
    %630 = vector.extract_strided_slice %629 {offsets = [0, 0, 0], sizes = [2, 1, 5], strides = [1, 1, 1]} : vector<2x1x7xf32> to vector<2x1x5xf32>
    %631 = vector.extract_strided_slice %629 {offsets = [0, 0, 1], sizes = [2, 1, 5], strides = [1, 1, 1]} : vector<2x1x7xf32> to vector<2x1x5xf32>
    %632 = vector.extract_strided_slice %629 {offsets = [0, 0, 2], sizes = [2, 1, 5], strides = [1, 1, 1]} : vector<2x1x7xf32> to vector<2x1x5xf32>
    %633 = vector.broadcast %77 : f32 to vector<2x1x5xf32>
    %634 = arith.mulf %633, %630 : vector<2x1x5xf32>
    %635 = vector.broadcast %78 : f32 to vector<2x1x5xf32>
    %636 = arith.mulf %635, %631 : vector<2x1x5xf32>
    %637 = vector.broadcast %79 : f32 to vector<2x1x5xf32>
    %638 = arith.mulf %637, %632 : vector<2x1x5xf32>
    %639 = arith.addf %634, %636 : vector<2x1x5xf32>
    %640 = arith.addf %639, %638 : vector<2x1x5xf32>
    %641 = vector.broadcast %74 : f32 to vector<2x1x5xf32>
    %642 = arith.mulf %641, %630 : vector<2x1x5xf32>
    %643 = vector.broadcast %75 : f32 to vector<2x1x5xf32>
    %644 = arith.mulf %643, %631 : vector<2x1x5xf32>
    %645 = vector.broadcast %76 : f32 to vector<2x1x5xf32>
    %646 = arith.mulf %645, %632 : vector<2x1x5xf32>
    %647 = arith.addf %642, %644 : vector<2x1x5xf32>
    %648 = arith.addf %647, %646 : vector<2x1x5xf32>
    %649 = vector.extract_strided_slice %290 {offsets = [0, 5, 0], sizes = [2, 1, 5], strides = [1, 1, 1]} : vector<2x8x5xf32> to vector<2x1x5xf32>
    %650 = tpu.concatenate %343, %649, %343 in 2 : vector<2x1x1xf32>, vector<2x1x5xf32>, vector<2x1x1xf32> -> vector<2x1x7xf32>
    %651 = vector.extract_strided_slice %650 {offsets = [0, 0, 0], sizes = [2, 1, 5], strides = [1, 1, 1]} : vector<2x1x7xf32> to vector<2x1x5xf32>
    %652 = vector.extract_strided_slice %650 {offsets = [0, 0, 1], sizes = [2, 1, 5], strides = [1, 1, 1]} : vector<2x1x7xf32> to vector<2x1x5xf32>
    %653 = vector.extract_strided_slice %650 {offsets = [0, 0, 2], sizes = [2, 1, 5], strides = [1, 1, 1]} : vector<2x1x7xf32> to vector<2x1x5xf32>
    %654 = vector.broadcast %80 : f32 to vector<2x1x5xf32>
    %655 = arith.mulf %654, %651 : vector<2x1x5xf32>
    %656 = vector.broadcast %81 : f32 to vector<2x1x5xf32>
    %657 = arith.mulf %656, %652 : vector<2x1x5xf32>
    %658 = vector.broadcast %82 : f32 to vector<2x1x5xf32>
    %659 = arith.mulf %658, %653 : vector<2x1x5xf32>
    %660 = arith.addf %655, %657 : vector<2x1x5xf32>
    %661 = arith.addf %660, %659 : vector<2x1x5xf32>
    %662 = vector.broadcast %77 : f32 to vector<2x1x5xf32>
    %663 = arith.mulf %662, %651 : vector<2x1x5xf32>
    %664 = vector.broadcast %78 : f32 to vector<2x1x5xf32>
    %665 = arith.mulf %664, %652 : vector<2x1x5xf32>
    %666 = vector.broadcast %79 : f32 to vector<2x1x5xf32>
    %667 = arith.mulf %666, %653 : vector<2x1x5xf32>
    %668 = arith.addf %663, %665 : vector<2x1x5xf32>
    %669 = arith.addf %668, %667 : vector<2x1x5xf32>
    %670 = vector.broadcast %74 : f32 to vector<2x1x5xf32>
    %671 = arith.mulf %670, %651 : vector<2x1x5xf32>
    %672 = vector.broadcast %75 : f32 to vector<2x1x5xf32>
    %673 = arith.mulf %672, %652 : vector<2x1x5xf32>
    %674 = vector.broadcast %76 : f32 to vector<2x1x5xf32>
    %675 = arith.mulf %674, %653 : vector<2x1x5xf32>
    %676 = arith.addf %671, %673 : vector<2x1x5xf32>
    %677 = arith.addf %676, %675 : vector<2x1x5xf32>
    %678 = vector.extract_strided_slice %290 {offsets = [0, 6, 0], sizes = [2, 1, 5], strides = [1, 1, 1]} : vector<2x8x5xf32> to vector<2x1x5xf32>
    %679 = tpu.concatenate %343, %678, %343 in 2 : vector<2x1x1xf32>, vector<2x1x5xf32>, vector<2x1x1xf32> -> vector<2x1x7xf32>
    %680 = vector.extract_strided_slice %679 {offsets = [0, 0, 0], sizes = [2, 1, 5], strides = [1, 1, 1]} : vector<2x1x7xf32> to vector<2x1x5xf32>
    %681 = vector.extract_strided_slice %679 {offsets = [0, 0, 1], sizes = [2, 1, 5], strides = [1, 1, 1]} : vector<2x1x7xf32> to vector<2x1x5xf32>
    %682 = vector.extract_strided_slice %679 {offsets = [0, 0, 2], sizes = [2, 1, 5], strides = [1, 1, 1]} : vector<2x1x7xf32> to vector<2x1x5xf32>
    %683 = vector.broadcast %80 : f32 to vector<2x1x5xf32>
    %684 = arith.mulf %683, %680 : vector<2x1x5xf32>
    %685 = vector.broadcast %81 : f32 to vector<2x1x5xf32>
    %686 = arith.mulf %685, %681 : vector<2x1x5xf32>
    %687 = vector.broadcast %82 : f32 to vector<2x1x5xf32>
    %688 = arith.mulf %687, %682 : vector<2x1x5xf32>
    %689 = arith.addf %684, %686 : vector<2x1x5xf32>
    %690 = arith.addf %689, %688 : vector<2x1x5xf32>
    %691 = vector.broadcast %77 : f32 to vector<2x1x5xf32>
    %692 = arith.mulf %691, %680 : vector<2x1x5xf32>
    %693 = vector.broadcast %78 : f32 to vector<2x1x5xf32>
    %694 = arith.mulf %693, %681 : vector<2x1x5xf32>
    %695 = vector.broadcast %79 : f32 to vector<2x1x5xf32>
    %696 = arith.mulf %695, %682 : vector<2x1x5xf32>
    %697 = arith.addf %692, %694 : vector<2x1x5xf32>
    %698 = arith.addf %697, %696 : vector<2x1x5xf32>
    %699 = vector.extract_strided_slice %290 {offsets = [0, 7, 0], sizes = [2, 1, 5], strides = [1, 1, 1]} : vector<2x8x5xf32> to vector<2x1x5xf32>
    %700 = tpu.concatenate %343, %699, %343 in 2 : vector<2x1x1xf32>, vector<2x1x5xf32>, vector<2x1x1xf32> -> vector<2x1x7xf32>
    %701 = vector.extract_strided_slice %700 {offsets = [0, 0, 0], sizes = [2, 1, 5], strides = [1, 1, 1]} : vector<2x1x7xf32> to vector<2x1x5xf32>
    %702 = vector.extract_strided_slice %700 {offsets = [0, 0, 1], sizes = [2, 1, 5], strides = [1, 1, 1]} : vector<2x1x7xf32> to vector<2x1x5xf32>
    %703 = vector.extract_strided_slice %700 {offsets = [0, 0, 2], sizes = [2, 1, 5], strides = [1, 1, 1]} : vector<2x1x7xf32> to vector<2x1x5xf32>
    %704 = vector.broadcast %86 : f32 to vector<2x1x5xf32>
    %705 = arith.mulf %704, %701 : vector<2x1x5xf32>
    %706 = vector.broadcast %87 : f32 to vector<2x1x5xf32>
    %707 = arith.mulf %706, %702 : vector<2x1x5xf32>
    %708 = vector.broadcast %88 : f32 to vector<2x1x5xf32>
    %709 = arith.mulf %708, %703 : vector<2x1x5xf32>
    %710 = arith.addf %705, %707 : vector<2x1x5xf32>
    %711 = arith.addf %710, %709 : vector<2x1x5xf32>
    %712 = vector.broadcast %83 : f32 to vector<2x1x5xf32>
    %713 = arith.mulf %712, %701 : vector<2x1x5xf32>
    %714 = vector.broadcast %84 : f32 to vector<2x1x5xf32>
    %715 = arith.mulf %714, %702 : vector<2x1x5xf32>
    %716 = vector.broadcast %85 : f32 to vector<2x1x5xf32>
    %717 = arith.mulf %716, %703 : vector<2x1x5xf32>
    %718 = arith.addf %713, %715 : vector<2x1x5xf32>
    %719 = arith.addf %718, %717 : vector<2x1x5xf32>
    %720 = vector.extract_strided_slice %342 {offsets = [0, 0, 0], sizes = [2, 1, 5], strides = [1, 1, 1]} : vector<2x8x5xf32> to vector<2x1x5xf32>
    %721 = tpu.concatenate %343, %720, %343 in 2 : vector<2x1x1xf32>, vector<2x1x5xf32>, vector<2x1x1xf32> -> vector<2x1x7xf32>
    %722 = vector.extract_strided_slice %721 {offsets = [0, 0, 0], sizes = [2, 1, 5], strides = [1, 1, 1]} : vector<2x1x7xf32> to vector<2x1x5xf32>
    %723 = vector.extract_strided_slice %721 {offsets = [0, 0, 1], sizes = [2, 1, 5], strides = [1, 1, 1]} : vector<2x1x7xf32> to vector<2x1x5xf32>
    %724 = vector.extract_strided_slice %721 {offsets = [0, 0, 2], sizes = [2, 1, 5], strides = [1, 1, 1]} : vector<2x1x7xf32> to vector<2x1x5xf32>
    %725 = vector.broadcast %89 : f32 to vector<2x1x5xf32>
    %726 = arith.mulf %725, %722 : vector<2x1x5xf32>
    %727 = vector.broadcast %90 : f32 to vector<2x1x5xf32>
    %728 = arith.mulf %727, %723 : vector<2x1x5xf32>
    %729 = vector.broadcast %91 : f32 to vector<2x1x5xf32>
    %730 = arith.mulf %729, %724 : vector<2x1x5xf32>
    %731 = arith.addf %726, %728 : vector<2x1x5xf32>
    %732 = arith.addf %731, %730 : vector<2x1x5xf32>
    %733 = vector.broadcast %86 : f32 to vector<2x1x5xf32>
    %734 = arith.mulf %733, %722 : vector<2x1x5xf32>
    %735 = vector.broadcast %87 : f32 to vector<2x1x5xf32>
    %736 = arith.mulf %735, %723 : vector<2x1x5xf32>
    %737 = vector.broadcast %88 : f32 to vector<2x1x5xf32>
    %738 = arith.mulf %737, %724 : vector<2x1x5xf32>
    %739 = arith.addf %734, %736 : vector<2x1x5xf32>
    %740 = arith.addf %739, %738 : vector<2x1x5xf32>
    %741 = vector.broadcast %83 : f32 to vector<2x1x5xf32>
    %742 = arith.mulf %741, %722 : vector<2x1x5xf32>
    %743 = vector.broadcast %84 : f32 to vector<2x1x5xf32>
    %744 = arith.mulf %743, %723 : vector<2x1x5xf32>
    %745 = vector.broadcast %85 : f32 to vector<2x1x5xf32>
    %746 = arith.mulf %745, %724 : vector<2x1x5xf32>
    %747 = arith.addf %742, %744 : vector<2x1x5xf32>
    %748 = arith.addf %747, %746 : vector<2x1x5xf32>
    %749 = vector.extract_strided_slice %342 {offsets = [0, 1, 0], sizes = [2, 1, 5], strides = [1, 1, 1]} : vector<2x8x5xf32> to vector<2x1x5xf32>
    %750 = tpu.concatenate %343, %749, %343 in 2 : vector<2x1x1xf32>, vector<2x1x5xf32>, vector<2x1x1xf32> -> vector<2x1x7xf32>
    %751 = vector.extract_strided_slice %750 {offsets = [0, 0, 0], sizes = [2, 1, 5], strides = [1, 1, 1]} : vector<2x1x7xf32> to vector<2x1x5xf32>
    %752 = vector.extract_strided_slice %750 {offsets = [0, 0, 1], sizes = [2, 1, 5], strides = [1, 1, 1]} : vector<2x1x7xf32> to vector<2x1x5xf32>
    %753 = vector.extract_strided_slice %750 {offsets = [0, 0, 2], sizes = [2, 1, 5], strides = [1, 1, 1]} : vector<2x1x7xf32> to vector<2x1x5xf32>
    %754 = vector.broadcast %89 : f32 to vector<2x1x5xf32>
    %755 = arith.mulf %754, %751 : vector<2x1x5xf32>
    %756 = vector.broadcast %90 : f32 to vector<2x1x5xf32>
    %757 = arith.mulf %756, %752 : vector<2x1x5xf32>
    %758 = vector.broadcast %91 : f32 to vector<2x1x5xf32>
    %759 = arith.mulf %758, %753 : vector<2x1x5xf32>
    %760 = arith.addf %755, %757 : vector<2x1x5xf32>
    %761 = arith.addf %760, %759 : vector<2x1x5xf32>
    %762 = vector.broadcast %86 : f32 to vector<2x1x5xf32>
    %763 = arith.mulf %762, %751 : vector<2x1x5xf32>
    %764 = vector.broadcast %87 : f32 to vector<2x1x5xf32>
    %765 = arith.mulf %764, %752 : vector<2x1x5xf32>
    %766 = vector.broadcast %88 : f32 to vector<2x1x5xf32>
    %767 = arith.mulf %766, %753 : vector<2x1x5xf32>
    %768 = arith.addf %763, %765 : vector<2x1x5xf32>
    %769 = arith.addf %768, %767 : vector<2x1x5xf32>
    %770 = vector.extract_strided_slice %342 {offsets = [0, 2, 0], sizes = [2, 1, 5], strides = [1, 1, 1]} : vector<2x8x5xf32> to vector<2x1x5xf32>
    %771 = tpu.concatenate %343, %770, %343 in 2 : vector<2x1x1xf32>, vector<2x1x5xf32>, vector<2x1x1xf32> -> vector<2x1x7xf32>
    %772 = vector.extract_strided_slice %771 {offsets = [0, 0, 0], sizes = [2, 1, 5], strides = [1, 1, 1]} : vector<2x1x7xf32> to vector<2x1x5xf32>
    %773 = vector.extract_strided_slice %771 {offsets = [0, 0, 1], sizes = [2, 1, 5], strides = [1, 1, 1]} : vector<2x1x7xf32> to vector<2x1x5xf32>
    %774 = vector.extract_strided_slice %771 {offsets = [0, 0, 2], sizes = [2, 1, 5], strides = [1, 1, 1]} : vector<2x1x7xf32> to vector<2x1x5xf32>
    %775 = vector.broadcast %95 : f32 to vector<2x1x5xf32>
    %776 = arith.mulf %775, %772 : vector<2x1x5xf32>
    %777 = vector.broadcast %96 : f32 to vector<2x1x5xf32>
    %778 = arith.mulf %777, %773 : vector<2x1x5xf32>
    %779 = vector.broadcast %97 : f32 to vector<2x1x5xf32>
    %780 = arith.mulf %779, %774 : vector<2x1x5xf32>
    %781 = arith.addf %776, %778 : vector<2x1x5xf32>
    %782 = arith.addf %781, %780 : vector<2x1x5xf32>
    %783 = vector.broadcast %92 : f32 to vector<2x1x5xf32>
    %784 = arith.mulf %783, %772 : vector<2x1x5xf32>
    %785 = vector.broadcast %93 : f32 to vector<2x1x5xf32>
    %786 = arith.mulf %785, %773 : vector<2x1x5xf32>
    %787 = vector.broadcast %94 : f32 to vector<2x1x5xf32>
    %788 = arith.mulf %787, %774 : vector<2x1x5xf32>
    %789 = arith.addf %784, %786 : vector<2x1x5xf32>
    %790 = arith.addf %789, %788 : vector<2x1x5xf32>
    %791 = vector.extract_strided_slice %342 {offsets = [0, 3, 0], sizes = [2, 1, 5], strides = [1, 1, 1]} : vector<2x8x5xf32> to vector<2x1x5xf32>
    %792 = tpu.concatenate %343, %791, %343 in 2 : vector<2x1x1xf32>, vector<2x1x5xf32>, vector<2x1x1xf32> -> vector<2x1x7xf32>
    %793 = vector.extract_strided_slice %792 {offsets = [0, 0, 0], sizes = [2, 1, 5], strides = [1, 1, 1]} : vector<2x1x7xf32> to vector<2x1x5xf32>
    %794 = vector.extract_strided_slice %792 {offsets = [0, 0, 1], sizes = [2, 1, 5], strides = [1, 1, 1]} : vector<2x1x7xf32> to vector<2x1x5xf32>
    %795 = vector.extract_strided_slice %792 {offsets = [0, 0, 2], sizes = [2, 1, 5], strides = [1, 1, 1]} : vector<2x1x7xf32> to vector<2x1x5xf32>
    %796 = vector.broadcast %98 : f32 to vector<2x1x5xf32>
    %797 = arith.mulf %796, %793 : vector<2x1x5xf32>
    %798 = vector.broadcast %99 : f32 to vector<2x1x5xf32>
    %799 = arith.mulf %798, %794 : vector<2x1x5xf32>
    %800 = vector.broadcast %100 : f32 to vector<2x1x5xf32>
    %801 = arith.mulf %800, %795 : vector<2x1x5xf32>
    %802 = arith.addf %797, %799 : vector<2x1x5xf32>
    %803 = arith.addf %802, %801 : vector<2x1x5xf32>
    %804 = vector.broadcast %95 : f32 to vector<2x1x5xf32>
    %805 = arith.mulf %804, %793 : vector<2x1x5xf32>
    %806 = vector.broadcast %96 : f32 to vector<2x1x5xf32>
    %807 = arith.mulf %806, %794 : vector<2x1x5xf32>
    %808 = vector.broadcast %97 : f32 to vector<2x1x5xf32>
    %809 = arith.mulf %808, %795 : vector<2x1x5xf32>
    %810 = arith.addf %805, %807 : vector<2x1x5xf32>
    %811 = arith.addf %810, %809 : vector<2x1x5xf32>
    %812 = vector.broadcast %92 : f32 to vector<2x1x5xf32>
    %813 = arith.mulf %812, %793 : vector<2x1x5xf32>
    %814 = vector.broadcast %93 : f32 to vector<2x1x5xf32>
    %815 = arith.mulf %814, %794 : vector<2x1x5xf32>
    %816 = vector.broadcast %94 : f32 to vector<2x1x5xf32>
    %817 = arith.mulf %816, %795 : vector<2x1x5xf32>
    %818 = arith.addf %813, %815 : vector<2x1x5xf32>
    %819 = arith.addf %818, %817 : vector<2x1x5xf32>
    %820 = vector.extract_strided_slice %342 {offsets = [0, 4, 0], sizes = [2, 1, 5], strides = [1, 1, 1]} : vector<2x8x5xf32> to vector<2x1x5xf32>
    %821 = tpu.concatenate %343, %820, %343 in 2 : vector<2x1x1xf32>, vector<2x1x5xf32>, vector<2x1x1xf32> -> vector<2x1x7xf32>
    %822 = vector.extract_strided_slice %821 {offsets = [0, 0, 0], sizes = [2, 1, 5], strides = [1, 1, 1]} : vector<2x1x7xf32> to vector<2x1x5xf32>
    %823 = vector.extract_strided_slice %821 {offsets = [0, 0, 1], sizes = [2, 1, 5], strides = [1, 1, 1]} : vector<2x1x7xf32> to vector<2x1x5xf32>
    %824 = vector.extract_strided_slice %821 {offsets = [0, 0, 2], sizes = [2, 1, 5], strides = [1, 1, 1]} : vector<2x1x7xf32> to vector<2x1x5xf32>
    %825 = vector.broadcast %98 : f32 to vector<2x1x5xf32>
    %826 = arith.mulf %825, %822 : vector<2x1x5xf32>
    %827 = vector.broadcast %99 : f32 to vector<2x1x5xf32>
    %828 = arith.mulf %827, %823 : vector<2x1x5xf32>
    %829 = vector.broadcast %100 : f32 to vector<2x1x5xf32>
    %830 = arith.mulf %829, %824 : vector<2x1x5xf32>
    %831 = arith.addf %826, %828 : vector<2x1x5xf32>
    %832 = arith.addf %831, %830 : vector<2x1x5xf32>
    %833 = vector.broadcast %95 : f32 to vector<2x1x5xf32>
    %834 = arith.mulf %833, %822 : vector<2x1x5xf32>
    %835 = vector.broadcast %96 : f32 to vector<2x1x5xf32>
    %836 = arith.mulf %835, %823 : vector<2x1x5xf32>
    %837 = vector.broadcast %97 : f32 to vector<2x1x5xf32>
    %838 = arith.mulf %837, %824 : vector<2x1x5xf32>
    %839 = arith.addf %834, %836 : vector<2x1x5xf32>
    %840 = arith.addf %839, %838 : vector<2x1x5xf32>
    %841 = vector.extract_strided_slice %342 {offsets = [0, 5, 0], sizes = [2, 1, 5], strides = [1, 1, 1]} : vector<2x8x5xf32> to vector<2x1x5xf32>
    %842 = tpu.concatenate %343, %841, %343 in 2 : vector<2x1x1xf32>, vector<2x1x5xf32>, vector<2x1x1xf32> -> vector<2x1x7xf32>
    %843 = vector.extract_strided_slice %842 {offsets = [0, 0, 0], sizes = [2, 1, 5], strides = [1, 1, 1]} : vector<2x1x7xf32> to vector<2x1x5xf32>
    %844 = vector.extract_strided_slice %842 {offsets = [0, 0, 1], sizes = [2, 1, 5], strides = [1, 1, 1]} : vector<2x1x7xf32> to vector<2x1x5xf32>
    %845 = vector.extract_strided_slice %842 {offsets = [0, 0, 2], sizes = [2, 1, 5], strides = [1, 1, 1]} : vector<2x1x7xf32> to vector<2x1x5xf32>
    %846 = vector.broadcast %104 : f32 to vector<2x1x5xf32>
    %847 = arith.mulf %846, %843 : vector<2x1x5xf32>
    %848 = vector.broadcast %105 : f32 to vector<2x1x5xf32>
    %849 = arith.mulf %848, %844 : vector<2x1x5xf32>
    %850 = vector.broadcast %106 : f32 to vector<2x1x5xf32>
    %851 = arith.mulf %850, %845 : vector<2x1x5xf32>
    %852 = arith.addf %847, %849 : vector<2x1x5xf32>
    %853 = arith.addf %852, %851 : vector<2x1x5xf32>
    %854 = vector.broadcast %101 : f32 to vector<2x1x5xf32>
    %855 = arith.mulf %854, %843 : vector<2x1x5xf32>
    %856 = vector.broadcast %102 : f32 to vector<2x1x5xf32>
    %857 = arith.mulf %856, %844 : vector<2x1x5xf32>
    %858 = vector.broadcast %103 : f32 to vector<2x1x5xf32>
    %859 = arith.mulf %858, %845 : vector<2x1x5xf32>
    %860 = arith.addf %855, %857 : vector<2x1x5xf32>
    %861 = arith.addf %860, %859 : vector<2x1x5xf32>
    %862 = vector.extract_strided_slice %342 {offsets = [0, 6, 0], sizes = [2, 1, 5], strides = [1, 1, 1]} : vector<2x8x5xf32> to vector<2x1x5xf32>
    %863 = tpu.concatenate %343, %862, %343 in 2 : vector<2x1x1xf32>, vector<2x1x5xf32>, vector<2x1x1xf32> -> vector<2x1x7xf32>
    %864 = vector.extract_strided_slice %863 {offsets = [0, 0, 0], sizes = [2, 1, 5], strides = [1, 1, 1]} : vector<2x1x7xf32> to vector<2x1x5xf32>
    %865 = vector.extract_strided_slice %863 {offsets = [0, 0, 1], sizes = [2, 1, 5], strides = [1, 1, 1]} : vector<2x1x7xf32> to vector<2x1x5xf32>
    %866 = vector.extract_strided_slice %863 {offsets = [0, 0, 2], sizes = [2, 1, 5], strides = [1, 1, 1]} : vector<2x1x7xf32> to vector<2x1x5xf32>
    %867 = vector.broadcast %107 : f32 to vector<2x1x5xf32>
    %868 = arith.mulf %867, %864 : vector<2x1x5xf32>
    %869 = vector.broadcast %108 : f32 to vector<2x1x5xf32>
    %870 = arith.mulf %869, %865 : vector<2x1x5xf32>
    %871 = vector.broadcast %109 : f32 to vector<2x1x5xf32>
    %872 = arith.mulf %871, %866 : vector<2x1x5xf32>
    %873 = arith.addf %868, %870 : vector<2x1x5xf32>
    %874 = arith.addf %873, %872 : vector<2x1x5xf32>
    %875 = vector.broadcast %104 : f32 to vector<2x1x5xf32>
    %876 = arith.mulf %875, %864 : vector<2x1x5xf32>
    %877 = vector.broadcast %105 : f32 to vector<2x1x5xf32>
    %878 = arith.mulf %877, %865 : vector<2x1x5xf32>
    %879 = vector.broadcast %106 : f32 to vector<2x1x5xf32>
    %880 = arith.mulf %879, %866 : vector<2x1x5xf32>
    %881 = arith.addf %876, %878 : vector<2x1x5xf32>
    %882 = arith.addf %881, %880 : vector<2x1x5xf32>
    %883 = vector.broadcast %101 : f32 to vector<2x1x5xf32>
    %884 = arith.mulf %883, %864 : vector<2x1x5xf32>
    %885 = vector.broadcast %102 : f32 to vector<2x1x5xf32>
    %886 = arith.mulf %885, %865 : vector<2x1x5xf32>
    %887 = vector.broadcast %103 : f32 to vector<2x1x5xf32>
    %888 = arith.mulf %887, %866 : vector<2x1x5xf32>
    %889 = arith.addf %884, %886 : vector<2x1x5xf32>
    %890 = arith.addf %889, %888 : vector<2x1x5xf32>
    %891 = vector.extract_strided_slice %342 {offsets = [0, 7, 0], sizes = [2, 1, 5], strides = [1, 1, 1]} : vector<2x8x5xf32> to vector<2x1x5xf32>
    %892 = tpu.concatenate %343, %891, %343 in 2 : vector<2x1x1xf32>, vector<2x1x5xf32>, vector<2x1x1xf32> -> vector<2x1x7xf32>
    %893 = vector.extract_strided_slice %892 {offsets = [0, 0, 0], sizes = [2, 1, 5], strides = [1, 1, 1]} : vector<2x1x7xf32> to vector<2x1x5xf32>
    %894 = vector.extract_strided_slice %892 {offsets = [0, 0, 1], sizes = [2, 1, 5], strides = [1, 1, 1]} : vector<2x1x7xf32> to vector<2x1x5xf32>
    %895 = vector.extract_strided_slice %892 {offsets = [0, 0, 2], sizes = [2, 1, 5], strides = [1, 1, 1]} : vector<2x1x7xf32> to vector<2x1x5xf32>
    %896 = vector.broadcast %107 : f32 to vector<2x1x5xf32>
    %897 = arith.mulf %896, %893 : vector<2x1x5xf32>
    %898 = vector.broadcast %108 : f32 to vector<2x1x5xf32>
    %899 = arith.mulf %898, %894 : vector<2x1x5xf32>
    %900 = vector.broadcast %109 : f32 to vector<2x1x5xf32>
    %901 = arith.mulf %900, %895 : vector<2x1x5xf32>
    %902 = arith.addf %897, %899 : vector<2x1x5xf32>
    %903 = arith.addf %902, %901 : vector<2x1x5xf32>
    %904 = vector.broadcast %104 : f32 to vector<2x1x5xf32>
    %905 = arith.mulf %904, %893 : vector<2x1x5xf32>
    %906 = vector.broadcast %105 : f32 to vector<2x1x5xf32>
    %907 = arith.mulf %906, %894 : vector<2x1x5xf32>
    %908 = vector.broadcast %106 : f32 to vector<2x1x5xf32>
    %909 = arith.mulf %908, %895 : vector<2x1x5xf32>
    %910 = arith.addf %905, %907 : vector<2x1x5xf32>
    %911 = arith.addf %910, %909 : vector<2x1x5xf32>
    %c0_64 = arith.constant 0 : index
    %c0_65 = arith.constant 0 : index
    %912 = vector.load %arg14[%c0_64, %c0_65] : memref<3x5xf32, #tpu.memory_space<vmem>>, vector<3x5xf32>
    %913 = arith.addf %356, %377 : vector<2x1x5xf32>
    %914 = arith.addf %427, %448 : vector<2x1x5xf32>
    %915 = arith.addf %498, %519 : vector<2x1x5xf32>
    %916 = arith.addf %569, %590 : vector<2x1x5xf32>
    %917 = arith.addf %640, %661 : vector<2x1x5xf32>
    %918 = arith.addf %711, %732 : vector<2x1x5xf32>
    %919 = arith.addf %782, %803 : vector<2x1x5xf32>
    %920 = arith.addf %853, %874 : vector<2x1x5xf32>
    %921 = arith.addf %913, %914 : vector<2x1x5xf32>
    %922 = arith.addf %915, %916 : vector<2x1x5xf32>
    %923 = arith.addf %917, %918 : vector<2x1x5xf32>
    %924 = arith.addf %919, %920 : vector<2x1x5xf32>
    %925 = arith.addf %921, %922 : vector<2x1x5xf32>
    %926 = arith.addf %923, %924 : vector<2x1x5xf32>
    %927 = arith.addf %925, %926 : vector<2x1x5xf32>
    %c0_66 = arith.constant 0 : index
    %928 = memref.load %arg12[%c0_66] : memref<1xf32, #tpu.memory_space<smem>>
    %929 = vector.broadcast %928 : f32 to vector<2x1x5xf32>
    %930 = arith.addf %927, %929 : vector<2x1x5xf32>
    %cst_67 = arith.constant 0.000000e+00 : f32
    %931 = vector.broadcast %cst_67 : f32 to vector<2x1x5xf32>
    %932 = arith.cmpf oge, %930, %931 : vector<2x1x5xf32>
    %933 = vector.broadcast %10 : f32 to vector<2x1x5xf32>
    %934 = arith.mulf %933, %930 : vector<2x1x5xf32>
    %935 = arith.select %932, %930, %934 : vector<2x1x5xi1>, vector<2x1x5xf32>
    %936 = vector.extract_strided_slice %912 {offsets = [0, 0], sizes = [1, 5], strides = [1, 1]} : vector<3x5xf32> to vector<1x5xf32>
    %937 = vector.shape_cast %936 : vector<1x5xf32> to vector<1x1x5xf32>
    %938 = vector.broadcast %937 : vector<1x1x5xf32> to vector<2x1x5xf32>
    %939 = arith.mulf %938, %935 : vector<2x1x5xf32>
    %940 = arith.addf %364, %385 : vector<2x1x5xf32>
    %941 = arith.addf %406, %435 : vector<2x1x5xf32>
    %942 = arith.addf %456, %477 : vector<2x1x5xf32>
    %943 = arith.addf %506, %527 : vector<2x1x5xf32>
    %944 = arith.addf %548, %577 : vector<2x1x5xf32>
    %945 = arith.addf %598, %619 : vector<2x1x5xf32>
    %946 = arith.addf %648, %669 : vector<2x1x5xf32>
    %947 = arith.addf %690, %719 : vector<2x1x5xf32>
    %948 = arith.addf %740, %761 : vector<2x1x5xf32>
    %949 = arith.addf %790, %811 : vector<2x1x5xf32>
    %950 = arith.addf %832, %861 : vector<2x1x5xf32>
    %951 = arith.addf %882, %903 : vector<2x1x5xf32>
    %952 = arith.addf %940, %941 : vector<2x1x5xf32>
    %953 = arith.addf %942, %943 : vector<2x1x5xf32>
    %954 = arith.addf %944, %945 : vector<2x1x5xf32>
    %955 = arith.addf %946, %947 : vector<2x1x5xf32>
    %956 = arith.addf %948, %949 : vector<2x1x5xf32>
    %957 = arith.addf %950, %951 : vector<2x1x5xf32>
    %958 = arith.addf %952, %953 : vector<2x1x5xf32>
    %959 = arith.addf %954, %955 : vector<2x1x5xf32>
    %960 = arith.addf %956, %957 : vector<2x1x5xf32>
    %961 = arith.addf %958, %959 : vector<2x1x5xf32>
    %962 = arith.addf %961, %960 : vector<2x1x5xf32>
    %c0_68 = arith.constant 0 : index
    %963 = memref.load %arg12[%c0_68] : memref<1xf32, #tpu.memory_space<smem>>
    %964 = vector.broadcast %963 : f32 to vector<2x1x5xf32>
    %965 = arith.addf %962, %964 : vector<2x1x5xf32>
    %cst_69 = arith.constant 0.000000e+00 : f32
    %966 = vector.broadcast %cst_69 : f32 to vector<2x1x5xf32>
    %967 = arith.cmpf oge, %965, %966 : vector<2x1x5xf32>
    %968 = vector.broadcast %10 : f32 to vector<2x1x5xf32>
    %969 = arith.mulf %968, %965 : vector<2x1x5xf32>
    %970 = arith.select %967, %965, %969 : vector<2x1x5xi1>, vector<2x1x5xf32>
    %971 = vector.extract_strided_slice %912 {offsets = [1, 0], sizes = [1, 5], strides = [1, 1]} : vector<3x5xf32> to vector<1x5xf32>
    %972 = vector.shape_cast %971 : vector<1x5xf32> to vector<1x1x5xf32>
    %973 = vector.broadcast %972 : vector<1x1x5xf32> to vector<2x1x5xf32>
    %974 = arith.mulf %973, %970 : vector<2x1x5xf32>
    %975 = arith.addf %939, %974 : vector<2x1x5xf32>
    %976 = arith.addf %393, %414 : vector<2x1x5xf32>
    %977 = arith.addf %464, %485 : vector<2x1x5xf32>
    %978 = arith.addf %535, %556 : vector<2x1x5xf32>
    %979 = arith.addf %606, %627 : vector<2x1x5xf32>
    %980 = arith.addf %677, %698 : vector<2x1x5xf32>
    %981 = arith.addf %748, %769 : vector<2x1x5xf32>
    %982 = arith.addf %819, %840 : vector<2x1x5xf32>
    %983 = arith.addf %890, %911 : vector<2x1x5xf32>
    %984 = arith.addf %976, %977 : vector<2x1x5xf32>
    %985 = arith.addf %978, %979 : vector<2x1x5xf32>
    %986 = arith.addf %980, %981 : vector<2x1x5xf32>
    %987 = arith.addf %982, %983 : vector<2x1x5xf32>
    %988 = arith.addf %984, %985 : vector<2x1x5xf32>
    %989 = arith.addf %986, %987 : vector<2x1x5xf32>
    %990 = arith.addf %988, %989 : vector<2x1x5xf32>
    %c0_70 = arith.constant 0 : index
    %991 = memref.load %arg12[%c0_70] : memref<1xf32, #tpu.memory_space<smem>>
    %992 = vector.broadcast %991 : f32 to vector<2x1x5xf32>
    %993 = arith.addf %990, %992 : vector<2x1x5xf32>
    %cst_71 = arith.constant 0.000000e+00 : f32
    %994 = vector.broadcast %cst_71 : f32 to vector<2x1x5xf32>
    %995 = arith.cmpf oge, %993, %994 : vector<2x1x5xf32>
    %996 = vector.broadcast %10 : f32 to vector<2x1x5xf32>
    %997 = arith.mulf %996, %993 : vector<2x1x5xf32>
    %998 = arith.select %995, %993, %997 : vector<2x1x5xi1>, vector<2x1x5xf32>
    %999 = vector.extract_strided_slice %912 {offsets = [2, 0], sizes = [1, 5], strides = [1, 1]} : vector<3x5xf32> to vector<1x5xf32>
    %1000 = vector.shape_cast %999 : vector<1x5xf32> to vector<1x1x5xf32>
    %1001 = vector.broadcast %1000 : vector<1x1x5xf32> to vector<2x1x5xf32>
    %1002 = arith.mulf %1001, %998 : vector<2x1x5xf32>
    %1003 = arith.addf %975, %1002 : vector<2x1x5xf32>
    %cst_72 = arith.constant dense<0.000000e+00> : vector<2x1xf32>
    %1004 = vector.multi_reduction <add>, %1003, %cst_72 [2] : vector<2x1x5xf32> to vector<2x1xf32>
    %1005 = vector.shape_cast %1004 : vector<2x1xf32> to vector<2x1x1xf32>
    %c0_73 = arith.constant 0 : index
    %1006 = memref.load %arg15[%c0_73] : memref<1xf32, #tpu.memory_space<smem>>
    %1007 = vector.broadcast %1006 : f32 to vector<2x1x1xf32>
    %1008 = arith.addf %1005, %1007 : vector<2x1x1xf32>
    %c0_74 = arith.constant 0 : index
    %c0_75 = arith.constant 0 : index
    %c0_76 = arith.constant 0 : index
    %1009 = vector.load %arg16[%c0_74, %c0_75, %c0_76] : memref<2x1x1xf32, #tpu.memory_space<vmem>>, vector<2x1x1xf32>
    tpu.vector_store %arg16[%c0_74, %c0_75, %c0_76], %1008 {strides = array<i32>} : memref<2x1x1xf32, #tpu.memory_space<vmem>>, vector<2x1x1xf32>,
    return
  }
}

</mosaic_0001>

<llo_original>
// kernel: tpu_custom_call.1
$region0: #{tpu_custom_call.1}
  #allocation0 [shape = 'u32[]', space=smem, size = 0x4, offset = 0x4, fixed_abs, tag = 'smem constant byte address 0x4 - core index']
  #allocation1 [shape = 'u32[144,128]{1,0:T(1,128)}', space=vmem, size = 0x12000, scoped, tag = 'internal scratch']
  #allocation2 [shape = 'f32[1]{0:T(128)S(6)}', space=smem, size = 0x200, scoped, tag = 'scoped memory for tpu_custom_call.1']
  #allocation3 [shape = 'f32[1]{0:T(128)S(6)}', space=smem, size = 0x200, scoped, tag = 'scoped memory for tpu_custom_call.1']
  #allocation4 [shape = 'f32[1]{0:T(128)S(6)}', space=smem, size = 0x200, scoped, tag = 'scoped memory for tpu_custom_call.1']
  #allocation5 [shape = 'f32[1]{0:T(128)S(6)}', space=smem, size = 0x200, scoped, tag = 'scoped memory for tpu_custom_call.1']
  #allocation6 [shape = 'f32[1]{0:T(128)S(6)}', space=smem, size = 0x200, scoped, tag = 'scoped memory for tpu_custom_call.1']
  %s0 = inlined_call_operand.vmem [shape: f32[2,3,8,5], index: 0, kind: input, shape index: {}]
  %s1 = inlined_call_operand.vmem [shape: f32[5,8,5], index: 1, kind: input, shape index: {}]
  %s2 = inlined_call_operand.vmem [shape: f32[5,8,5], index: 2, kind: input, shape index: {}]
  %s3 = inlined_call_operand.vmem [shape: f32[3], index: 3, kind: input, shape index: {}]
  %s4 = inlined_call_operand.vmem [shape: f32[3], index: 4, kind: input, shape index: {}]
  %s5 = inlined_call_operand.<no memory space> [shape: f32[1], index: 5, kind: input, shape index: {}]
  %s6 = inlined_call_operand.vmem [shape: f32[27], index: 6, kind: input, shape index: {}]
  %s7 = inlined_call_operand.vmem [shape: f32[3], index: 7, kind: input, shape index: {}]
  %s8 = inlined_call_operand.vmem [shape: f32[3], index: 8, kind: input, shape index: {}]
  %s9 = inlined_call_operand.vmem [shape: f32[3], index: 9, kind: input, shape index: {}]
  %s10 = inlined_call_operand.<no memory space> [shape: f32[1], index: 10, kind: input, shape index: {}]
  %s11 = inlined_call_operand.vmem [shape: f32[72], index: 11, kind: input, shape index: {}]
  %s12 = inlined_call_operand.<no memory space> [shape: f32[1], index: 12, kind: input, shape index: {}]
  %s13 = inlined_call_operand.<no memory space> [shape: f32[1], index: 13, kind: input, shape index: {}]
  %s14 = inlined_call_operand.vmem [shape: f32[3,5], index: 14, kind: input, shape index: {}]
  %s15 = inlined_call_operand.<no memory space> [shape: f32[1], index: 15, kind: input, shape index: {}]
  %s16 = inlined_call_operand.vmem [shape: f32[2,1,1], index: 16, kind: output, shape index: {}]
  %s17 = sld [smem:[#allocation0]]
  $region102: #{tpu_custom_call.1} parent=0
    _
  %s19 = ssub.s32 1, %s17
  %s20 = scalar_select 0, %s19, %s17
  %21 = sst [smem:[#allocation2]] %s5
  %22 = sst [smem:[#allocation3]] %s10
  %23 = sst [smem:[#allocation4]] %s12
  %24 = sst [smem:[#allocation5]] %s13
  %25 = sst [smem:[#allocation6]] %s15
  $region1: #{tpu_custom_call.1} parent=0
    #allocation7 [shape = 'u8[512]{0}', space=smem, size = 0x200, scoped, tag = 'input window, operand 3, single buffered']
    #allocation8 [shape = 's32[1]{0}', space=sflag, size = 0x4, scoped, tag = 'scoped memory for tpu_custom_call.1']
    #allocation9 [shape = 'u8[512]{0}', space=smem, size = 0x200, scoped, tag = 'input window, operand 4, single buffered']
    #allocation10 [shape = 's32[1]{0}', space=sflag, size = 0x4, scoped, tag = 'scoped memory for tpu_custom_call.1']
    #allocation11 [shape = 'u8[512]{0}', space=smem, size = 0x200, scoped, tag = 'input window, operand 6, single buffered']
    #allocation12 [shape = 'u8[512]{0}', space=smem, size = 0x200, scoped, tag = 'input window, operand 7, single buffered']
    #allocation13 [shape = 's32[1]{0}', space=sflag, size = 0x4, scoped, tag = 'scoped memory for tpu_custom_call.1']
    #allocation14 [shape = 'u8[512]{0}', space=smem, size = 0x200, scoped, tag = 'input window, operand 8, single buffered']
    #allocation15 [shape = 'u8[512]{0}', space=smem, size = 0x200, scoped, tag = 'input window, operand 9, single buffered']
    #allocation16 [shape = 's32[1]{0}', space=sflag, size = 0x4, scoped, tag = 'scoped memory for tpu_custom_call.1']
    #allocation17 [shape = 'u8[512]{0}', space=smem, size = 0x200, scoped, tag = 'input window, operand 11, single buffered']
    %26 = vsyncpa [#allocation8], 0
    %27 = vsyncpa [#allocation10], 0
    %28 = vsyncpa [#allocation13], 0
    %29 = vsyncpa [#allocation16], 0
    // Predicated region
    $region2: #{tpu_custom_call.1} parent=1 // pred_check
      _
    $region3: #{tpu_custom_call.1} parent=1 // pred_check_branch
      %31 = sbr.rel (0) target = $region5
    $region4: #{tpu_custom_call.1} parent=1 // pred_region
      _
    $region5: #{tpu_custom_call.1} parent=1 // pred_fallthru
      _
    // Predicated region
    $region6: #{tpu_custom_call.1} parent=1 // pred_check
      _
    $region7: #{tpu_custom_call.1} parent=1 // pred_check_branch
      %33 = sbr.rel (0) target = $region9
    $region8: #{tpu_custom_call.1} parent=1 // pred_region
      _
    $region9: #{tpu_custom_call.1} parent=1 // pred_fallthru
      _
    // Predicated region
    $region10: #{tpu_custom_call.1} parent=1 // pred_check
      _
    $region11: #{tpu_custom_call.1} parent=1 // pred_check_branch
      %35 = sbr.rel (0) target = $region13
    $region12: #{tpu_custom_call.1} parent=1 // pred_region
      _
    $region13: #{tpu_custom_call.1} parent=1 // pred_fallthru
      _
    // Predicated region
    $region14: #{tpu_custom_call.1} parent=1 // pred_check
      _
    $region15: #{tpu_custom_call.1} parent=1 // pred_check_branch
      %37 = sbr.rel (0) target = $region17
    $region16: #{tpu_custom_call.1} parent=1 // pred_region
      %s39 = ssub.s32 16, 16
      %40 = vsyncadd [#allocation8], %s39
      %s42 = sshll.u32 %s3, 4
      %s43 = int_to_ptr.vmem [resolvable:$true] %s42
      %45 = dma.vmem_to_smem %s43, 16, [#allocation7], [#allocation8]
    $region17: #{tpu_custom_call.1} parent=1 // pred_fallthru
      _
    // Predicated region
    $region18: #{tpu_custom_call.1} parent=1 // pred_check
      _
    $region19: #{tpu_custom_call.1} parent=1 // pred_check_branch
      %47 = sbr.rel (0) target = $region21
    $region20: #{tpu_custom_call.1} parent=1 // pred_region
      %s49 = ssub.s32 16, 16
      %50 = vsyncadd [#allocation10], %s49
      %s52 = sshll.u32 %s4, 4
      %s53 = int_to_ptr.vmem [resolvable:$true] %s52
      %55 = dma.vmem_to_smem %s53, 16, [#allocation9], [#allocation10]
    $region21: #{tpu_custom_call.1} parent=1 // pred_fallthru
      _
    // Predicated region
    $region22: #{tpu_custom_call.1} parent=1 // pred_check
      _
    $region23: #{tpu_custom_call.1} parent=1 // pred_check_branch
      %57 = sbr.rel (0) target = $region25
    $region24: #{tpu_custom_call.1} parent=1 // pred_region
      _
    $region25: #{tpu_custom_call.1} parent=1 // pred_fallthru
      _
    // Predicated region
    $region26: #{tpu_custom_call.1} parent=1 // pred_check
      _
    $region27: #{tpu_custom_call.1} parent=1 // pred_check_branch
      %59 = sbr.rel (0) target = $region29
    $region28: #{tpu_custom_call.1} parent=1 // pred_region
      %s61 = ssub.s32 16, 16
      %62 = vsyncadd [#allocation10], %s61
      %s64 = sshll.u32 %s6, 4
      %s65 = int_to_ptr.vmem [resolvable:$true] %s64
      %67 = dma.vmem_to_smem %s65, 16, [#allocation11], [#allocation10]
    $region29: #{tpu_custom_call.1} parent=1 // pred_fallthru
      _
    // Predicated region
    $region30: #{tpu_custom_call.1} parent=1 // pred_check
      _
    $region31: #{tpu_custom_call.1} parent=1 // pred_check_branch
      %69 = sbr.rel (0) target = $region33
    $region32: #{tpu_custom_call.1} parent=1 // pred_region
      %s71 = ssub.s32 16, 16
      %72 = vsyncadd [#allocation13], %s71
      %s74 = sshll.u32 %s7, 4
      %s75 = int_to_ptr.vmem [resolvable:$true] %s74
      %77 = dma.vmem_to_smem %s75, 16, [#allocation12], [#allocation13]
    $region33: #{tpu_custom_call.1} parent=1 // pred_fallthru
      _
    // Predicated region
    $region34: #{tpu_custom_call.1} parent=1 // pred_check
      _
    $region35: #{tpu_custom_call.1} parent=1 // pred_check_branch
      %79 = sbr.rel (0) target = $region37
    $region36: #{tpu_custom_call.1} parent=1 // pred_region
      %s81 = ssub.s32 16, 16
      %82 = vsyncadd [#allocation13], %s81
      %s84 = sshll.u32 %s8, 4
      %s85 = int_to_ptr.vmem [resolvable:$true] %s84
      %87 = dma.vmem_to_smem %s85, 16, [#allocation14], [#allocation13]
    $region37: #{tpu_custom_call.1} parent=1 // pred_fallthru
      _
    // Predicated region
    $region38: #{tpu_custom_call.1} parent=1 // pred_check
      _
    $region39: #{tpu_custom_call.1} parent=1 // pred_check_branch
      %89 = sbr.rel (0) target = $region41
    $region40: #{tpu_custom_call.1} parent=1 // pred_region
      %s91 = ssub.s32 16, 16
      %92 = vsyncadd [#allocation16], %s91
      %s94 = sshll.u32 %s9, 4
      %s95 = int_to_ptr.vmem [resolvable:$true] %s94
      %97 = dma.vmem_to_smem %s95, 16, [#allocation15], [#allocation16]
    $region41: #{tpu_custom_call.1} parent=1 // pred_fallthru
      _
    // Predicated region
    $region42: #{tpu_custom_call.1} parent=1 // pred_check
      _
    $region43: #{tpu_custom_call.1} parent=1 // pred_check_branch
      %99 = sbr.rel (0) target = $region45
    $region44: #{tpu_custom_call.1} parent=1 // pred_region
      _
    $region45: #{tpu_custom_call.1} parent=1 // pred_fallthru
      _
    // Predicated region
    $region46: #{tpu_custom_call.1} parent=1 // pred_check
      _
    $region47: #{tpu_custom_call.1} parent=1 // pred_check_branch
      %101 = sbr.rel (0) target = $region49
    $region48: #{tpu_custom_call.1} parent=1 // pred_region
      %s103 = ssub.s32 16, 16
      %104 = vsyncadd [#allocation16], %s103
      %s106 = sshll.u32 %s11, 4
      %s107 = int_to_ptr.vmem [resolvable:$true] %s106
      %109 = dma.vmem_to_smem %s107, 16, [#allocation17], [#allocation16]
    $region49: #{tpu_custom_call.1} parent=1 // pred_fallthru
      _
    // Predicated region
    $region50: #{tpu_custom_call.1} parent=1 // pred_check
      _
    $region51: #{tpu_custom_call.1} parent=1 // pred_check_branch
      %111 = sbr.rel (0) target = $region53
    $region52: #{tpu_custom_call.1} parent=1 // pred_region
      _
    $region53: #{tpu_custom_call.1} parent=1 // pred_fallthru
      _
    // Predicated region
    $region54: #{tpu_custom_call.1} parent=1 // pred_check
      _
    $region55: #{tpu_custom_call.1} parent=1 // pred_check_branch
      %113 = sbr.rel (0) target = $region57
    $region56: #{tpu_custom_call.1} parent=1 // pred_region
      _
    $region57: #{tpu_custom_call.1} parent=1 // pred_fallthru
      _
    // Predicated region
    $region58: #{tpu_custom_call.1} parent=1 // pred_check
      _
    $region59: #{tpu_custom_call.1} parent=1 // pred_check_branch
      %115 = sbr.rel (0) target = $region61
    $region60: #{tpu_custom_call.1} parent=1 // pred_region
      _
    $region61: #{tpu_custom_call.1} parent=1 // pred_fallthru
      _
    // Predicated region
    $region62: #{tpu_custom_call.1} parent=1 // pred_check
      _
    $region63: #{tpu_custom_call.1} parent=1 // pred_check_branch
      %117 = sbr.rel (0) target = $region65
    $region64: #{tpu_custom_call.1} parent=1 // pred_region
      _
    $region65: #{tpu_custom_call.1} parent=1 // pred_fallthru
      _
    // Predicated region
    $region66: #{tpu_custom_call.1} parent=1 // pred_check
      _
    $region67: #{tpu_custom_call.1} parent=1 // pred_check_branch
      %119 = sbr.rel (0) target = $region69
    $region68: #{tpu_custom_call.1} parent=1 // pred_region
      %120 = dma.done [#allocation8], 16
    $region69: #{tpu_custom_call.1} parent=1 // pred_fallthru
      _
    // Predicated region
    $region70: #{tpu_custom_call.1} parent=1 // pred_check
      _
    $region71: #{tpu_custom_call.1} parent=1 // pred_check_branch
      %122 = sbr.rel (0) target = $region73
    $region72: #{tpu_custom_call.1} parent=1 // pred_region
      %123 = dma.done [#allocation10], 16
    $region73: #{tpu_custom_call.1} parent=1 // pred_fallthru
      _
    // Predicated region
    $region74: #{tpu_custom_call.1} parent=1 // pred_check
      _
    $region75: #{tpu_custom_call.1} parent=1 // pred_check_branch
      %125 = sbr.rel (0) target = $region77
    $region76: #{tpu_custom_call.1} parent=1 // pred_region
      %126 = dma.done [#allocation10], 16
    $region77: #{tpu_custom_call.1} parent=1 // pred_fallthru
      _
    // Predicated region
    $region78: #{tpu_custom_call.1} parent=1 // pred_check
      _
    $region79: #{tpu_custom_call.1} parent=1 // pred_check_branch
      %128 = sbr.rel (0) target = $region81
    $region80: #{tpu_custom_call.1} parent=1 // pred_region
      %129 = dma.done [#allocation13], 16
    $region81: #{tpu_custom_call.1} parent=1 // pred_fallthru
      _
    // Predicated region
    $region82: #{tpu_custom_call.1} parent=1 // pred_check
      _
    $region83: #{tpu_custom_call.1} parent=1 // pred_check_branch
      %131 = sbr.rel (0) target = $region85
    $region84: #{tpu_custom_call.1} parent=1 // pred_region
      %132 = dma.done [#allocation13], 16
    $region85: #{tpu_custom_call.1} parent=1 // pred_fallthru
      _
    // Predicated region
    $region86: #{tpu_custom_call.1} parent=1 // pred_check
      _
    $region87: #{tpu_custom_call.1} parent=1 // pred_check_branch
      %134 = sbr.rel (0) target = $region89
    $region88: #{tpu_custom_call.1} parent=1 // pred_region
      %135 = dma.done [#allocation16], 16
    $region89: #{tpu_custom_call.1} parent=1 // pred_fallthru
      _
    // Predicated region
    $region90: #{tpu_custom_call.1} parent=1 // pred_check
      _
    $region91: #{tpu_custom_call.1} parent=1 // pred_check_branch
      %137 = sbr.rel (0) target = $region93
    $region92: #{tpu_custom_call.1} parent=1 // pred_region
      %138 = dma.done [#allocation16], 16
    $region93: #{tpu_custom_call.1} parent=1 // pred_fallthru
      _
    %139 = sfence
    %v140 = vld [vmem:[%s0] sm:$0xff]
    %v141 = vld [vmem:[%s0 + $0x8] sm:$0xff]
    %v142 = vld [vmem:[%s0 + $0x10] sm:$0xff]
    %v143 = vld [vmem:[%s0 + $0x18] sm:$0xff]
    %v144 = vld [vmem:[%s0 + $0x20] sm:$0xff]
    %v145 = vld [vmem:[%s0 + $0x28] sm:$0xff]
    %v146 = vld [vmem:[%s1] sm:$0xff]
    %v147 = vld [vmem:[%s1 + $0x8] sm:$0xff]
    %v148 = vld [vmem:[%s1 + $0x10] sm:$0xff]
    %v149 = vld [vmem:[%s1 + $0x18] sm:$0xff]
    %v150 = vld [vmem:[%s1 + $0x20] sm:$0xff]
    %v151 = vmul.f32 %v146, 0.4
    %v152 = vmul.f32 %v147, 0.4
    %v153 = vmul.f32 %v148, 0.4
    %v154 = vmul.f32 %v149, 0.4
    %v155 = vmul.f32 %v150, 0.4
    %v156 = vld [vmem:[%s2] sm:$0xff]
    %v157 = vld [vmem:[%s2 + $0x8] sm:$0xff]
    %v158 = vld [vmem:[%s2 + $0x10] sm:$0xff]
    %v159 = vld [vmem:[%s2 + $0x18] sm:$0xff]
    %v160 = vld [vmem:[%s2 + $0x20] sm:$0xff]
    %v161 = vmul.f32 %v156, 0.6
    %v162 = vmul.f32 %v157, 0.6
    %v163 = vmul.f32 %v158, 0.6
    %v164 = vmul.f32 %v159, 0.6
    %v165 = vmul.f32 %v160, 0.6
    %v166 = vadd.f32 %v151, %v161
    %v167 = vadd.f32 %v152, %v162
    %v168 = vadd.f32 %v153, %v163
    %v169 = vadd.f32 %v154, %v164
    %v170 = vadd.f32 %v155, %v165
    %s171 = sld [smem:[#allocation2]]
    %s172 = sld [smem:[#allocation3]]
    %s173 = sld [smem:[#allocation5]]
    %s174 = sld [smem:[#allocation11]]
    %s175 = sld [smem:[#allocation11 + $0x1]]
    %s176 = sld [smem:[#allocation11 + $0x2]]
    %s177 = sld [smem:[#allocation11 + $0x3]]
    %s178 = sld [smem:[#allocation11 + $0x4]]
    %s179 = sld [smem:[#allocation11 + $0x5]]
    %s180 = sld [smem:[#allocation11 + $0x6]]
    %s181 = sld [smem:[#allocation11 + $0x7]]
    %s182 = sld [smem:[#allocation11 + $0x8]]
    %s183 = sld [smem:[#allocation11 + $0x9]]
    %s184 = sld [smem:[#allocation11 + $0xa]]
    %s185 = sld [smem:[#allocation11 + $0xb]]
    %s186 = sld [smem:[#allocation11 + $0xc]]
    %s187 = sld [smem:[#allocation11 + $0xd]]
    %s188 = sld [smem:[#allocation11 + $0xe]]
    %s189 = sld [smem:[#allocation11 + $0xf]]
    %s190 = sld [smem:[#allocation11 + $0x10]]
    %s191 = sld [smem:[#allocation11 + $0x11]]
    %s192 = sld [smem:[#allocation11 + $0x12]]
    %s193 = sld [smem:[#allocation11 + $0x13]]
    %s194 = sld [smem:[#allocation11 + $0x14]]
    %s195 = sld [smem:[#allocation11 + $0x15]]
    %s196 = sld [smem:[#allocation11 + $0x16]]
    %s197 = sld [smem:[#allocation11 + $0x17]]
    %s198 = sld [smem:[#allocation11 + $0x18]]
    %s199 = sld [smem:[#allocation11 + $0x19]]
    %s200 = sld [smem:[#allocation11 + $0x1a]]
    %s201 = sld [smem:[#allocation17]]
    %s202 = sld [smem:[#allocation17 + $0x1]]
    %s203 = sld [smem:[#allocation17 + $0x2]]
    %s204 = sld [smem:[#allocation17 + $0x3]]
    %s205 = sld [smem:[#allocation17 + $0x4]]
    %s206 = sld [smem:[#allocation17 + $0x5]]
    %s207 = sld [smem:[#allocation17 + $0x6]]
    %s208 = sld [smem:[#allocation17 + $0x7]]
    %s209 = sld [smem:[#allocation17 + $0x8]]
    %s210 = sld [smem:[#allocation17 + $0x9]]
    %s211 = sld [smem:[#allocation17 + $0xa]]
    %s212 = sld [smem:[#allocation17 + $0xb]]
    %s213 = sld [smem:[#allocation17 + $0xc]]
    %s214 = sld [smem:[#allocation17 + $0xd]]
    %s215 = sld [smem:[#allocation17 + $0xe]]
    %s216 = sld [smem:[#allocation17 + $0xf]]
    %s217 = sld [smem:[#allocation17 + $0x10]]
    %s218 = sld [smem:[#allocation17 + $0x11]]
    %s219 = sld [smem:[#allocation17 + $0x12]]
    %s220 = sld [smem:[#allocation17 + $0x13]]
    %s221 = sld [smem:[#allocation17 + $0x14]]
    %s222 = sld [smem:[#allocation17 + $0x15]]
    %s223 = sld [smem:[#allocation17 + $0x16]]
    %s224 = sld [smem:[#allocation17 + $0x17]]
    %s225 = sld [smem:[#allocation17 + $0x18]]
    %s226 = sld [smem:[#allocation17 + $0x19]]
    %s227 = sld [smem:[#allocation17 + $0x1a]]
    %s228 = sld [smem:[#allocation17 + $0x1b]]
    %s229 = sld [smem:[#allocation17 + $0x1c]]
    %s230 = sld [smem:[#allocation17 + $0x1d]]
    %s231 = sld [smem:[#allocation17 + $0x1e]]
    %s232 = sld [smem:[#allocation17 + $0x1f]]
    %s233 = sld [smem:[#allocation17 + $0x20]]
    %s234 = sld [smem:[#allocation17 + $0x21]]
    %s235 = sld [smem:[#allocation17 + $0x22]]
    %s236 = sld [smem:[#allocation17 + $0x23]]
    %s237 = sld [smem:[#allocation17 + $0x24]]
    %s238 = sld [smem:[#allocation17 + $0x25]]
    %s239 = sld [smem:[#allocation17 + $0x26]]
    %s240 = sld [smem:[#allocation17 + $0x27]]
    %s241 = sld [smem:[#allocation17 + $0x28]]
    %s242 = sld [smem:[#allocation17 + $0x29]]
    %s243 = sld [smem:[#allocation17 + $0x2a]]
    %s244 = sld [smem:[#allocation17 + $0x2b]]
    %s245 = sld [smem:[#allocation17 + $0x2c]]
    %s246 = sld [smem:[#allocation17 + $0x2d]]
    %s247 = sld [smem:[#allocation17 + $0x2e]]
    %s248 = sld [smem:[#allocation17 + $0x2f]]
    %s249 = sld [smem:[#allocation17 + $0x30]]
    %s250 = sld [smem:[#allocation17 + $0x31]]
    %s251 = sld [smem:[#allocation17 + $0x32]]
    %s252 = sld [smem:[#allocation17 + $0x33]]
    %s253 = sld [smem:[#allocation17 + $0x34]]
    %s254 = sld [smem:[#allocation17 + $0x35]]
    %s255 = sld [smem:[#allocation17 + $0x36]]
    %s256 = sld [smem:[#allocation17 + $0x37]]
    %s257 = sld [smem:[#allocation17 + $0x38]]
    %s258 = sld [smem:[#allocation17 + $0x39]]
    %s259 = sld [smem:[#allocation17 + $0x3a]]
    %s260 = sld [smem:[#allocation17 + $0x3b]]
    %s261 = sld [smem:[#allocation17 + $0x3c]]
    %s262 = sld [smem:[#allocation17 + $0x3d]]
    %s263 = sld [smem:[#allocation17 + $0x3e]]
    %s264 = sld [smem:[#allocation17 + $0x3f]]
    %s265 = sld [smem:[#allocation17 + $0x40]]
    %s266 = sld [smem:[#allocation17 + $0x41]]
    %s267 = sld [smem:[#allocation17 + $0x42]]
    %s268 = sld [smem:[#allocation17 + $0x43]]
    %s269 = sld [smem:[#allocation17 + $0x44]]
    %s270 = sld [smem:[#allocation17 + $0x45]]
    %s271 = sld [smem:[#allocation17 + $0x46]]
    %s272 = sld [smem:[#allocation17 + $0x47]]
    %274 = vset.pattern.permute.xlu0 0
    %275 = vperm.xlu0 %274, %v140
    %v276 = vpop.permute.xlu0 %275
    %279 = vset.pattern.permute.xlu0 0
    %280 = vperm.xlu0 %279, %v141
    %v281 = vpop.permute.xlu0 %280
    %284 = vset.pattern.permute.xlu0 0
    %285 = vperm.xlu0 %284, %v142
    %v286 = vpop.permute.xlu0 %285
    %289 = vset.pattern.permute.xlu0 0
    %290 = vperm.xlu0 %289, %v143
    %v291 = vpop.permute.xlu0 %290
    %294 = vset.pattern.permute.xlu0 0
    %295 = vperm.xlu0 %294, %v144
    %v296 = vpop.permute.xlu0 %295
    %299 = vset.pattern.permute.xlu0 0
    %300 = vperm.xlu0 %299, %v145
    %v301 = vpop.permute.xlu0 %300
    %v303 = vmul.f32 %v276, %v166
    %v304 = vmul.f32 %v281, %v166
    %v305 = vmul.f32 %v286, %v166
    %v306 = vmul.f32 %v291, %v166
    %v307 = vmul.f32 %v296, %v166
    %v308 = vmul.f32 %v301, %v166
    %309 = vset.pattern.permute.xlu0 1
    %310 = vperm.xlu0 %309, %v140
    %v311 = vpop.permute.xlu0 %310
    %313 = vset.pattern.permute.xlu0 1
    %314 = vperm.xlu0 %313, %v141
    %v315 = vpop.permute.xlu0 %314
    %317 = vset.pattern.permute.xlu0 1
    %318 = vperm.xlu0 %317, %v142
    %v319 = vpop.permute.xlu0 %318
    %321 = vset.pattern.permute.xlu0 1
    %322 = vperm.xlu0 %321, %v143
    %v323 = vpop.permute.xlu0 %322
    %325 = vset.pattern.permute.xlu0 1
    %326 = vperm.xlu0 %325, %v144
    %v327 = vpop.permute.xlu0 %326
    %329 = vset.pattern.permute.xlu0 1
    %330 = vperm.xlu0 %329, %v145
    %v331 = vpop.permute.xlu0 %330
    %v333 = vmul.f32 %v311, %v167
    %v334 = vmul.f32 %v315, %v167
    %v335 = vmul.f32 %v319, %v167
    %v336 = vmul.f32 %v323, %v167
    %v337 = vmul.f32 %v327, %v167
    %v338 = vmul.f32 %v331, %v167
    %339 = vset.pattern.permute.xlu0 2
    %340 = vperm.xlu0 %339, %v140
    %v341 = vpop.permute.xlu0 %340
    %343 = vset.pattern.permute.xlu0 2
    %344 = vperm.xlu0 %343, %v141
    %v345 = vpop.permute.xlu0 %344
    %347 = vset.pattern.permute.xlu0 2
    %348 = vperm.xlu0 %347, %v142
    %v349 = vpop.permute.xlu0 %348
    %351 = vset.pattern.permute.xlu0 2
    %352 = vperm.xlu0 %351, %v143
    %v353 = vpop.permute.xlu0 %352
    %355 = vset.pattern.permute.xlu0 2
    %356 = vperm.xlu0 %355, %v144
    %v357 = vpop.permute.xlu0 %356
    %359 = vset.pattern.permute.xlu0 2
    %360 = vperm.xlu0 %359, %v145
    %v361 = vpop.permute.xlu0 %360
    %v363 = vmul.f32 %v341, %v168
    %v364 = vmul.f32 %v345, %v168
    %v365 = vmul.f32 %v349, %v168
    %v366 = vmul.f32 %v353, %v168
    %v367 = vmul.f32 %v357, %v168
    %v368 = vmul.f32 %v361, %v168
    %369 = vset.pattern.permute.xlu0 3
    %370 = vperm.xlu0 %369, %v140
    %v371 = vpop.permute.xlu0 %370
    %373 = vset.pattern.permute.xlu0 3
    %374 = vperm.xlu0 %373, %v141
    %v375 = vpop.permute.xlu0 %374
    %377 = vset.pattern.permute.xlu0 3
    %378 = vperm.xlu0 %377, %v142
    %v379 = vpop.permute.xlu0 %378
    %381 = vset.pattern.permute.xlu0 3
    %382 = vperm.xlu0 %381, %v143
    %v383 = vpop.permute.xlu0 %382
    %385 = vset.pattern.permute.xlu0 3
    %386 = vperm.xlu0 %385, %v144
    %v387 = vpop.permute.xlu0 %386
    %389 = vset.pattern.permute.xlu0 3
    %390 = vperm.xlu0 %389, %v145
    %v391 = vpop.permute.xlu0 %390
    %v393 = vmul.f32 %v371, %v169
    %v394 = vmul.f32 %v375, %v169
    %v395 = vmul.f32 %v379, %v169
    %v396 = vmul.f32 %v383, %v169
    %v397 = vmul.f32 %v387, %v169
    %v398 = vmul.f32 %v391, %v169
    %399 = vset.pattern.permute.xlu0 4
    %400 = vperm.xlu0 %399, %v140
    %v401 = vpop.permute.xlu0 %400
    %403 = vset.pattern.permute.xlu0 4
    %404 = vperm.xlu0 %403, %v141
    %v405 = vpop.permute.xlu0 %404
    %407 = vset.pattern.permute.xlu0 4
    %408 = vperm.xlu0 %407, %v142
    %v409 = vpop.permute.xlu0 %408
    %411 = vset.pattern.permute.xlu0 4
    %412 = vperm.xlu0 %411, %v143
    %v413 = vpop.permute.xlu0 %412
    %415 = vset.pattern.permute.xlu0 4
    %416 = vperm.xlu0 %415, %v144
    %v417 = vpop.permute.xlu0 %416
    %419 = vset.pattern.permute.xlu0 4
    %420 = vperm.xlu0 %419, %v145
    %v421 = vpop.permute.xlu0 %420
    %v423 = vmul.f32 %v401, %v170
    %v424 = vmul.f32 %v405, %v170
    %v425 = vmul.f32 %v409, %v170
    %v426 = vmul.f32 %v413, %v170
    %v427 = vmul.f32 %v417, %v170
    %v428 = vmul.f32 %v421, %v170
    %v429 = vadd.f32 %v303, %v333
    %v430 = vadd.f32 %v304, %v334
    %v431 = vadd.f32 %v305, %v335
    %v432 = vadd.f32 %v306, %v336
    %v433 = vadd.f32 %v307, %v337
    %v434 = vadd.f32 %v308, %v338
    %v435 = vadd.f32 %v363, %v393
    %v436 = vadd.f32 %v364, %v394
    %v437 = vadd.f32 %v365, %v395
    %v438 = vadd.f32 %v366, %v396
    %v439 = vadd.f32 %v367, %v397
    %v440 = vadd.f32 %v368, %v398
    %v441 = vadd.f32 %v429, %v435
    %v442 = vadd.f32 %v430, %v436
    %v443 = vadd.f32 %v431, %v437
    %v444 = vadd.f32 %v432, %v438
    %v445 = vadd.f32 %v433, %v439
    %v446 = vadd.f32 %v434, %v440
    %v447 = vadd.f32 %v441, %v423
    %v448 = vadd.f32 %v442, %v424
    %v449 = vadd.f32 %v443, %v425
    %v450 = vadd.f32 %v444, %v426
    %v451 = vadd.f32 %v445, %v427
    %v452 = vadd.f32 %v446, %v428
    %s453 = sld [smem:[#allocation7]]
    %v454 = vstv %s453
    %v455 = vmul.f32 %v454, %v447
    %v456 = vmul.f32 %v454, %v450
    %s457 = sld [smem:[#allocation9]]
    %v458 = vstv %s457
    %v459 = vadd.f32 %v455, %v458
    %v460 = vadd.f32 %v456, %v458
    %vm461 = vcmp.ge.f32.partialorder %v459, 0.0
    %vm462 = vcmp.ge.f32.partialorder %v460, 0.0
    %v463 = vstv %s171
    %v464 = vmul.f32 %v463, %v459
    %v465 = vmul.f32 %v463, %v460
    %v466 = vsel %vm461, %v459, %v464
    %v467 = vsel %vm462, %v460, %v465
    %v470 = vrot.slane %v466, 7
    %v471 = vrot.slane %v467, 7
    %vm474 = vcmask 1040384
    %v475 = vsel %vm474, 0.0, %v470
    %v476 = vsel %vm474, 0.0, %v471
    %v477 = vsel %vm474, %v470, 0.0
    %v478 = vsel %vm474, %v471, 0.0
    %s479 = sld [smem:[#allocation7 + $0x1]]
    %v480 = vstv %s479
    %v481 = vmul.f32 %v480, %v448
    %v482 = vmul.f32 %v480, %v451
    %s483 = sld [smem:[#allocation9 + $0x1]]
    %v484 = vstv %s483
    %v485 = vadd.f32 %v481, %v484
    %v486 = vadd.f32 %v482, %v484
    %vm487 = vcmp.ge.f32.partialorder %v485, 0.0
    %vm488 = vcmp.ge.f32.partialorder %v486, 0.0
    %v489 = vmul.f32 %v463, %v485
    %v490 = vmul.f32 %v463, %v486
    %v491 = vsel %vm487, %v485, %v489
    %v492 = vsel %vm488, %v486, %v490
    %v495 = vrot.slane %v491, 7
    %v496 = vrot.slane %v492, 7
    %v499 = vsel %vm474, 0.0, %v495
    %v500 = vsel %vm474, 0.0, %v496
    %v501 = vsel %vm474, %v495, 0.0
    %v502 = vsel %vm474, %v496, 0.0
    %s503 = sld [smem:[#allocation7 + $0x2]]
    %v504 = vstv %s503
    %v505 = vmul.f32 %v504, %v449
    %v506 = vmul.f32 %v504, %v452
    %s507 = sld [smem:[#allocation9 + $0x2]]
    %v508 = vstv %s507
    %v509 = vadd.f32 %v505, %v508
    %v510 = vadd.f32 %v506, %v508
    %vm511 = vcmp.ge.f32.partialorder %v509, 0.0
    %vm512 = vcmp.ge.f32.partialorder %v510, 0.0
    %v513 = vmul.f32 %v463, %v509
    %v514 = vmul.f32 %v463, %v510
    %v515 = vsel %vm511, %v509, %v513
    %v516 = vsel %vm512, %v510, %v514
    %v519 = vrot.slane %v515, 7
    %v520 = vrot.slane %v516, 7
    %v523 = vsel %vm474, 0.0, %v519
    %v524 = vsel %vm474, 0.0, %v520
    %v525 = vsel %vm474, %v519, 0.0
    %v526 = vsel %vm474, %v520, 0.0
    %v527 = vstv %s174
    %v528 = vmul.f32 %v527, %v475
    %v529 = vmul.f32 %v527, %v476
    %v530 = vstv %s175
    %v531 = vmul.f32 %v530, %v475
    %v532 = vmul.f32 %v530, %v477
    %v533 = vmul.f32 %v530, %v476
    %v534 = vmul.f32 %v530, %v478
    %v535 = vstv %s176
    %v536 = vmul.f32 %v535, %v475
    %v537 = vmul.f32 %v535, %v477
    %v538 = vmul.f32 %v535, %v476
    %v539 = vmul.f32 %v535, %v478
    %v540 = vstv %s177
    %v541 = vmul.f32 %v540, %v499
    %v542 = vmul.f32 %v540, %v500
    %v543 = vstv %s178
    %v544 = vmul.f32 %v543, %v499
    %v545 = vmul.f32 %v543, %v501
    %v546 = vmul.f32 %v543, %v500
    %v547 = vmul.f32 %v543, %v502
    %v548 = vstv %s179
    %v549 = vmul.f32 %v548, %v499
    %v550 = vmul.f32 %v548, %v501
    %v551 = vmul.f32 %v548, %v500
    %v552 = vmul.f32 %v548, %v502
    %v553 = vstv %s180
    %v554 = vmul.f32 %v553, %v523
    %v555 = vmul.f32 %v553, %v524
    %v556 = vstv %s181
    %v557 = vmul.f32 %v556, %v523
    %v558 = vmul.f32 %v556, %v525
    %v559 = vmul.f32 %v556, %v524
    %v560 = vmul.f32 %v556, %v526
    %v561 = vstv %s182
    %v562 = vmul.f32 %v561, %v523
    %v563 = vmul.f32 %v561, %v525
    %v564 = vmul.f32 %v561, %v524
    %v565 = vmul.f32 %v561, %v526
    %s566 = sld [smem:[#allocation14]]
    %vm571 = vcmask 1046528
    %v572 = vrot.slane %v531, 1
    %v573 = vrot.slane %v532, 1
    %v574 = vsel %vm571, %v572, %v573
    %v575 = vrot.slane %v533, 1
    %v576 = vrot.slane %v534, 1
    %v577 = vsel %vm571, %v575, %v576
    %v580 = vadd.f32 %v528, %v574
    %v581 = vadd.f32 %v529, %v577
    %v584 = vrot.slane %v541, 6
    %v585 = vrot.slane %v542, 6
    %v588 = vadd.f32 %v536, %v584
    %v589 = vadd.f32 %v537, %v584
    %v590 = vadd.f32 %v538, %v585
    %v591 = vadd.f32 %v539, %v585
    %v596 = vrot.slane %v549, 1
    %v597 = vrot.slane %v550, 1
    %v598 = vsel %vm571, %v596, %v597
    %v599 = vrot.slane %v551, 1
    %v600 = vrot.slane %v552, 1
    %v601 = vsel %vm571, %v599, %v600
    %v606 = vadd.f32 %v544, %v598
    %v607 = vadd.f32 %v545, %v597
    %v608 = vadd.f32 %v546, %v601
    %v609 = vadd.f32 %v547, %v600
    %v614 = vrot.slane %v557, 1
    %v615 = vrot.slane %v558, 1
    %v616 = vsel %vm571, %v614, %v615
    %v617 = vrot.slane %v559, 1
    %v618 = vrot.slane %v560, 1
    %v619 = vsel %vm571, %v617, %v618
    %v622 = vadd.f32 %v554, %v616
    %v623 = vadd.f32 %v555, %v619
    %vm628 = vcmask 1045504
    %v629 = vrot.slane %v588, 2
    %v630 = vrot.slane %v589, 2
    %v631 = vsel %vm628, %v629, %v630
    %v632 = vrot.slane %v590, 2
    %v633 = vrot.slane %v591, 2
    %v634 = vsel %vm628, %v632, %v633
    %v637 = vadd.f32 %v580, %v631
    %v638 = vadd.f32 %v581, %v634
    %v641 = vrot.slane %v622, 7
    %v642 = vrot.slane %v623, 7
    %v645 = vadd.f32 %v606, %v641
    %v646 = vadd.f32 %v607, %v641
    %v647 = vadd.f32 %v608, %v642
    %v648 = vadd.f32 %v609, %v642
    %v653 = vrot.slane %v645, 1
    %v654 = vrot.slane %v646, 1
    %v655 = vsel %vm571, %v653, %v654
    %v656 = vrot.slane %v647, 1
    %v657 = vrot.slane %v648, 1
    %v658 = vsel %vm571, %v656, %v657
    %v661 = vadd.f32 %v637, %v655
    %v662 = vadd.f32 %v638, %v658
    %v667 = vrot.slane %v562, 2
    %v668 = vrot.slane %v563, 2
    %v669 = vsel %vm628, %v667, %v668
    %v670 = vrot.slane %v564, 2
    %v671 = vrot.slane %v565, 2
    %v672 = vsel %vm628, %v670, %v671
    %v675 = vadd.f32 %v661, %v669
    %v676 = vadd.f32 %v662, %v672
    %s677 = sld [smem:[#allocation12]]
    %v678 = vstv %s677
    %v679 = vadd.f32 %v675, %v678
    %v680 = vadd.f32 %v676, %v678
    %v681 = vstv %s566
    %v682 = vmul.f32 %v681, %v679
    %v683 = vmul.f32 %v681, %v680
    %s684 = sld [smem:[#allocation15]]
    %v685 = vstv %s684
    %v686 = vadd.f32 %v682, %v685
    %v687 = vadd.f32 %v683, %v685
    %v688 = vadd.f32 %v686, %v140
    %v689 = vadd.f32 %v687, %v143
    %vm690 = vcmp.ge.f32.partialorder %v688, 0.0
    %vm691 = vcmp.ge.f32.partialorder %v689, 0.0
    %v692 = vstv %s172
    %v693 = vmul.f32 %v692, %v688
    %v694 = vmul.f32 %v692, %v689
    %v695 = vsel %vm690, %v688, %v693
    %v696 = vsel %vm691, %v689, %v694
    %v697 = vstv %s183
    %v698 = vmul.f32 %v697, %v475
    %v699 = vmul.f32 %v697, %v476
    %v700 = vstv %s184
    %v701 = vmul.f32 %v700, %v475
    %v702 = vmul.f32 %v700, %v477
    %v703 = vmul.f32 %v700, %v476
    %v704 = vmul.f32 %v700, %v478
    %v705 = vstv %s185
    %v706 = vmul.f32 %v705, %v475
    %v707 = vmul.f32 %v705, %v477
    %v708 = vmul.f32 %v705, %v476
    %v709 = vmul.f32 %v705, %v478
    %v710 = vstv %s186
    %v711 = vmul.f32 %v710, %v499
    %v712 = vmul.f32 %v710, %v500
    %v713 = vstv %s187
    %v714 = vmul.f32 %v713, %v499
    %v715 = vmul.f32 %v713, %v501
    %v716 = vmul.f32 %v713, %v500
    %v717 = vmul.f32 %v713, %v502
    %v718 = vstv %s188
    %v719 = vmul.f32 %v718, %v499
    %v720 = vmul.f32 %v718, %v501
    %v721 = vmul.f32 %v718, %v500
    %v722 = vmul.f32 %v718, %v502
    %v723 = vstv %s189
    %v724 = vmul.f32 %v723, %v523
    %v725 = vmul.f32 %v723, %v524
    %v726 = vstv %s190
    %v727 = vmul.f32 %v726, %v523
    %v728 = vmul.f32 %v726, %v525
    %v729 = vmul.f32 %v726, %v524
    %v730 = vmul.f32 %v726, %v526
    %v731 = vstv %s191
    %v732 = vmul.f32 %v731, %v523
    %v733 = vmul.f32 %v731, %v525
    %v734 = vmul.f32 %v731, %v524
    %v735 = vmul.f32 %v731, %v526
    %s736 = sld [smem:[#allocation14 + $0x1]]
    %v741 = vrot.slane %v701, 1
    %v742 = vrot.slane %v702, 1
    %v743 = vsel %vm571, %v741, %v742
    %v744 = vrot.slane %v703, 1
    %v745 = vrot.slane %v704, 1
    %v746 = vsel %vm571, %v744, %v745
    %v749 = vadd.f32 %v698, %v743
    %v750 = vadd.f32 %v699, %v746
    %v753 = vrot.slane %v711, 6
    %v754 = vrot.slane %v712, 6
    %v757 = vadd.f32 %v706, %v753
    %v758 = vadd.f32 %v707, %v753
    %v759 = vadd.f32 %v708, %v754
    %v760 = vadd.f32 %v709, %v754
    %v765 = vrot.slane %v719, 1
    %v766 = vrot.slane %v720, 1
    %v767 = vsel %vm571, %v765, %v766
    %v768 = vrot.slane %v721, 1
    %v769 = vrot.slane %v722, 1
    %v770 = vsel %vm571, %v768, %v769
    %v775 = vadd.f32 %v714, %v767
    %v776 = vadd.f32 %v715, %v766
    %v777 = vadd.f32 %v716, %v770
    %v778 = vadd.f32 %v717, %v769
    %v783 = vrot.slane %v727, 1
    %v784 = vrot.slane %v728, 1
    %v785 = vsel %vm571, %v783, %v784
    %v786 = vrot.slane %v729, 1
    %v787 = vrot.slane %v730, 1
    %v788 = vsel %vm571, %v786, %v787
    %v791 = vadd.f32 %v724, %v785
    %v792 = vadd.f32 %v725, %v788
    %v797 = vrot.slane %v757, 2
    %v798 = vrot.slane %v758, 2
    %v799 = vsel %vm628, %v797, %v798
    %v800 = vrot.slane %v759, 2
    %v801 = vrot.slane %v760, 2
    %v802 = vsel %vm628, %v800, %v801
    %v805 = vadd.f32 %v749, %v799
    %v806 = vadd.f32 %v750, %v802
    %v809 = vrot.slane %v791, 7
    %v810 = vrot.slane %v792, 7
    %v813 = vadd.f32 %v775, %v809
    %v814 = vadd.f32 %v776, %v809
    %v815 = vadd.f32 %v777, %v810
    %v816 = vadd.f32 %v778, %v810
    %v821 = vrot.slane %v813, 1
    %v822 = vrot.slane %v814, 1
    %v823 = vsel %vm571, %v821, %v822
    %v824 = vrot.slane %v815, 1
    %v825 = vrot.slane %v816, 1
    %v826 = vsel %vm571, %v824, %v825
    %v829 = vadd.f32 %v805, %v823
    %v830 = vadd.f32 %v806, %v826
    %v835 = vrot.slane %v732, 2
    %v836 = vrot.slane %v733, 2
    %v837 = vsel %vm628, %v835, %v836
    %v838 = vrot.slane %v734, 2
    %v839 = vrot.slane %v735, 2
    %v840 = vsel %vm628, %v838, %v839
    %v843 = vadd.f32 %v829, %v837
    %v844 = vadd.f32 %v830, %v840
    %s845 = sld [smem:[#allocation12 + $0x1]]
    %v846 = vstv %s845
    %v847 = vadd.f32 %v843, %v846
    %v848 = vadd.f32 %v844, %v846
    %v849 = vstv %s736
    %v850 = vmul.f32 %v849, %v847
    %v851 = vmul.f32 %v849, %v848
    %s852 = sld [smem:[#allocation15 + $0x1]]
    %v853 = vstv %s852
    %v854 = vadd.f32 %v850, %v853
    %v855 = vadd.f32 %v851, %v853
    %v856 = vadd.f32 %v854, %v141
    %v857 = vadd.f32 %v855, %v144
    %vm858 = vcmp.ge.f32.partialorder %v856, 0.0
    %vm859 = vcmp.ge.f32.partialorder %v857, 0.0
    %v860 = vmul.f32 %v692, %v856
    %v861 = vmul.f32 %v692, %v857
    %v862 = vsel %vm858, %v856, %v860
    %v863 = vsel %vm859, %v857, %v861
    %v864 = vstv %s192
    %v865 = vmul.f32 %v864, %v475
    %v866 = vmul.f32 %v864, %v476
    %v867 = vstv %s193
    %v868 = vmul.f32 %v867, %v475
    %v869 = vmul.f32 %v867, %v477
    %v870 = vmul.f32 %v867, %v476
    %v871 = vmul.f32 %v867, %v478
    %v872 = vstv %s194
    %v873 = vmul.f32 %v872, %v475
    %v874 = vmul.f32 %v872, %v477
    %v875 = vmul.f32 %v872, %v476
    %v876 = vmul.f32 %v872, %v478
    %v877 = vstv %s195
    %v878 = vmul.f32 %v877, %v499
    %v879 = vmul.f32 %v877, %v500
    %v880 = vstv %s196
    %v881 = vmul.f32 %v880, %v499
    %v882 = vmul.f32 %v880, %v501
    %v883 = vmul.f32 %v880, %v500
    %v884 = vmul.f32 %v880, %v502
    %v885 = vstv %s197
    %v886 = vmul.f32 %v885, %v499
    %v887 = vmul.f32 %v885, %v501
    %v888 = vmul.f32 %v885, %v500
    %v889 = vmul.f32 %v885, %v502
    %v890 = vstv %s198
    %v891 = vmul.f32 %v890, %v523
    %v892 = vmul.f32 %v890, %v524
    %v893 = vstv %s199
    %v894 = vmul.f32 %v893, %v523
    %v895 = vmul.f32 %v893, %v525
    %v896 = vmul.f32 %v893, %v524
    %v897 = vmul.f32 %v893, %v526
    %v898 = vstv %s200
    %v899 = vmul.f32 %v898, %v523
    %v900 = vmul.f32 %v898, %v525
    %v901 = vmul.f32 %v898, %v524
    %v902 = vmul.f32 %v898, %v526
    %s903 = sld [smem:[#allocation14 + $0x2]]
    %v908 = vrot.slane %v868, 1
    %v909 = vrot.slane %v869, 1
    %v910 = vsel %vm571, %v908, %v909
    %v911 = vrot.slane %v870, 1
    %v912 = vrot.slane %v871, 1
    %v913 = vsel %vm571, %v911, %v912
    %v916 = vadd.f32 %v865, %v910
    %v917 = vadd.f32 %v866, %v913
    %v920 = vrot.slane %v878, 6
    %v921 = vrot.slane %v879, 6
    %v924 = vadd.f32 %v873, %v920
    %v925 = vadd.f32 %v874, %v920
    %v926 = vadd.f32 %v875, %v921
    %v927 = vadd.f32 %v876, %v921
    %v932 = vrot.slane %v886, 1
    %v933 = vrot.slane %v887, 1
    %v934 = vsel %vm571, %v932, %v933
    %v935 = vrot.slane %v888, 1
    %v936 = vrot.slane %v889, 1
    %v937 = vsel %vm571, %v935, %v936
    %v942 = vadd.f32 %v881, %v934
    %v943 = vadd.f32 %v882, %v933
    %v944 = vadd.f32 %v883, %v937
    %v945 = vadd.f32 %v884, %v936
    %v950 = vrot.slane %v894, 1
    %v951 = vrot.slane %v895, 1
    %v952 = vsel %vm571, %v950, %v951
    %v953 = vrot.slane %v896, 1
    %v954 = vrot.slane %v897, 1
    %v955 = vsel %vm571, %v953, %v954
    %v958 = vadd.f32 %v891, %v952
    %v959 = vadd.f32 %v892, %v955
    %v964 = vrot.slane %v924, 2
    %v965 = vrot.slane %v925, 2
    %v966 = vsel %vm628, %v964, %v965
    %v967 = vrot.slane %v926, 2
    %v968 = vrot.slane %v927, 2
    %v969 = vsel %vm628, %v967, %v968
    %v972 = vadd.f32 %v916, %v966
    %v973 = vadd.f32 %v917, %v969
    %v976 = vrot.slane %v958, 7
    %v977 = vrot.slane %v959, 7
    %v980 = vadd.f32 %v942, %v976
    %v981 = vadd.f32 %v943, %v976
    %v982 = vadd.f32 %v944, %v977
    %v983 = vadd.f32 %v945, %v977
    %v988 = vrot.slane %v980, 1
    %v989 = vrot.slane %v981, 1
    %v990 = vsel %vm571, %v988, %v989
    %v991 = vrot.slane %v982, 1
    %v992 = vrot.slane %v983, 1
    %v993 = vsel %vm571, %v991, %v992
    %v996 = vadd.f32 %v972, %v990
    %v997 = vadd.f32 %v973, %v993
    %v1002 = vrot.slane %v899, 2
    %v1003 = vrot.slane %v900, 2
    %v1004 = vsel %vm628, %v1002, %v1003
    %v1005 = vrot.slane %v901, 2
    %v1006 = vrot.slane %v902, 2
    %v1007 = vsel %vm628, %v1005, %v1006
    %v1010 = vadd.f32 %v996, %v1004
    %v1011 = vadd.f32 %v997, %v1007
    %s1012 = sld [smem:[#allocation12 + $0x2]]
    %v1013 = vstv %s1012
    %v1014 = vadd.f32 %v1010, %v1013
    %v1015 = vadd.f32 %v1011, %v1013
    %v1016 = vstv %s903
    %v1017 = vmul.f32 %v1016, %v1014
    %v1018 = vmul.f32 %v1016, %v1015
    %s1019 = sld [smem:[#allocation15 + $0x2]]
    %v1020 = vstv %s1019
    %v1021 = vadd.f32 %v1017, %v1020
    %v1022 = vadd.f32 %v1018, %v1020
    %v1023 = vadd.f32 %v1021, %v142
    %v1024 = vadd.f32 %v1022, %v145
    %vm1025 = vcmp.ge.f32.partialorder %v1023, 0.0
    %vm1026 = vcmp.ge.f32.partialorder %v1024, 0.0
    %v1027 = vmul.f32 %v692, %v1023
    %v1028 = vmul.f32 %v692, %v1024
    %v1029 = vsel %vm1025, %v1023, %v1027
    %v1030 = vsel %vm1026, %v1024, %v1028
    %1033 = vrot.lane.b32.xlu0 %v695, 1
    %v1034 = vpop.permute.xlu0 %1033
    %1035 = vrot.lane.b32.xlu0 %v696, 1
    %v1036 = vpop.permute.xlu0 %1035
    %vm1039 = vcmask 7168
    %v1040 = vsel %vm1039, 0.0, %v1034
    %v1041 = vsel %vm1039, 0.0, %v1036
    %vm1042 = vcmask 48128
    %v1043 = vsel %vm1042, %v1040, 0.0
    %v1044 = vsel %vm1042, %v1041, 0.0
    %v1045 = vstv %s204
    %v1046 = vmul.f32 %v1045, %v1043
    %v1047 = vmul.f32 %v1045, %v1044
    %v1048 = vstv %s205
    %v1049 = vmul.f32 %v1048, %v1043
    %v1050 = vmul.f32 %v1048, %v1044
    %v1051 = vstv %s206
    %v1052 = vmul.f32 %v1051, %v1043
    %v1053 = vmul.f32 %v1051, %v1044
    %1056 = vrot.lane.b32.xlu0 %v1049, 127
    %v1057 = vpop.permute.xlu0 %1056
    %1058 = vrot.lane.b32.xlu0 %v1050, 127
    %v1059 = vpop.permute.xlu0 %1058
    %v1062 = vadd.f32 %v1046, %v1057
    %v1063 = vadd.f32 %v1047, %v1059
    %1066 = vrot.lane.b32.xlu0 %v1052, 126
    %v1067 = vpop.permute.xlu0 %1066
    %1068 = vrot.lane.b32.xlu0 %v1053, 126
    %v1069 = vpop.permute.xlu0 %1068
    %v1072 = vadd.f32 %v1062, %v1067
    %v1073 = vadd.f32 %v1063, %v1069
    %v1074 = vstv %s201
    %v1075 = vmul.f32 %v1074, %v1043
    %v1076 = vmul.f32 %v1074, %v1044
    %v1077 = vstv %s202
    %v1078 = vmul.f32 %v1077, %v1043
    %v1079 = vmul.f32 %v1077, %v1044
    %v1080 = vstv %s203
    %v1081 = vmul.f32 %v1080, %v1043
    %v1082 = vmul.f32 %v1080, %v1044
    %1085 = vrot.lane.b32.xlu0 %v1078, 127
    %v1086 = vpop.permute.xlu0 %1085
    %1087 = vrot.lane.b32.xlu0 %v1079, 127
    %v1088 = vpop.permute.xlu0 %1087
    %v1091 = vadd.f32 %v1075, %v1086
    %v1092 = vadd.f32 %v1076, %v1088
    %1095 = vrot.lane.b32.xlu0 %v1081, 126
    %v1096 = vpop.permute.xlu0 %1095
    %1097 = vrot.lane.b32.xlu0 %v1082, 126
    %v1098 = vpop.permute.xlu0 %1097
    %v1101 = vadd.f32 %v1091, %v1096
    %v1102 = vadd.f32 %v1092, %v1098
    %v1103 = vrot.slane %v695, 1
    %v1104 = vrot.slane %v696, 1
    %1105 = vrot.lane.b32.xlu0 %v1103, 1
    %v1106 = vpop.permute.xlu0 %1105
    %1107 = vrot.lane.b32.xlu0 %v1104, 1
    %v1108 = vpop.permute.xlu0 %1107
    %v1111 = vsel %vm1039, 0.0, %v1106
    %v1112 = vsel %vm1039, 0.0, %v1108
    %v1113 = vsel %vm1042, %v1111, 0.0
    %v1114 = vsel %vm1042, %v1112, 0.0
    %v1115 = vstv %s207
    %v1116 = vmul.f32 %v1115, %v1113
    %v1117 = vmul.f32 %v1115, %v1114
    %v1118 = vstv %s208
    %v1119 = vmul.f32 %v1118, %v1113
    %v1120 = vmul.f32 %v1118, %v1114
    %v1121 = vstv %s209
    %v1122 = vmul.f32 %v1121, %v1113
    %v1123 = vmul.f32 %v1121, %v1114
    %1126 = vrot.lane.b32.xlu0 %v1119, 127
    %v1127 = vpop.permute.xlu0 %1126
    %1128 = vrot.lane.b32.xlu0 %v1120, 127
    %v1129 = vpop.permute.xlu0 %1128
    %v1132 = vadd.f32 %v1116, %v1127
    %v1133 = vadd.f32 %v1117, %v1129
    %1136 = vrot.lane.b32.xlu0 %v1122, 126
    %v1137 = vpop.permute.xlu0 %1136
    %1138 = vrot.lane.b32.xlu0 %v1123, 126
    %v1139 = vpop.permute.xlu0 %1138
    %v1142 = vadd.f32 %v1132, %v1137
    %v1143 = vadd.f32 %v1133, %v1139
    %v1144 = vmul.f32 %v1045, %v1113
    %v1145 = vmul.f32 %v1045, %v1114
    %v1146 = vmul.f32 %v1048, %v1113
    %v1147 = vmul.f32 %v1048, %v1114
    %v1148 = vmul.f32 %v1051, %v1113
    %v1149 = vmul.f32 %v1051, %v1114
    %1152 = vrot.lane.b32.xlu0 %v1146, 127
    %v1153 = vpop.permute.xlu0 %1152
    %1154 = vrot.lane.b32.xlu0 %v1147, 127
    %v1155 = vpop.permute.xlu0 %1154
    %v1158 = vadd.f32 %v1144, %v1153
    %v1159 = vadd.f32 %v1145, %v1155
    %1162 = vrot.lane.b32.xlu0 %v1148, 126
    %v1163 = vpop.permute.xlu0 %1162
    %1164 = vrot.lane.b32.xlu0 %v1149, 126
    %v1165 = vpop.permute.xlu0 %1164
    %v1168 = vadd.f32 %v1158, %v1163
    %v1169 = vadd.f32 %v1159, %v1165
    %v1170 = vmul.f32 %v1074, %v1113
    %v1171 = vmul.f32 %v1074, %v1114
    %v1172 = vmul.f32 %v1077, %v1113
    %v1173 = vmul.f32 %v1077, %v1114
    %v1174 = vmul.f32 %v1080, %v1113
    %v1175 = vmul.f32 %v1080, %v1114
    %1178 = vrot.lane.b32.xlu0 %v1172, 127
    %v1179 = vpop.permute.xlu0 %1178
    %1180 = vrot.lane.b32.xlu0 %v1173, 127
    %v1181 = vpop.permute.xlu0 %1180
    %v1184 = vadd.f32 %v1170, %v1179
    %v1185 = vadd.f32 %v1171, %v1181
    %1188 = vrot.lane.b32.xlu0 %v1174, 126
    %v1189 = vpop.permute.xlu0 %1188
    %1190 = vrot.lane.b32.xlu0 %v1175, 126
    %v1191 = vpop.permute.xlu0 %1190
    %v1194 = vadd.f32 %v1184, %v1189
    %v1195 = vadd.f32 %v1185, %v1191
    %v1196 = vrot.slane %v695, 2
    %v1197 = vrot.slane %v696, 2
    %1198 = vrot.lane.b32.xlu0 %v1196, 1
    %v1199 = vpop.permute.xlu0 %1198
    %1200 = vrot.lane.b32.xlu0 %v1197, 1
    %v1201 = vpop.permute.xlu0 %1200
    %v1204 = vsel %vm1039, 0.0, %v1199
    %v1205 = vsel %vm1039, 0.0, %v1201
    %v1206 = vsel %vm1042, %v1204, 0.0
    %v1207 = vsel %vm1042, %v1205, 0.0
    %v1208 = vmul.f32 %v1115, %v1206
    %v1209 = vmul.f32 %v1115, %v1207
    %v1210 = vmul.f32 %v1118, %v1206
    %v1211 = vmul.f32 %v1118, %v1207
    %v1212 = vmul.f32 %v1121, %v1206
    %v1213 = vmul.f32 %v1121, %v1207
    %1216 = vrot.lane.b32.xlu0 %v1210, 127
    %v1217 = vpop.permute.xlu0 %1216
    %1218 = vrot.lane.b32.xlu0 %v1211, 127
    %v1219 = vpop.permute.xlu0 %1218
    %v1222 = vadd.f32 %v1208, %v1217
    %v1223 = vadd.f32 %v1209, %v1219
    %1226 = vrot.lane.b32.xlu0 %v1212, 126
    %v1227 = vpop.permute.xlu0 %1226
    %1228 = vrot.lane.b32.xlu0 %v1213, 126
    %v1229 = vpop.permute.xlu0 %1228
    %v1232 = vadd.f32 %v1222, %v1227
    %v1233 = vadd.f32 %v1223, %v1229
    %v1234 = vmul.f32 %v1045, %v1206
    %v1235 = vmul.f32 %v1045, %v1207
    %v1236 = vmul.f32 %v1048, %v1206
    %v1237 = vmul.f32 %v1048, %v1207
    %v1238 = vmul.f32 %v1051, %v1206
    %v1239 = vmul.f32 %v1051, %v1207
    %1242 = vrot.lane.b32.xlu0 %v1236, 127
    %v1243 = vpop.permute.xlu0 %1242
    %1244 = vrot.lane.b32.xlu0 %v1237, 127
    %v1245 = vpop.permute.xlu0 %1244
    %v1248 = vadd.f32 %v1234, %v1243
    %v1249 = vadd.f32 %v1235, %v1245
    %1252 = vrot.lane.b32.xlu0 %v1238, 126
    %v1253 = vpop.permute.xlu0 %1252
    %1254 = vrot.lane.b32.xlu0 %v1239, 126
    %v1255 = vpop.permute.xlu0 %1254
    %v1258 = vadd.f32 %v1248, %v1253
    %v1259 = vadd.f32 %v1249, %v1255
    %v1260 = vrot.slane %v695, 3
    %v1261 = vrot.slane %v696, 3
    %1262 = vrot.lane.b32.xlu0 %v1260, 1
    %v1263 = vpop.permute.xlu0 %1262
    %1264 = vrot.lane.b32.xlu0 %v1261, 1
    %v1265 = vpop.permute.xlu0 %1264
    %v1268 = vsel %vm1039, 0.0, %v1263
    %v1269 = vsel %vm1039, 0.0, %v1265
    %v1270 = vsel %vm1042, %v1268, 0.0
    %v1271 = vsel %vm1042, %v1269, 0.0
    %v1272 = vstv %s213
    %v1273 = vmul.f32 %v1272, %v1270
    %v1274 = vmul.f32 %v1272, %v1271
    %v1275 = vstv %s214
    %v1276 = vmul.f32 %v1275, %v1270
    %v1277 = vmul.f32 %v1275, %v1271
    %v1278 = vstv %s215
    %v1279 = vmul.f32 %v1278, %v1270
    %v1280 = vmul.f32 %v1278, %v1271
    %1283 = vrot.lane.b32.xlu0 %v1276, 127
    %v1284 = vpop.permute.xlu0 %1283
    %1285 = vrot.lane.b32.xlu0 %v1277, 127
    %v1286 = vpop.permute.xlu0 %1285
    %v1289 = vadd.f32 %v1273, %v1284
    %v1290 = vadd.f32 %v1274, %v1286
    %1293 = vrot.lane.b32.xlu0 %v1279, 126
    %v1294 = vpop.permute.xlu0 %1293
    %1295 = vrot.lane.b32.xlu0 %v1280, 126
    %v1296 = vpop.permute.xlu0 %1295
    %v1299 = vadd.f32 %v1289, %v1294
    %v1300 = vadd.f32 %v1290, %v1296
    %v1301 = vstv %s210
    %v1302 = vmul.f32 %v1301, %v1270
    %v1303 = vmul.f32 %v1301, %v1271
    %v1304 = vstv %s211
    %v1305 = vmul.f32 %v1304, %v1270
    %v1306 = vmul.f32 %v1304, %v1271
    %v1307 = vstv %s212
    %v1308 = vmul.f32 %v1307, %v1270
    %v1309 = vmul.f32 %v1307, %v1271
    %1312 = vrot.lane.b32.xlu0 %v1305, 127
    %v1313 = vpop.permute.xlu0 %1312
    %1314 = vrot.lane.b32.xlu0 %v1306, 127
    %v1315 = vpop.permute.xlu0 %1314
    %v1318 = vadd.f32 %v1302, %v1313
    %v1319 = vadd.f32 %v1303, %v1315
    %1322 = vrot.lane.b32.xlu0 %v1308, 126
    %v1323 = vpop.permute.xlu0 %1322
    %1324 = vrot.lane.b32.xlu0 %v1309, 126
    %v1325 = vpop.permute.xlu0 %1324
    %v1328 = vadd.f32 %v1318, %v1323
    %v1329 = vadd.f32 %v1319, %v1325
    %v1330 = vrot.slane %v695, 4
    %v1331 = vrot.slane %v696, 4
    %1332 = vrot.lane.b32.xlu0 %v1330, 1
    %v1333 = vpop.permute.xlu0 %1332
    %1334 = vrot.lane.b32.xlu0 %v1331, 1
    %v1335 = vpop.permute.xlu0 %1334
    %v1338 = vsel %vm1039, 0.0, %v1333
    %v1339 = vsel %vm1039, 0.0, %v1335
    %v1340 = vsel %vm1042, %v1338, 0.0
    %v1341 = vsel %vm1042, %v1339, 0.0
    %v1342 = vstv %s216
    %v1343 = vmul.f32 %v1342, %v1340
    %v1344 = vmul.f32 %v1342, %v1341
    %v1345 = vstv %s217
    %v1346 = vmul.f32 %v1345, %v1340
    %v1347 = vmul.f32 %v1345, %v1341
    %v1348 = vstv %s218
    %v1349 = vmul.f32 %v1348, %v1340
    %v1350 = vmul.f32 %v1348, %v1341
    %1353 = vrot.lane.b32.xlu0 %v1346, 127
    %v1354 = vpop.permute.xlu0 %1353
    %1355 = vrot.lane.b32.xlu0 %v1347, 127
    %v1356 = vpop.permute.xlu0 %1355
    %v1359 = vadd.f32 %v1343, %v1354
    %v1360 = vadd.f32 %v1344, %v1356
    %1363 = vrot.lane.b32.xlu0 %v1349, 126
    %v1364 = vpop.permute.xlu0 %1363
    %1365 = vrot.lane.b32.xlu0 %v1350, 126
    %v1366 = vpop.permute.xlu0 %1365
    %v1369 = vadd.f32 %v1359, %v1364
    %v1370 = vadd.f32 %v1360, %v1366
    %v1371 = vmul.f32 %v1272, %v1340
    %v1372 = vmul.f32 %v1272, %v1341
    %v1373 = vmul.f32 %v1275, %v1340
    %v1374 = vmul.f32 %v1275, %v1341
    %v1375 = vmul.f32 %v1278, %v1340
    %v1376 = vmul.f32 %v1278, %v1341
    %1379 = vrot.lane.b32.xlu0 %v1373, 127
    %v1380 = vpop.permute.xlu0 %1379
    %1381 = vrot.lane.b32.xlu0 %v1374, 127
    %v1382 = vpop.permute.xlu0 %1381
    %v1385 = vadd.f32 %v1371, %v1380
    %v1386 = vadd.f32 %v1372, %v1382
    %1389 = vrot.lane.b32.xlu0 %v1375, 126
    %v1390 = vpop.permute.xlu0 %1389
    %1391 = vrot.lane.b32.xlu0 %v1376, 126
    %v1392 = vpop.permute.xlu0 %1391
    %v1395 = vadd.f32 %v1385, %v1390
    %v1396 = vadd.f32 %v1386, %v1392
    %v1397 = vmul.f32 %v1301, %v1340
    %v1398 = vmul.f32 %v1301, %v1341
    %v1399 = vmul.f32 %v1304, %v1340
    %v1400 = vmul.f32 %v1304, %v1341
    %v1401 = vmul.f32 %v1307, %v1340
    %v1402 = vmul.f32 %v1307, %v1341
    %1405 = vrot.lane.b32.xlu0 %v1399, 127
    %v1406 = vpop.permute.xlu0 %1405
    %1407 = vrot.lane.b32.xlu0 %v1400, 127
    %v1408 = vpop.permute.xlu0 %1407
    %v1411 = vadd.f32 %v1397, %v1406
    %v1412 = vadd.f32 %v1398, %v1408
    %1415 = vrot.lane.b32.xlu0 %v1401, 126
    %v1416 = vpop.permute.xlu0 %1415
    %1417 = vrot.lane.b32.xlu0 %v1402, 126
    %v1418 = vpop.permute.xlu0 %1417
    %v1421 = vadd.f32 %v1411, %v1416
    %v1422 = vadd.f32 %v1412, %v1418
    %v1423 = vrot.slane %v695, 5
    %v1424 = vrot.slane %v696, 5
    %1425 = vrot.lane.b32.xlu0 %v1423, 1
    %v1426 = vpop.permute.xlu0 %1425
    %1427 = vrot.lane.b32.xlu0 %v1424, 1
    %v1428 = vpop.permute.xlu0 %1427
    %v1431 = vsel %vm1039, 0.0, %v1426
    %v1432 = vsel %vm1039, 0.0, %v1428
    %v1433 = vsel %vm1042, %v1431, 0.0
    %v1434 = vsel %vm1042, %v1432, 0.0
    %v1435 = vmul.f32 %v1342, %v1433
    %v1436 = vmul.f32 %v1342, %v1434
    %v1437 = vmul.f32 %v1345, %v1433
    %v1438 = vmul.f32 %v1345, %v1434
    %v1439 = vmul.f32 %v1348, %v1433
    %v1440 = vmul.f32 %v1348, %v1434
    %1443 = vrot.lane.b32.xlu0 %v1437, 127
    %v1444 = vpop.permute.xlu0 %1443
    %1445 = vrot.lane.b32.xlu0 %v1438, 127
    %v1446 = vpop.permute.xlu0 %1445
    %v1449 = vadd.f32 %v1435, %v1444
    %v1450 = vadd.f32 %v1436, %v1446
    %1453 = vrot.lane.b32.xlu0 %v1439, 126
    %v1454 = vpop.permute.xlu0 %1453
    %1455 = vrot.lane.b32.xlu0 %v1440, 126
    %v1456 = vpop.permute.xlu0 %1455
    %v1459 = vadd.f32 %v1449, %v1454
    %v1460 = vadd.f32 %v1450, %v1456
    %v1461 = vmul.f32 %v1272, %v1433
    %v1462 = vmul.f32 %v1272, %v1434
    %v1463 = vmul.f32 %v1275, %v1433
    %v1464 = vmul.f32 %v1275, %v1434
    %v1465 = vmul.f32 %v1278, %v1433
    %v1466 = vmul.f32 %v1278, %v1434
    %1469 = vrot.lane.b32.xlu0 %v1463, 127
    %v1470 = vpop.permute.xlu0 %1469
    %1471 = vrot.lane.b32.xlu0 %v1464, 127
    %v1472 = vpop.permute.xlu0 %1471
    %v1475 = vadd.f32 %v1461, %v1470
    %v1476 = vadd.f32 %v1462, %v1472
    %1479 = vrot.lane.b32.xlu0 %v1465, 126
    %v1480 = vpop.permute.xlu0 %1479
    %1481 = vrot.lane.b32.xlu0 %v1466, 126
    %v1482 = vpop.permute.xlu0 %1481
    %v1485 = vadd.f32 %v1475, %v1480
    %v1486 = vadd.f32 %v1476, %v1482
    %v1487 = vrot.slane %v695, 6
    %v1488 = vrot.slane %v696, 6
    %1489 = vrot.lane.b32.xlu0 %v1487, 1
    %v1490 = vpop.permute.xlu0 %1489
    %1491 = vrot.lane.b32.xlu0 %v1488, 1
    %v1492 = vpop.permute.xlu0 %1491
    %v1495 = vsel %vm1039, 0.0, %v1490
    %v1496 = vsel %vm1039, 0.0, %v1492
    %v1497 = vsel %vm1042, %v1495, 0.0
    %v1498 = vsel %vm1042, %v1496, 0.0
    %v1499 = vstv %s222
    %v1500 = vmul.f32 %v1499, %v1497
    %v1501 = vmul.f32 %v1499, %v1498
    %v1502 = vstv %s223
    %v1503 = vmul.f32 %v1502, %v1497
    %v1504 = vmul.f32 %v1502, %v1498
    %v1505 = vstv %s224
    %v1506 = vmul.f32 %v1505, %v1497
    %v1507 = vmul.f32 %v1505, %v1498
    %1510 = vrot.lane.b32.xlu0 %v1503, 127
    %v1511 = vpop.permute.xlu0 %1510
    %1512 = vrot.lane.b32.xlu0 %v1504, 127
    %v1513 = vpop.permute.xlu0 %1512
    %v1516 = vadd.f32 %v1500, %v1511
    %v1517 = vadd.f32 %v1501, %v1513
    %1520 = vrot.lane.b32.xlu0 %v1506, 126
    %v1521 = vpop.permute.xlu0 %1520
    %1522 = vrot.lane.b32.xlu0 %v1507, 126
    %v1523 = vpop.permute.xlu0 %1522
    %v1526 = vadd.f32 %v1516, %v1521
    %v1527 = vadd.f32 %v1517, %v1523
    %v1528 = vstv %s219
    %v1529 = vmul.f32 %v1528, %v1497
    %v1530 = vmul.f32 %v1528, %v1498
    %v1531 = vstv %s220
    %v1532 = vmul.f32 %v1531, %v1497
    %v1533 = vmul.f32 %v1531, %v1498
    %v1534 = vstv %s221
    %v1535 = vmul.f32 %v1534, %v1497
    %v1536 = vmul.f32 %v1534, %v1498
    %1539 = vrot.lane.b32.xlu0 %v1532, 127
    %v1540 = vpop.permute.xlu0 %1539
    %1541 = vrot.lane.b32.xlu0 %v1533, 127
    %v1542 = vpop.permute.xlu0 %1541
    %v1545 = vadd.f32 %v1529, %v1540
    %v1546 = vadd.f32 %v1530, %v1542
    %1549 = vrot.lane.b32.xlu0 %v1535, 126
    %v1550 = vpop.permute.xlu0 %1549
    %1551 = vrot.lane.b32.xlu0 %v1536, 126
    %v1552 = vpop.permute.xlu0 %1551
    %v1555 = vadd.f32 %v1545, %v1550
    %v1556 = vadd.f32 %v1546, %v1552
    %v1557 = vrot.slane %v695, 7
    %v1558 = vrot.slane %v696, 7
    %1559 = vrot.lane.b32.xlu0 %v1557, 1
    %v1560 = vpop.permute.xlu0 %1559
    %1561 = vrot.lane.b32.xlu0 %v1558, 1
    %v1562 = vpop.permute.xlu0 %1561
    %v1565 = vsel %vm1039, 0.0, %v1560
    %v1566 = vsel %vm1039, 0.0, %v1562
    %v1567 = vsel %vm1042, %v1565, 0.0
    %v1568 = vsel %vm1042, %v1566, 0.0
    %v1569 = vstv %s225
    %v1570 = vmul.f32 %v1569, %v1567
    %v1571 = vmul.f32 %v1569, %v1568
    %v1572 = vstv %s226
    %v1573 = vmul.f32 %v1572, %v1567
    %v1574 = vmul.f32 %v1572, %v1568
    %v1575 = vstv %s227
    %v1576 = vmul.f32 %v1575, %v1567
    %v1577 = vmul.f32 %v1575, %v1568
    %1580 = vrot.lane.b32.xlu0 %v1573, 127
    %v1581 = vpop.permute.xlu0 %1580
    %1582 = vrot.lane.b32.xlu0 %v1574, 127
    %v1583 = vpop.permute.xlu0 %1582
    %v1586 = vadd.f32 %v1570, %v1581
    %v1587 = vadd.f32 %v1571, %v1583
    %1590 = vrot.lane.b32.xlu0 %v1576, 126
    %v1591 = vpop.permute.xlu0 %1590
    %1592 = vrot.lane.b32.xlu0 %v1577, 126
    %v1593 = vpop.permute.xlu0 %1592
    %v1596 = vadd.f32 %v1586, %v1591
    %v1597 = vadd.f32 %v1587, %v1593
    %v1598 = vmul.f32 %v1499, %v1567
    %v1599 = vmul.f32 %v1499, %v1568
    %v1600 = vmul.f32 %v1502, %v1567
    %v1601 = vmul.f32 %v1502, %v1568
    %v1602 = vmul.f32 %v1505, %v1567
    %v1603 = vmul.f32 %v1505, %v1568
    %1606 = vrot.lane.b32.xlu0 %v1600, 127
    %v1607 = vpop.permute.xlu0 %1606
    %1608 = vrot.lane.b32.xlu0 %v1601, 127
    %v1609 = vpop.permute.xlu0 %1608
    %v1612 = vadd.f32 %v1598, %v1607
    %v1613 = vadd.f32 %v1599, %v1609
    %1616 = vrot.lane.b32.xlu0 %v1602, 126
    %v1617 = vpop.permute.xlu0 %1616
    %1618 = vrot.lane.b32.xlu0 %v1603, 126
    %v1619 = vpop.permute.xlu0 %1618
    %v1622 = vadd.f32 %v1612, %v1617
    %v1623 = vadd.f32 %v1613, %v1619
    %v1624 = vmul.f32 %v1528, %v1567
    %v1625 = vmul.f32 %v1528, %v1568
    %v1626 = vmul.f32 %v1531, %v1567
    %v1627 = vmul.f32 %v1531, %v1568
    %v1628 = vmul.f32 %v1534, %v1567
    %v1629 = vmul.f32 %v1534, %v1568
    %1632 = vrot.lane.b32.xlu0 %v1626, 127
    %v1633 = vpop.permute.xlu0 %1632
    %1634 = vrot.lane.b32.xlu0 %v1627, 127
    %v1635 = vpop.permute.xlu0 %1634
    %v1638 = vadd.f32 %v1624, %v1633
    %v1639 = vadd.f32 %v1625, %v1635
    %1642 = vrot.lane.b32.xlu0 %v1628, 126
    %v1643 = vpop.permute.xlu0 %1642
    %1644 = vrot.lane.b32.xlu0 %v1629, 126
    %v1645 = vpop.permute.xlu0 %1644
    %v1648 = vadd.f32 %v1638, %v1643
    %v1649 = vadd.f32 %v1639, %v1645
    %1652 = vrot.lane.b32.xlu0 %v862, 1
    %v1653 = vpop.permute.xlu0 %1652
    %1654 = vrot.lane.b32.xlu0 %v863, 1
    %v1655 = vpop.permute.xlu0 %1654
    %v1658 = vsel %vm1039, 0.0, %v1653
    %v1659 = vsel %vm1039, 0.0, %v1655
    %v1660 = vsel %vm1042, %v1658, 0.0
    %v1661 = vsel %vm1042, %v1659, 0.0
    %v1662 = vmul.f32 %v1569, %v1660
    %v1663 = vmul.f32 %v1569, %v1661
    %v1664 = vmul.f32 %v1572, %v1660
    %v1665 = vmul.f32 %v1572, %v1661
    %v1666 = vmul.f32 %v1575, %v1660
    %v1667 = vmul.f32 %v1575, %v1661
    %1670 = vrot.lane.b32.xlu0 %v1664, 127
    %v1671 = vpop.permute.xlu0 %1670
    %1672 = vrot.lane.b32.xlu0 %v1665, 127
    %v1673 = vpop.permute.xlu0 %1672
    %v1676 = vadd.f32 %v1662, %v1671
    %v1677 = vadd.f32 %v1663, %v1673
    %1680 = vrot.lane.b32.xlu0 %v1666, 126
    %v1681 = vpop.permute.xlu0 %1680
    %1682 = vrot.lane.b32.xlu0 %v1667, 126
    %v1683 = vpop.permute.xlu0 %1682
    %v1686 = vadd.f32 %v1676, %v1681
    %v1687 = vadd.f32 %v1677, %v1683
    %v1688 = vmul.f32 %v1499, %v1660
    %v1689 = vmul.f32 %v1499, %v1661
    %v1690 = vmul.f32 %v1502, %v1660
    %v1691 = vmul.f32 %v1502, %v1661
    %v1692 = vmul.f32 %v1505, %v1660
    %v1693 = vmul.f32 %v1505, %v1661
    %1696 = vrot.lane.b32.xlu0 %v1690, 127
    %v1697 = vpop.permute.xlu0 %1696
    %1698 = vrot.lane.b32.xlu0 %v1691, 127
    %v1699 = vpop.permute.xlu0 %1698
    %v1702 = vadd.f32 %v1688, %v1697
    %v1703 = vadd.f32 %v1689, %v1699
    %1706 = vrot.lane.b32.xlu0 %v1692, 126
    %v1707 = vpop.permute.xlu0 %1706
    %1708 = vrot.lane.b32.xlu0 %v1693, 126
    %v1709 = vpop.permute.xlu0 %1708
    %v1712 = vadd.f32 %v1702, %v1707
    %v1713 = vadd.f32 %v1703, %v1709
    %v1714 = vrot.slane %v862, 1
    %v1715 = vrot.slane %v863, 1
    %1716 = vrot.lane.b32.xlu0 %v1714, 1
    %v1717 = vpop.permute.xlu0 %1716
    %1718 = vrot.lane.b32.xlu0 %v1715, 1
    %v1719 = vpop.permute.xlu0 %1718
    %v1722 = vsel %vm1039, 0.0, %v1717
    %v1723 = vsel %vm1039, 0.0, %v1719
    %v1724 = vsel %vm1042, %v1722, 0.0
    %v1725 = vsel %vm1042, %v1723, 0.0
    %v1726 = vstv %s231
    %v1727 = vmul.f32 %v1726, %v1724
    %v1728 = vmul.f32 %v1726, %v1725
    %v1729 = vstv %s232
    %v1730 = vmul.f32 %v1729, %v1724
    %v1731 = vmul.f32 %v1729, %v1725
    %v1732 = vstv %s233
    %v1733 = vmul.f32 %v1732, %v1724
    %v1734 = vmul.f32 %v1732, %v1725
    %1737 = vrot.lane.b32.xlu0 %v1730, 127
    %v1738 = vpop.permute.xlu0 %1737
    %1739 = vrot.lane.b32.xlu0 %v1731, 127
    %v1740 = vpop.permute.xlu0 %1739
    %v1743 = vadd.f32 %v1727, %v1738
    %v1744 = vadd.f32 %v1728, %v1740
    %1747 = vrot.lane.b32.xlu0 %v1733, 126
    %v1748 = vpop.permute.xlu0 %1747
    %1749 = vrot.lane.b32.xlu0 %v1734, 126
    %v1750 = vpop.permute.xlu0 %1749
    %v1753 = vadd.f32 %v1743, %v1748
    %v1754 = vadd.f32 %v1744, %v1750
    %v1755 = vstv %s228
    %v1756 = vmul.f32 %v1755, %v1724
    %v1757 = vmul.f32 %v1755, %v1725
    %v1758 = vstv %s229
    %v1759 = vmul.f32 %v1758, %v1724
    %v1760 = vmul.f32 %v1758, %v1725
    %v1761 = vstv %s230
    %v1762 = vmul.f32 %v1761, %v1724
    %v1763 = vmul.f32 %v1761, %v1725
    %1766 = vrot.lane.b32.xlu0 %v1759, 127
    %v1767 = vpop.permute.xlu0 %1766
    %1768 = vrot.lane.b32.xlu0 %v1760, 127
    %v1769 = vpop.permute.xlu0 %1768
    %v1772 = vadd.f32 %v1756, %v1767
    %v1773 = vadd.f32 %v1757, %v1769
    %1776 = vrot.lane.b32.xlu0 %v1762, 126
    %v1777 = vpop.permute.xlu0 %1776
    %1778 = vrot.lane.b32.xlu0 %v1763, 126
    %v1779 = vpop.permute.xlu0 %1778
    %v1782 = vadd.f32 %v1772, %v1777
    %v1783 = vadd.f32 %v1773, %v1779
    %v1784 = vrot.slane %v862, 2
    %v1785 = vrot.slane %v863, 2
    %1786 = vrot.lane.b32.xlu0 %v1784, 1
    %v1787 = vpop.permute.xlu0 %1786
    %1788 = vrot.lane.b32.xlu0 %v1785, 1
    %v1789 = vpop.permute.xlu0 %1788
    %v1792 = vsel %vm1039, 0.0, %v1787
    %v1793 = vsel %vm1039, 0.0, %v1789
    %v1794 = vsel %vm1042, %v1792, 0.0
    %v1795 = vsel %vm1042, %v1793, 0.0
    %v1796 = vstv %s234
    %v1797 = vmul.f32 %v1796, %v1794
    %v1798 = vmul.f32 %v1796, %v1795
    %v1799 = vstv %s235
    %v1800 = vmul.f32 %v1799, %v1794
    %v1801 = vmul.f32 %v1799, %v1795
    %v1802 = vstv %s236
    %v1803 = vmul.f32 %v1802, %v1794
    %v1804 = vmul.f32 %v1802, %v1795
    %1807 = vrot.lane.b32.xlu0 %v1800, 127
    %v1808 = vpop.permute.xlu0 %1807
    %1809 = vrot.lane.b32.xlu0 %v1801, 127
    %v1810 = vpop.permute.xlu0 %1809
    %v1813 = vadd.f32 %v1797, %v1808
    %v1814 = vadd.f32 %v1798, %v1810
    %1817 = vrot.lane.b32.xlu0 %v1803, 126
    %v1818 = vpop.permute.xlu0 %1817
    %1819 = vrot.lane.b32.xlu0 %v1804, 126
    %v1820 = vpop.permute.xlu0 %1819
    %v1823 = vadd.f32 %v1813, %v1818
    %v1824 = vadd.f32 %v1814, %v1820
    %v1825 = vmul.f32 %v1726, %v1794
    %v1826 = vmul.f32 %v1726, %v1795
    %v1827 = vmul.f32 %v1729, %v1794
    %v1828 = vmul.f32 %v1729, %v1795
    %v1829 = vmul.f32 %v1732, %v1794
    %v1830 = vmul.f32 %v1732, %v1795
    %1833 = vrot.lane.b32.xlu0 %v1827, 127
    %v1834 = vpop.permute.xlu0 %1833
    %1835 = vrot.lane.b32.xlu0 %v1828, 127
    %v1836 = vpop.permute.xlu0 %1835
    %v1839 = vadd.f32 %v1825, %v1834
    %v1840 = vadd.f32 %v1826, %v1836
    %1843 = vrot.lane.b32.xlu0 %v1829, 126
    %v1844 = vpop.permute.xlu0 %1843
    %1845 = vrot.lane.b32.xlu0 %v1830, 126
    %v1846 = vpop.permute.xlu0 %1845
    %v1849 = vadd.f32 %v1839, %v1844
    %v1850 = vadd.f32 %v1840, %v1846
    %v1851 = vmul.f32 %v1755, %v1794
    %v1852 = vmul.f32 %v1755, %v1795
    %v1853 = vmul.f32 %v1758, %v1794
    %v1854 = vmul.f32 %v1758, %v1795
    %v1855 = vmul.f32 %v1761, %v1794
    %v1856 = vmul.f32 %v1761, %v1795
    %1859 = vrot.lane.b32.xlu0 %v1853, 127
    %v1860 = vpop.permute.xlu0 %1859
    %1861 = vrot.lane.b32.xlu0 %v1854, 127
    %v1862 = vpop.permute.xlu0 %1861
    %v1865 = vadd.f32 %v1851, %v1860
    %v1866 = vadd.f32 %v1852, %v1862
    %1869 = vrot.lane.b32.xlu0 %v1855, 126
    %v1870 = vpop.permute.xlu0 %1869
    %1871 = vrot.lane.b32.xlu0 %v1856, 126
    %v1872 = vpop.permute.xlu0 %1871
    %v1875 = vadd.f32 %v1865, %v1870
    %v1876 = vadd.f32 %v1866, %v1872
    %v1877 = vrot.slane %v862, 3
    %v1878 = vrot.slane %v863, 3
    %1879 = vrot.lane.b32.xlu0 %v1877, 1
    %v1880 = vpop.permute.xlu0 %1879
    %1881 = vrot.lane.b32.xlu0 %v1878, 1
    %v1882 = vpop.permute.xlu0 %1881
    %v1885 = vsel %vm1039, 0.0, %v1880
    %v1886 = vsel %vm1039, 0.0, %v1882
    %v1887 = vsel %vm1042, %v1885, 0.0
    %v1888 = vsel %vm1042, %v1886, 0.0
    %v1889 = vmul.f32 %v1796, %v1887
    %v1890 = vmul.f32 %v1796, %v1888
    %v1891 = vmul.f32 %v1799, %v1887
    %v1892 = vmul.f32 %v1799, %v1888
    %v1893 = vmul.f32 %v1802, %v1887
    %v1894 = vmul.f32 %v1802, %v1888
    %1897 = vrot.lane.b32.xlu0 %v1891, 127
    %v1898 = vpop.permute.xlu0 %1897
    %1899 = vrot.lane.b32.xlu0 %v1892, 127
    %v1900 = vpop.permute.xlu0 %1899
    %v1903 = vadd.f32 %v1889, %v1898
    %v1904 = vadd.f32 %v1890, %v1900
    %1907 = vrot.lane.b32.xlu0 %v1893, 126
    %v1908 = vpop.permute.xlu0 %1907
    %1909 = vrot.lane.b32.xlu0 %v1894, 126
    %v1910 = vpop.permute.xlu0 %1909
    %v1913 = vadd.f32 %v1903, %v1908
    %v1914 = vadd.f32 %v1904, %v1910
    %v1915 = vmul.f32 %v1726, %v1887
    %v1916 = vmul.f32 %v1726, %v1888
    %v1917 = vmul.f32 %v1729, %v1887
    %v1918 = vmul.f32 %v1729, %v1888
    %v1919 = vmul.f32 %v1732, %v1887
    %v1920 = vmul.f32 %v1732, %v1888
    %1923 = vrot.lane.b32.xlu0 %v1917, 127
    %v1924 = vpop.permute.xlu0 %1923
    %1925 = vrot.lane.b32.xlu0 %v1918, 127
    %v1926 = vpop.permute.xlu0 %1925
    %v1929 = vadd.f32 %v1915, %v1924
    %v1930 = vadd.f32 %v1916, %v1926
    %1933 = vrot.lane.b32.xlu0 %v1919, 126
    %v1934 = vpop.permute.xlu0 %1933
    %1935 = vrot.lane.b32.xlu0 %v1920, 126
    %v1936 = vpop.permute.xlu0 %1935
    %v1939 = vadd.f32 %v1929, %v1934
    %v1940 = vadd.f32 %v1930, %v1936
    %v1941 = vrot.slane %v862, 4
    %v1942 = vrot.slane %v863, 4
    %1943 = vrot.lane.b32.xlu0 %v1941, 1
    %v1944 = vpop.permute.xlu0 %1943
    %1945 = vrot.lane.b32.xlu0 %v1942, 1
    %v1946 = vpop.permute.xlu0 %1945
    %v1949 = vsel %vm1039, 0.0, %v1944
    %v1950 = vsel %vm1039, 0.0, %v1946
    %v1951 = vsel %vm1042, %v1949, 0.0
    %v1952 = vsel %vm1042, %v1950, 0.0
    %v1953 = vstv %s240
    %v1954 = vmul.f32 %v1953, %v1951
    %v1955 = vmul.f32 %v1953, %v1952
    %v1956 = vstv %s241
    %v1957 = vmul.f32 %v1956, %v1951
    %v1958 = vmul.f32 %v1956, %v1952
    %v1959 = vstv %s242
    %v1960 = vmul.f32 %v1959, %v1951
    %v1961 = vmul.f32 %v1959, %v1952
    %1964 = vrot.lane.b32.xlu0 %v1957, 127
    %v1965 = vpop.permute.xlu0 %1964
    %1966 = vrot.lane.b32.xlu0 %v1958, 127
    %v1967 = vpop.permute.xlu0 %1966
    %v1970 = vadd.f32 %v1954, %v1965
    %v1971 = vadd.f32 %v1955, %v1967
    %1974 = vrot.lane.b32.xlu0 %v1960, 126
    %v1975 = vpop.permute.xlu0 %1974
    %1976 = vrot.lane.b32.xlu0 %v1961, 126
    %v1977 = vpop.permute.xlu0 %1976
    %v1980 = vadd.f32 %v1970, %v1975
    %v1981 = vadd.f32 %v1971, %v1977
    %v1982 = vstv %s237
    %v1983 = vmul.f32 %v1982, %v1951
    %v1984 = vmul.f32 %v1982, %v1952
    %v1985 = vstv %s238
    %v1986 = vmul.f32 %v1985, %v1951
    %v1987 = vmul.f32 %v1985, %v1952
    %v1988 = vstv %s239
    %v1989 = vmul.f32 %v1988, %v1951
    %v1990 = vmul.f32 %v1988, %v1952
    %1993 = vrot.lane.b32.xlu0 %v1986, 127
    %v1994 = vpop.permute.xlu0 %1993
    %1995 = vrot.lane.b32.xlu0 %v1987, 127
    %v1996 = vpop.permute.xlu0 %1995
    %v1999 = vadd.f32 %v1983, %v1994
    %v2000 = vadd.f32 %v1984, %v1996
    %2003 = vrot.lane.b32.xlu0 %v1989, 126
    %v2004 = vpop.permute.xlu0 %2003
    %2005 = vrot.lane.b32.xlu0 %v1990, 126
    %v2006 = vpop.permute.xlu0 %2005
    %v2009 = vadd.f32 %v1999, %v2004
    %v2010 = vadd.f32 %v2000, %v2006
    %v2011 = vrot.slane %v862, 5
    %v2012 = vrot.slane %v863, 5
    %2013 = vrot.lane.b32.xlu0 %v2011, 1
    %v2014 = vpop.permute.xlu0 %2013
    %2015 = vrot.lane.b32.xlu0 %v2012, 1
    %v2016 = vpop.permute.xlu0 %2015
    %v2019 = vsel %vm1039, 0.0, %v2014
    %v2020 = vsel %vm1039, 0.0, %v2016
    %v2021 = vsel %vm1042, %v2019, 0.0
    %v2022 = vsel %vm1042, %v2020, 0.0
    %v2023 = vstv %s243
    %v2024 = vmul.f32 %v2023, %v2021
    %v2025 = vmul.f32 %v2023, %v2022
    %v2026 = vstv %s244
    %v2027 = vmul.f32 %v2026, %v2021
    %v2028 = vmul.f32 %v2026, %v2022
    %v2029 = vstv %s245
    %v2030 = vmul.f32 %v2029, %v2021
    %v2031 = vmul.f32 %v2029, %v2022
    %2034 = vrot.lane.b32.xlu0 %v2027, 127
    %v2035 = vpop.permute.xlu0 %2034
    %2036 = vrot.lane.b32.xlu0 %v2028, 127
    %v2037 = vpop.permute.xlu0 %2036
    %v2040 = vadd.f32 %v2024, %v2035
    %v2041 = vadd.f32 %v2025, %v2037
    %2044 = vrot.lane.b32.xlu0 %v2030, 126
    %v2045 = vpop.permute.xlu0 %2044
    %2046 = vrot.lane.b32.xlu0 %v2031, 126
    %v2047 = vpop.permute.xlu0 %2046
    %v2050 = vadd.f32 %v2040, %v2045
    %v2051 = vadd.f32 %v2041, %v2047
    %v2052 = vmul.f32 %v1953, %v2021
    %v2053 = vmul.f32 %v1953, %v2022
    %v2054 = vmul.f32 %v1956, %v2021
    %v2055 = vmul.f32 %v1956, %v2022
    %v2056 = vmul.f32 %v1959, %v2021
    %v2057 = vmul.f32 %v1959, %v2022
    %2060 = vrot.lane.b32.xlu0 %v2054, 127
    %v2061 = vpop.permute.xlu0 %2060
    %2062 = vrot.lane.b32.xlu0 %v2055, 127
    %v2063 = vpop.permute.xlu0 %2062
    %v2066 = vadd.f32 %v2052, %v2061
    %v2067 = vadd.f32 %v2053, %v2063
    %2070 = vrot.lane.b32.xlu0 %v2056, 126
    %v2071 = vpop.permute.xlu0 %2070
    %2072 = vrot.lane.b32.xlu0 %v2057, 126
    %v2073 = vpop.permute.xlu0 %2072
    %v2076 = vadd.f32 %v2066, %v2071
    %v2077 = vadd.f32 %v2067, %v2073
    %v2078 = vmul.f32 %v1982, %v2021
    %v2079 = vmul.f32 %v1982, %v2022
    %v2080 = vmul.f32 %v1985, %v2021
    %v2081 = vmul.f32 %v1985, %v2022
    %v2082 = vmul.f32 %v1988, %v2021
    %v2083 = vmul.f32 %v1988, %v2022
    %2086 = vrot.lane.b32.xlu0 %v2080, 127
    %v2087 = vpop.permute.xlu0 %2086
    %2088 = vrot.lane.b32.xlu0 %v2081, 127
    %v2089 = vpop.permute.xlu0 %2088
    %v2092 = vadd.f32 %v2078, %v2087
    %v2093 = vadd.f32 %v2079, %v2089
    %2096 = vrot.lane.b32.xlu0 %v2082, 126
    %v2097 = vpop.permute.xlu0 %2096
    %2098 = vrot.lane.b32.xlu0 %v2083, 126
    %v2099 = vpop.permute.xlu0 %2098
    %v2102 = vadd.f32 %v2092, %v2097
    %v2103 = vadd.f32 %v2093, %v2099
    %v2104 = vrot.slane %v862, 6
    %v2105 = vrot.slane %v863, 6
    %2106 = vrot.lane.b32.xlu0 %v2104, 1
    %v2107 = vpop.permute.xlu0 %2106
    %2108 = vrot.lane.b32.xlu0 %v2105, 1
    %v2109 = vpop.permute.xlu0 %2108
    %v2112 = vsel %vm1039, 0.0, %v2107
    %v2113 = vsel %vm1039, 0.0, %v2109
    %v2114 = vsel %vm1042, %v2112, 0.0
    %v2115 = vsel %vm1042, %v2113, 0.0
    %v2116 = vmul.f32 %v2023, %v2114
    %v2117 = vmul.f32 %v2023, %v2115
    %v2118 = vmul.f32 %v2026, %v2114
    %v2119 = vmul.f32 %v2026, %v2115
    %v2120 = vmul.f32 %v2029, %v2114
    %v2121 = vmul.f32 %v2029, %v2115
    %2124 = vrot.lane.b32.xlu0 %v2118, 127
    %v2125 = vpop.permute.xlu0 %2124
    %2126 = vrot.lane.b32.xlu0 %v2119, 127
    %v2127 = vpop.permute.xlu0 %2126
    %v2130 = vadd.f32 %v2116, %v2125
    %v2131 = vadd.f32 %v2117, %v2127
    %2134 = vrot.lane.b32.xlu0 %v2120, 126
    %v2135 = vpop.permute.xlu0 %2134
    %2136 = vrot.lane.b32.xlu0 %v2121, 126
    %v2137 = vpop.permute.xlu0 %2136
    %v2140 = vadd.f32 %v2130, %v2135
    %v2141 = vadd.f32 %v2131, %v2137
    %v2142 = vmul.f32 %v1953, %v2114
    %v2143 = vmul.f32 %v1953, %v2115
    %v2144 = vmul.f32 %v1956, %v2114
    %v2145 = vmul.f32 %v1956, %v2115
    %v2146 = vmul.f32 %v1959, %v2114
    %v2147 = vmul.f32 %v1959, %v2115
    %2150 = vrot.lane.b32.xlu0 %v2144, 127
    %v2151 = vpop.permute.xlu0 %2150
    %2152 = vrot.lane.b32.xlu0 %v2145, 127
    %v2153 = vpop.permute.xlu0 %2152
    %v2156 = vadd.f32 %v2142, %v2151
    %v2157 = vadd.f32 %v2143, %v2153
    %2160 = vrot.lane.b32.xlu0 %v2146, 126
    %v2161 = vpop.permute.xlu0 %2160
    %2162 = vrot.lane.b32.xlu0 %v2147, 126
    %v2163 = vpop.permute.xlu0 %2162
    %v2166 = vadd.f32 %v2156, %v2161
    %v2167 = vadd.f32 %v2157, %v2163
    %v2168 = vrot.slane %v862, 7
    %v2169 = vrot.slane %v863, 7
    %2170 = vrot.lane.b32.xlu0 %v2168, 1
    %v2171 = vpop.permute.xlu0 %2170
    %2172 = vrot.lane.b32.xlu0 %v2169, 1
    %v2173 = vpop.permute.xlu0 %2172
    %v2176 = vsel %vm1039, 0.0, %v2171
    %v2177 = vsel %vm1039, 0.0, %v2173
    %v2178 = vsel %vm1042, %v2176, 0.0
    %v2179 = vsel %vm1042, %v2177, 0.0
    %v2180 = vstv %s249
    %v2181 = vmul.f32 %v2180, %v2178
    %v2182 = vmul.f32 %v2180, %v2179
    %v2183 = vstv %s250
    %v2184 = vmul.f32 %v2183, %v2178
    %v2185 = vmul.f32 %v2183, %v2179
    %v2186 = vstv %s251
    %v2187 = vmul.f32 %v2186, %v2178
    %v2188 = vmul.f32 %v2186, %v2179
    %2191 = vrot.lane.b32.xlu0 %v2184, 127
    %v2192 = vpop.permute.xlu0 %2191
    %2193 = vrot.lane.b32.xlu0 %v2185, 127
    %v2194 = vpop.permute.xlu0 %2193
    %v2197 = vadd.f32 %v2181, %v2192
    %v2198 = vadd.f32 %v2182, %v2194
    %2201 = vrot.lane.b32.xlu0 %v2187, 126
    %v2202 = vpop.permute.xlu0 %2201
    %2203 = vrot.lane.b32.xlu0 %v2188, 126
    %v2204 = vpop.permute.xlu0 %2203
    %v2207 = vadd.f32 %v2197, %v2202
    %v2208 = vadd.f32 %v2198, %v2204
    %v2209 = vstv %s246
    %v2210 = vmul.f32 %v2209, %v2178
    %v2211 = vmul.f32 %v2209, %v2179
    %v2212 = vstv %s247
    %v2213 = vmul.f32 %v2212, %v2178
    %v2214 = vmul.f32 %v2212, %v2179
    %v2215 = vstv %s248
    %v2216 = vmul.f32 %v2215, %v2178
    %v2217 = vmul.f32 %v2215, %v2179
    %2220 = vrot.lane.b32.xlu0 %v2213, 127
    %v2221 = vpop.permute.xlu0 %2220
    %2222 = vrot.lane.b32.xlu0 %v2214, 127
    %v2223 = vpop.permute.xlu0 %2222
    %v2226 = vadd.f32 %v2210, %v2221
    %v2227 = vadd.f32 %v2211, %v2223
    %2230 = vrot.lane.b32.xlu0 %v2216, 126
    %v2231 = vpop.permute.xlu0 %2230
    %2232 = vrot.lane.b32.xlu0 %v2217, 126
    %v2233 = vpop.permute.xlu0 %2232
    %v2236 = vadd.f32 %v2226, %v2231
    %v2237 = vadd.f32 %v2227, %v2233
    %2240 = vrot.lane.b32.xlu0 %v1029, 1
    %v2241 = vpop.permute.xlu0 %2240
    %2242 = vrot.lane.b32.xlu0 %v1030, 1
    %v2243 = vpop.permute.xlu0 %2242
    %v2246 = vsel %vm1039, 0.0, %v2241
    %v2247 = vsel %vm1039, 0.0, %v2243
    %v2248 = vsel %vm1042, %v2246, 0.0
    %v2249 = vsel %vm1042, %v2247, 0.0
    %v2250 = vstv %s252
    %v2251 = vmul.f32 %v2250, %v2248
    %v2252 = vmul.f32 %v2250, %v2249
    %v2253 = vstv %s253
    %v2254 = vmul.f32 %v2253, %v2248
    %v2255 = vmul.f32 %v2253, %v2249
    %v2256 = vstv %s254
    %v2257 = vmul.f32 %v2256, %v2248
    %v2258 = vmul.f32 %v2256, %v2249
    %2261 = vrot.lane.b32.xlu0 %v2254, 127
    %v2262 = vpop.permute.xlu0 %2261
    %2263 = vrot.lane.b32.xlu0 %v2255, 127
    %v2264 = vpop.permute.xlu0 %2263
    %v2267 = vadd.f32 %v2251, %v2262
    %v2268 = vadd.f32 %v2252, %v2264
    %2271 = vrot.lane.b32.xlu0 %v2257, 126
    %v2272 = vpop.permute.xlu0 %2271
    %2273 = vrot.lane.b32.xlu0 %v2258, 126
    %v2274 = vpop.permute.xlu0 %2273
    %v2277 = vadd.f32 %v2267, %v2272
    %v2278 = vadd.f32 %v2268, %v2274
    %v2279 = vmul.f32 %v2180, %v2248
    %v2280 = vmul.f32 %v2180, %v2249
    %v2281 = vmul.f32 %v2183, %v2248
    %v2282 = vmul.f32 %v2183, %v2249
    %v2283 = vmul.f32 %v2186, %v2248
    %v2284 = vmul.f32 %v2186, %v2249
    %2287 = vrot.lane.b32.xlu0 %v2281, 127
    %v2288 = vpop.permute.xlu0 %2287
    %2289 = vrot.lane.b32.xlu0 %v2282, 127
    %v2290 = vpop.permute.xlu0 %2289
    %v2293 = vadd.f32 %v2279, %v2288
    %v2294 = vadd.f32 %v2280, %v2290
    %2297 = vrot.lane.b32.xlu0 %v2283, 126
    %v2298 = vpop.permute.xlu0 %2297
    %2299 = vrot.lane.b32.xlu0 %v2284, 126
    %v2300 = vpop.permute.xlu0 %2299
    %v2303 = vadd.f32 %v2293, %v2298
    %v2304 = vadd.f32 %v2294, %v2300
    %v2305 = vmul.f32 %v2209, %v2248
    %v2306 = vmul.f32 %v2209, %v2249
    %v2307 = vmul.f32 %v2212, %v2248
    %v2308 = vmul.f32 %v2212, %v2249
    %v2309 = vmul.f32 %v2215, %v2248
    %v2310 = vmul.f32 %v2215, %v2249
    %2313 = vrot.lane.b32.xlu0 %v2307, 127
    %v2314 = vpop.permute.xlu0 %2313
    %2315 = vrot.lane.b32.xlu0 %v2308, 127
    %v2316 = vpop.permute.xlu0 %2315
    %v2319 = vadd.f32 %v2305, %v2314
    %v2320 = vadd.f32 %v2306, %v2316
    %2323 = vrot.lane.b32.xlu0 %v2309, 126
    %v2324 = vpop.permute.xlu0 %2323
    %2325 = vrot.lane.b32.xlu0 %v2310, 126
    %v2326 = vpop.permute.xlu0 %2325
    %v2329 = vadd.f32 %v2319, %v2324
    %v2330 = vadd.f32 %v2320, %v2326
    %v2331 = vrot.slane %v1029, 1
    %v2332 = vrot.slane %v1030, 1
    %2333 = vrot.lane.b32.xlu0 %v2331, 1
    %v2334 = vpop.permute.xlu0 %2333
    %2335 = vrot.lane.b32.xlu0 %v2332, 1
    %v2336 = vpop.permute.xlu0 %2335
    %v2339 = vsel %vm1039, 0.0, %v2334
    %v2340 = vsel %vm1039, 0.0, %v2336
    %v2341 = vsel %vm1042, %v2339, 0.0
    %v2342 = vsel %vm1042, %v2340, 0.0
    %v2343 = vmul.f32 %v2250, %v2341
    %v2344 = vmul.f32 %v2250, %v2342
    %v2345 = vmul.f32 %v2253, %v2341
    %v2346 = vmul.f32 %v2253, %v2342
    %v2347 = vmul.f32 %v2256, %v2341
    %v2348 = vmul.f32 %v2256, %v2342
    %2351 = vrot.lane.b32.xlu0 %v2345, 127
    %v2352 = vpop.permute.xlu0 %2351
    %2353 = vrot.lane.b32.xlu0 %v2346, 127
    %v2354 = vpop.permute.xlu0 %2353
    %v2357 = vadd.f32 %v2343, %v2352
    %v2358 = vadd.f32 %v2344, %v2354
    %2361 = vrot.lane.b32.xlu0 %v2347, 126
    %v2362 = vpop.permute.xlu0 %2361
    %2363 = vrot.lane.b32.xlu0 %v2348, 126
    %v2364 = vpop.permute.xlu0 %2363
    %v2367 = vadd.f32 %v2357, %v2362
    %v2368 = vadd.f32 %v2358, %v2364
    %v2369 = vmul.f32 %v2180, %v2341
    %v2370 = vmul.f32 %v2180, %v2342
    %v2371 = vmul.f32 %v2183, %v2341
    %v2372 = vmul.f32 %v2183, %v2342
    %v2373 = vmul.f32 %v2186, %v2341
    %v2374 = vmul.f32 %v2186, %v2342
    %2377 = vrot.lane.b32.xlu0 %v2371, 127
    %v2378 = vpop.permute.xlu0 %2377
    %2379 = vrot.lane.b32.xlu0 %v2372, 127
    %v2380 = vpop.permute.xlu0 %2379
    %v2383 = vadd.f32 %v2369, %v2378
    %v2384 = vadd.f32 %v2370, %v2380
    %2387 = vrot.lane.b32.xlu0 %v2373, 126
    %v2388 = vpop.permute.xlu0 %2387
    %2389 = vrot.lane.b32.xlu0 %v2374, 126
    %v2390 = vpop.permute.xlu0 %2389
    %v2393 = vadd.f32 %v2383, %v2388
    %v2394 = vadd.f32 %v2384, %v2390
    %v2395 = vrot.slane %v1029, 2
    %v2396 = vrot.slane %v1030, 2
    %2397 = vrot.lane.b32.xlu0 %v2395, 1
    %v2398 = vpop.permute.xlu0 %2397
    %2399 = vrot.lane.b32.xlu0 %v2396, 1
    %v2400 = vpop.permute.xlu0 %2399
    %v2403 = vsel %vm1039, 0.0, %v2398
    %v2404 = vsel %vm1039, 0.0, %v2400
    %v2405 = vsel %vm1042, %v2403, 0.0
    %v2406 = vsel %vm1042, %v2404, 0.0
    %v2407 = vstv %s258
    %v2408 = vmul.f32 %v2407, %v2405
    %v2409 = vmul.f32 %v2407, %v2406
    %v2410 = vstv %s259
    %v2411 = vmul.f32 %v2410, %v2405
    %v2412 = vmul.f32 %v2410, %v2406
    %v2413 = vstv %s260
    %v2414 = vmul.f32 %v2413, %v2405
    %v2415 = vmul.f32 %v2413, %v2406
    %2418 = vrot.lane.b32.xlu0 %v2411, 127
    %v2419 = vpop.permute.xlu0 %2418
    %2420 = vrot.lane.b32.xlu0 %v2412, 127
    %v2421 = vpop.permute.xlu0 %2420
    %v2424 = vadd.f32 %v2408, %v2419
    %v2425 = vadd.f32 %v2409, %v2421
    %2428 = vrot.lane.b32.xlu0 %v2414, 126
    %v2429 = vpop.permute.xlu0 %2428
    %2430 = vrot.lane.b32.xlu0 %v2415, 126
    %v2431 = vpop.permute.xlu0 %2430
    %v2434 = vadd.f32 %v2424, %v2429
    %v2435 = vadd.f32 %v2425, %v2431
    %v2436 = vstv %s255
    %v2437 = vmul.f32 %v2436, %v2405
    %v2438 = vmul.f32 %v2436, %v2406
    %v2439 = vstv %s256
    %v2440 = vmul.f32 %v2439, %v2405
    %v2441 = vmul.f32 %v2439, %v2406
    %v2442 = vstv %s257
    %v2443 = vmul.f32 %v2442, %v2405
    %v2444 = vmul.f32 %v2442, %v2406
    %2447 = vrot.lane.b32.xlu0 %v2440, 127
    %v2448 = vpop.permute.xlu0 %2447
    %2449 = vrot.lane.b32.xlu0 %v2441, 127
    %v2450 = vpop.permute.xlu0 %2449
    %v2453 = vadd.f32 %v2437, %v2448
    %v2454 = vadd.f32 %v2438, %v2450
    %2457 = vrot.lane.b32.xlu0 %v2443, 126
    %v2458 = vpop.permute.xlu0 %2457
    %2459 = vrot.lane.b32.xlu0 %v2444, 126
    %v2460 = vpop.permute.xlu0 %2459
    %v2463 = vadd.f32 %v2453, %v2458
    %v2464 = vadd.f32 %v2454, %v2460
    %v2465 = vrot.slane %v1029, 3
    %v2466 = vrot.slane %v1030, 3
    %2467 = vrot.lane.b32.xlu0 %v2465, 1
    %v2468 = vpop.permute.xlu0 %2467
    %2469 = vrot.lane.b32.xlu0 %v2466, 1
    %v2470 = vpop.permute.xlu0 %2469
    %v2473 = vsel %vm1039, 0.0, %v2468
    %v2474 = vsel %vm1039, 0.0, %v2470
    %v2475 = vsel %vm1042, %v2473, 0.0
    %v2476 = vsel %vm1042, %v2474, 0.0
    %v2477 = vstv %s261
    %v2478 = vmul.f32 %v2477, %v2475
    %v2479 = vmul.f32 %v2477, %v2476
    %v2480 = vstv %s262
    %v2481 = vmul.f32 %v2480, %v2475
    %v2482 = vmul.f32 %v2480, %v2476
    %v2483 = vstv %s263
    %v2484 = vmul.f32 %v2483, %v2475
    %v2485 = vmul.f32 %v2483, %v2476
    %2488 = vrot.lane.b32.xlu0 %v2481, 127
    %v2489 = vpop.permute.xlu0 %2488
    %2490 = vrot.lane.b32.xlu0 %v2482, 127
    %v2491 = vpop.permute.xlu0 %2490
    %v2494 = vadd.f32 %v2478, %v2489
    %v2495 = vadd.f32 %v2479, %v2491
    %2498 = vrot.lane.b32.xlu0 %v2484, 126
    %v2499 = vpop.permute.xlu0 %2498
    %2500 = vrot.lane.b32.xlu0 %v2485, 126
    %v2501 = vpop.permute.xlu0 %2500
    %v2504 = vadd.f32 %v2494, %v2499
    %v2505 = vadd.f32 %v2495, %v2501
    %v2506 = vmul.f32 %v2407, %v2475
    %v2507 = vmul.f32 %v2407, %v2476
    %v2508 = vmul.f32 %v2410, %v2475
    %v2509 = vmul.f32 %v2410, %v2476
    %v2510 = vmul.f32 %v2413, %v2475
    %v2511 = vmul.f32 %v2413, %v2476
    %2514 = vrot.lane.b32.xlu0 %v2508, 127
    %v2515 = vpop.permute.xlu0 %2514
    %2516 = vrot.lane.b32.xlu0 %v2509, 127
    %v2517 = vpop.permute.xlu0 %2516
    %v2520 = vadd.f32 %v2506, %v2515
    %v2521 = vadd.f32 %v2507, %v2517
    %2524 = vrot.lane.b32.xlu0 %v2510, 126
    %v2525 = vpop.permute.xlu0 %2524
    %2526 = vrot.lane.b32.xlu0 %v2511, 126
    %v2527 = vpop.permute.xlu0 %2526
    %v2530 = vadd.f32 %v2520, %v2525
    %v2531 = vadd.f32 %v2521, %v2527
    %v2532 = vmul.f32 %v2436, %v2475
    %v2533 = vmul.f32 %v2436, %v2476
    %v2534 = vmul.f32 %v2439, %v2475
    %v2535 = vmul.f32 %v2439, %v2476
    %v2536 = vmul.f32 %v2442, %v2475
    %v2537 = vmul.f32 %v2442, %v2476
    %2540 = vrot.lane.b32.xlu0 %v2534, 127
    %v2541 = vpop.permute.xlu0 %2540
    %2542 = vrot.lane.b32.xlu0 %v2535, 127
    %v2543 = vpop.permute.xlu0 %2542
    %v2546 = vadd.f32 %v2532, %v2541
    %v2547 = vadd.f32 %v2533, %v2543
    %2550 = vrot.lane.b32.xlu0 %v2536, 126
    %v2551 = vpop.permute.xlu0 %2550
    %2552 = vrot.lane.b32.xlu0 %v2537, 126
    %v2553 = vpop.permute.xlu0 %2552
    %v2556 = vadd.f32 %v2546, %v2551
    %v2557 = vadd.f32 %v2547, %v2553
    %v2558 = vrot.slane %v1029, 4
    %v2559 = vrot.slane %v1030, 4
    %2560 = vrot.lane.b32.xlu0 %v2558, 1
    %v2561 = vpop.permute.xlu0 %2560
    %2562 = vrot.lane.b32.xlu0 %v2559, 1
    %v2563 = vpop.permute.xlu0 %2562
    %v2566 = vsel %vm1039, 0.0, %v2561
    %v2567 = vsel %vm1039, 0.0, %v2563
    %v2568 = vsel %vm1042, %v2566, 0.0
    %v2569 = vsel %vm1042, %v2567, 0.0
    %v2570 = vmul.f32 %v2477, %v2568
    %v2571 = vmul.f32 %v2477, %v2569
    %v2572 = vmul.f32 %v2480, %v2568
    %v2573 = vmul.f32 %v2480, %v2569
    %v2574 = vmul.f32 %v2483, %v2568
    %v2575 = vmul.f32 %v2483, %v2569
    %2578 = vrot.lane.b32.xlu0 %v2572, 127
    %v2579 = vpop.permute.xlu0 %2578
    %2580 = vrot.lane.b32.xlu0 %v2573, 127
    %v2581 = vpop.permute.xlu0 %2580
    %v2584 = vadd.f32 %v2570, %v2579
    %v2585 = vadd.f32 %v2571, %v2581
    %2588 = vrot.lane.b32.xlu0 %v2574, 126
    %v2589 = vpop.permute.xlu0 %2588
    %2590 = vrot.lane.b32.xlu0 %v2575, 126
    %v2591 = vpop.permute.xlu0 %2590
    %v2594 = vadd.f32 %v2584, %v2589
    %v2595 = vadd.f32 %v2585, %v2591
    %v2596 = vmul.f32 %v2407, %v2568
    %v2597 = vmul.f32 %v2407, %v2569
    %v2598 = vmul.f32 %v2410, %v2568
    %v2599 = vmul.f32 %v2410, %v2569
    %v2600 = vmul.f32 %v2413, %v2568
    %v2601 = vmul.f32 %v2413, %v2569
    %2604 = vrot.lane.b32.xlu0 %v2598, 127
    %v2605 = vpop.permute.xlu0 %2604
    %2606 = vrot.lane.b32.xlu0 %v2599, 127
    %v2607 = vpop.permute.xlu0 %2606
    %v2610 = vadd.f32 %v2596, %v2605
    %v2611 = vadd.f32 %v2597, %v2607
    %2614 = vrot.lane.b32.xlu0 %v2600, 126
    %v2615 = vpop.permute.xlu0 %2614
    %2616 = vrot.lane.b32.xlu0 %v2601, 126
    %v2617 = vpop.permute.xlu0 %2616
    %v2620 = vadd.f32 %v2610, %v2615
    %v2621 = vadd.f32 %v2611, %v2617
    %v2622 = vrot.slane %v1029, 5
    %v2623 = vrot.slane %v1030, 5
    %2624 = vrot.lane.b32.xlu0 %v2622, 1
    %v2625 = vpop.permute.xlu0 %2624
    %2626 = vrot.lane.b32.xlu0 %v2623, 1
    %v2627 = vpop.permute.xlu0 %2626
    %v2630 = vsel %vm1039, 0.0, %v2625
    %v2631 = vsel %vm1039, 0.0, %v2627
    %v2632 = vsel %vm1042, %v2630, 0.0
    %v2633 = vsel %vm1042, %v2631, 0.0
    %v2634 = vstv %s267
    %v2635 = vmul.f32 %v2634, %v2632
    %v2636 = vmul.f32 %v2634, %v2633
    %v2637 = vstv %s268
    %v2638 = vmul.f32 %v2637, %v2632
    %v2639 = vmul.f32 %v2637, %v2633
    %v2640 = vstv %s269
    %v2641 = vmul.f32 %v2640, %v2632
    %v2642 = vmul.f32 %v2640, %v2633
    %2645 = vrot.lane.b32.xlu0 %v2638, 127
    %v2646 = vpop.permute.xlu0 %2645
    %2647 = vrot.lane.b32.xlu0 %v2639, 127
    %v2648 = vpop.permute.xlu0 %2647
    %v2651 = vadd.f32 %v2635, %v2646
    %v2652 = vadd.f32 %v2636, %v2648
    %2655 = vrot.lane.b32.xlu0 %v2641, 126
    %v2656 = vpop.permute.xlu0 %2655
    %2657 = vrot.lane.b32.xlu0 %v2642, 126
    %v2658 = vpop.permute.xlu0 %2657
    %v2661 = vadd.f32 %v2651, %v2656
    %v2662 = vadd.f32 %v2652, %v2658
    %v2663 = vstv %s264
    %v2664 = vmul.f32 %v2663, %v2632
    %v2665 = vmul.f32 %v2663, %v2633
    %v2666 = vstv %s265
    %v2667 = vmul.f32 %v2666, %v2632
    %v2668 = vmul.f32 %v2666, %v2633
    %v2669 = vstv %s266
    %v2670 = vmul.f32 %v2669, %v2632
    %v2671 = vmul.f32 %v2669, %v2633
    %2674 = vrot.lane.b32.xlu0 %v2667, 127
    %v2675 = vpop.permute.xlu0 %2674
    %2676 = vrot.lane.b32.xlu0 %v2668, 127
    %v2677 = vpop.permute.xlu0 %2676
    %v2680 = vadd.f32 %v2664, %v2675
    %v2681 = vadd.f32 %v2665, %v2677
    %2684 = vrot.lane.b32.xlu0 %v2670, 126
    %v2685 = vpop.permute.xlu0 %2684
    %2686 = vrot.lane.b32.xlu0 %v2671, 126
    %v2687 = vpop.permute.xlu0 %2686
    %v2690 = vadd.f32 %v2680, %v2685
    %v2691 = vadd.f32 %v2681, %v2687
    %v2692 = vrot.slane %v1029, 6
    %v2693 = vrot.slane %v1030, 6
    %2694 = vrot.lane.b32.xlu0 %v2692, 1
    %v2695 = vpop.permute.xlu0 %2694
    %2696 = vrot.lane.b32.xlu0 %v2693, 1
    %v2697 = vpop.permute.xlu0 %2696
    %v2700 = vsel %vm1039, 0.0, %v2695
    %v2701 = vsel %vm1039, 0.0, %v2697
    %v2702 = vsel %vm1042, %v2700, 0.0
    %v2703 = vsel %vm1042, %v2701, 0.0
    %v2704 = vstv %s270
    %v2705 = vmul.f32 %v2704, %v2702
    %v2706 = vmul.f32 %v2704, %v2703
    %v2707 = vstv %s271
    %v2708 = vmul.f32 %v2707, %v2702
    %v2709 = vmul.f32 %v2707, %v2703
    %v2710 = vstv %s272
    %v2711 = vmul.f32 %v2710, %v2702
    %v2712 = vmul.f32 %v2710, %v2703
    %2715 = vrot.lane.b32.xlu0 %v2708, 127
    %v2716 = vpop.permute.xlu0 %2715
    %2717 = vrot.lane.b32.xlu0 %v2709, 127
    %v2718 = vpop.permute.xlu0 %2717
    %v2721 = vadd.f32 %v2705, %v2716
    %v2722 = vadd.f32 %v2706, %v2718
    %2725 = vrot.lane.b32.xlu0 %v2711, 126
    %v2726 = vpop.permute.xlu0 %2725
    %2727 = vrot.lane.b32.xlu0 %v2712, 126
    %v2728 = vpop.permute.xlu0 %2727
    %v2731 = vadd.f32 %v2721, %v2726
    %v2732 = vadd.f32 %v2722, %v2728
    %v2733 = vmul.f32 %v2634, %v2702
    %v2734 = vmul.f32 %v2634, %v2703
    %v2735 = vmul.f32 %v2637, %v2702
    %v2736 = vmul.f32 %v2637, %v2703
    %v2737 = vmul.f32 %v2640, %v2702
    %v2738 = vmul.f32 %v2640, %v2703
    %2741 = vrot.lane.b32.xlu0 %v2735, 127
    %v2742 = vpop.permute.xlu0 %2741
    %2743 = vrot.lane.b32.xlu0 %v2736, 127
    %v2744 = vpop.permute.xlu0 %2743
    %v2747 = vadd.f32 %v2733, %v2742
    %v2748 = vadd.f32 %v2734, %v2744
    %2751 = vrot.lane.b32.xlu0 %v2737, 126
    %v2752 = vpop.permute.xlu0 %2751
    %2753 = vrot.lane.b32.xlu0 %v2738, 126
    %v2754 = vpop.permute.xlu0 %2753
    %v2757 = vadd.f32 %v2747, %v2752
    %v2758 = vadd.f32 %v2748, %v2754
    %v2759 = vmul.f32 %v2663, %v2702
    %v2760 = vmul.f32 %v2663, %v2703
    %v2761 = vmul.f32 %v2666, %v2702
    %v2762 = vmul.f32 %v2666, %v2703
    %v2763 = vmul.f32 %v2669, %v2702
    %v2764 = vmul.f32 %v2669, %v2703
    %2767 = vrot.lane.b32.xlu0 %v2761, 127
    %v2768 = vpop.permute.xlu0 %2767
    %2769 = vrot.lane.b32.xlu0 %v2762, 127
    %v2770 = vpop.permute.xlu0 %2769
    %v2773 = vadd.f32 %v2759, %v2768
    %v2774 = vadd.f32 %v2760, %v2770
    %2777 = vrot.lane.b32.xlu0 %v2763, 126
    %v2778 = vpop.permute.xlu0 %2777
    %2779 = vrot.lane.b32.xlu0 %v2764, 126
    %v2780 = vpop.permute.xlu0 %2779
    %v2783 = vadd.f32 %v2773, %v2778
    %v2784 = vadd.f32 %v2774, %v2780
    %v2785 = vrot.slane %v1029, 7
    %v2786 = vrot.slane %v1030, 7
    %2787 = vrot.lane.b32.xlu0 %v2785, 1
    %v2788 = vpop.permute.xlu0 %2787
    %2789 = vrot.lane.b32.xlu0 %v2786, 1
    %v2790 = vpop.permute.xlu0 %2789
    %v2793 = vsel %vm1039, 0.0, %v2788
    %v2794 = vsel %vm1039, 0.0, %v2790
    %v2795 = vsel %vm1042, %v2793, 0.0
    %v2796 = vsel %vm1042, %v2794, 0.0
    %v2797 = vmul.f32 %v2704, %v2795
    %v2798 = vmul.f32 %v2704, %v2796
    %v2799 = vmul.f32 %v2707, %v2795
    %v2800 = vmul.f32 %v2707, %v2796
    %v2801 = vmul.f32 %v2710, %v2795
    %v2802 = vmul.f32 %v2710, %v2796
    %2805 = vrot.lane.b32.xlu0 %v2799, 127
    %v2806 = vpop.permute.xlu0 %2805
    %2807 = vrot.lane.b32.xlu0 %v2800, 127
    %v2808 = vpop.permute.xlu0 %2807
    %v2811 = vadd.f32 %v2797, %v2806
    %v2812 = vadd.f32 %v2798, %v2808
    %2815 = vrot.lane.b32.xlu0 %v2801, 126
    %v2816 = vpop.permute.xlu0 %2815
    %2817 = vrot.lane.b32.xlu0 %v2802, 126
    %v2818 = vpop.permute.xlu0 %2817
    %v2821 = vadd.f32 %v2811, %v2816
    %v2822 = vadd.f32 %v2812, %v2818
    %v2823 = vmul.f32 %v2634, %v2795
    %v2824 = vmul.f32 %v2634, %v2796
    %v2825 = vmul.f32 %v2637, %v2795
    %v2826 = vmul.f32 %v2637, %v2796
    %v2827 = vmul.f32 %v2640, %v2795
    %v2828 = vmul.f32 %v2640, %v2796
    %2831 = vrot.lane.b32.xlu0 %v2825, 127
    %v2832 = vpop.permute.xlu0 %2831
    %2833 = vrot.lane.b32.xlu0 %v2826, 127
    %v2834 = vpop.permute.xlu0 %2833
    %v2837 = vadd.f32 %v2823, %v2832
    %v2838 = vadd.f32 %v2824, %v2834
    %2841 = vrot.lane.b32.xlu0 %v2827, 126
    %v2842 = vpop.permute.xlu0 %2841
    %2843 = vrot.lane.b32.xlu0 %v2828, 126
    %v2844 = vpop.permute.xlu0 %2843
    %v2847 = vadd.f32 %v2837, %v2842
    %v2848 = vadd.f32 %v2838, %v2844
    %v2849 = vld [vmem:[%s14] sm:$0x7]
    %v2850 = vadd.f32 %v1072, %v1142
    %v2851 = vadd.f32 %v1073, %v1143
    %v2852 = vadd.f32 %v1299, %v1369
    %v2853 = vadd.f32 %v1300, %v1370
    %v2854 = vadd.f32 %v1526, %v1596
    %v2855 = vadd.f32 %v1527, %v1597
    %v2856 = vadd.f32 %v1753, %v1823
    %v2857 = vadd.f32 %v1754, %v1824
    %v2858 = vadd.f32 %v1980, %v2050
    %v2859 = vadd.f32 %v1981, %v2051
    %v2860 = vadd.f32 %v2207, %v2277
    %v2861 = vadd.f32 %v2208, %v2278
    %v2862 = vadd.f32 %v2434, %v2504
    %v2863 = vadd.f32 %v2435, %v2505
    %v2864 = vadd.f32 %v2661, %v2731
    %v2865 = vadd.f32 %v2662, %v2732
    %v2866 = vadd.f32 %v2850, %v2852
    %v2867 = vadd.f32 %v2851, %v2853
    %v2868 = vadd.f32 %v2854, %v2856
    %v2869 = vadd.f32 %v2855, %v2857
    %v2870 = vadd.f32 %v2858, %v2860
    %v2871 = vadd.f32 %v2859, %v2861
    %v2872 = vadd.f32 %v2862, %v2864
    %v2873 = vadd.f32 %v2863, %v2865
    %v2874 = vadd.f32 %v2866, %v2868
    %v2875 = vadd.f32 %v2867, %v2869
    %v2876 = vadd.f32 %v2870, %v2872
    %v2877 = vadd.f32 %v2871, %v2873
    %v2878 = vadd.f32 %v2874, %v2876
    %v2879 = vadd.f32 %v2875, %v2877
    %s2880 = sld [smem:[#allocation4]]
    %v2881 = vstv %s2880
    %v2882 = vadd.f32 %v2878, %v2881
    %v2883 = vadd.f32 %v2879, %v2881
    %vm2884 = vcmp.ge.f32.partialorder %v2882, 0.0
    %vm2885 = vcmp.ge.f32.partialorder %v2883, 0.0
    %v2886 = vstv %s173
    %v2887 = vmul.f32 %v2886, %v2882
    %v2888 = vmul.f32 %v2886, %v2883
    %v2889 = vsel %vm2884, %v2882, %v2887
    %v2890 = vsel %vm2885, %v2883, %v2888
    %v2891 = vmul.f32 %v2849, %v2889
    %v2892 = vmul.f32 %v2849, %v2890
    %v2893 = vadd.f32 %v1101, %v1168
    %v2894 = vadd.f32 %v1102, %v1169
    %v2895 = vadd.f32 %v1232, %v1328
    %v2896 = vadd.f32 %v1233, %v1329
    %v2897 = vadd.f32 %v1395, %v1459
    %v2898 = vadd.f32 %v1396, %v1460
    %v2899 = vadd.f32 %v1555, %v1622
    %v2900 = vadd.f32 %v1556, %v1623
    %v2901 = vadd.f32 %v1686, %v1782
    %v2902 = vadd.f32 %v1687, %v1783
    %v2903 = vadd.f32 %v1849, %v1913
    %v2904 = vadd.f32 %v1850, %v1914
    %v2905 = vadd.f32 %v2009, %v2076
    %v2906 = vadd.f32 %v2010, %v2077
    %v2907 = vadd.f32 %v2140, %v2236
    %v2908 = vadd.f32 %v2141, %v2237
    %v2909 = vadd.f32 %v2303, %v2367
    %v2910 = vadd.f32 %v2304, %v2368
    %v2911 = vadd.f32 %v2463, %v2530
    %v2912 = vadd.f32 %v2464, %v2531
    %v2913 = vadd.f32 %v2594, %v2690
    %v2914 = vadd.f32 %v2595, %v2691
    %v2915 = vadd.f32 %v2757, %v2821
    %v2916 = vadd.f32 %v2758, %v2822
    %v2917 = vadd.f32 %v2893, %v2895
    %v2918 = vadd.f32 %v2894, %v2896
    %v2919 = vadd.f32 %v2897, %v2899
    %v2920 = vadd.f32 %v2898, %v2900
    %v2921 = vadd.f32 %v2901, %v2903
    %v2922 = vadd.f32 %v2902, %v2904
    %v2923 = vadd.f32 %v2905, %v2907
    %v2924 = vadd.f32 %v2906, %v2908
    %v2925 = vadd.f32 %v2909, %v2911
    %v2926 = vadd.f32 %v2910, %v2912
    %v2927 = vadd.f32 %v2913, %v2915
    %v2928 = vadd.f32 %v2914, %v2916
    %v2929 = vadd.f32 %v2917, %v2919
    %v2930 = vadd.f32 %v2918, %v2920
    %v2931 = vadd.f32 %v2921, %v2923
    %v2932 = vadd.f32 %v2922, %v2924
    %v2933 = vadd.f32 %v2925, %v2927
    %v2934 = vadd.f32 %v2926, %v2928
    %v2935 = vadd.f32 %v2929, %v2931
    %v2936 = vadd.f32 %v2930, %v2932
    %v2937 = vadd.f32 %v2935, %v2933
    %v2938 = vadd.f32 %v2936, %v2934
    %v2939 = vadd.f32 %v2937, %v2881
    %v2940 = vadd.f32 %v2938, %v2881
    %vm2941 = vcmp.ge.f32.partialorder %v2939, 0.0
    %vm2942 = vcmp.ge.f32.partialorder %v2940, 0.0
    %v2943 = vmul.f32 %v2886, %v2939
    %v2944 = vmul.f32 %v2886, %v2940
    %v2945 = vsel %vm2941, %v2939, %v2943
    %v2946 = vsel %vm2942, %v2940, %v2944
    %v2949 = vrot.slane %v2945, 7
    %v2950 = vrot.slane %v2946, 7
    %v2953 = vmul.f32 %v2849, %v2949
    %v2954 = vmul.f32 %v2849, %v2950
    %v2957 = vrot.slane %v2953, 1
    %v2958 = vrot.slane %v2954, 1
    %v2961 = vadd.f32 %v2891, %v2957
    %v2962 = vadd.f32 %v2892, %v2958
    %v2963 = vadd.f32 %v1194, %v1258
    %v2964 = vadd.f32 %v1195, %v1259
    %v2965 = vadd.f32 %v1421, %v1485
    %v2966 = vadd.f32 %v1422, %v1486
    %v2967 = vadd.f32 %v1648, %v1712
    %v2968 = vadd.f32 %v1649, %v1713
    %v2969 = vadd.f32 %v1875, %v1939
    %v2970 = vadd.f32 %v1876, %v1940
    %v2971 = vadd.f32 %v2102, %v2166
    %v2972 = vadd.f32 %v2103, %v2167
    %v2973 = vadd.f32 %v2329, %v2393
    %v2974 = vadd.f32 %v2330, %v2394
    %v2975 = vadd.f32 %v2556, %v2620
    %v2976 = vadd.f32 %v2557, %v2621
    %v2977 = vadd.f32 %v2783, %v2847
    %v2978 = vadd.f32 %v2784, %v2848
    %v2979 = vadd.f32 %v2963, %v2965
    %v2980 = vadd.f32 %v2964, %v2966
    %v2981 = vadd.f32 %v2967, %v2969
    %v2982 = vadd.f32 %v2968, %v2970
    %v2983 = vadd.f32 %v2971, %v2973
    %v2984 = vadd.f32 %v2972, %v2974
    %v2985 = vadd.f32 %v2975, %v2977
    %v2986 = vadd.f32 %v2976, %v2978
    %v2987 = vadd.f32 %v2979, %v2981
    %v2988 = vadd.f32 %v2980, %v2982
    %v2989 = vadd.f32 %v2983, %v2985
    %v2990 = vadd.f32 %v2984, %v2986
    %v2991 = vadd.f32 %v2987, %v2989
    %v2992 = vadd.f32 %v2988, %v2990
    %v2993 = vadd.f32 %v2991, %v2881
    %v2994 = vadd.f32 %v2992, %v2881
    %vm2995 = vcmp.ge.f32.partialorder %v2993, 0.0
    %vm2996 = vcmp.ge.f32.partialorder %v2994, 0.0
    %v2997 = vmul.f32 %v2886, %v2993
    %v2998 = vmul.f32 %v2886, %v2994
    %v2999 = vsel %vm2995, %v2993, %v2997
    %v3000 = vsel %vm2996, %v2994, %v2998
    %v3003 = vrot.slane %v2999, 6
    %v3004 = vrot.slane %v3000, 6
    %v3007 = vmul.f32 %v2849, %v3003
    %v3008 = vmul.f32 %v2849, %v3004
    %v3011 = vrot.slane %v3007, 2
    %v3012 = vrot.slane %v3008, 2
    %v3015 = vadd.f32 %v2961, %v3011
    %v3016 = vadd.f32 %v2962, %v3012
    %vm3017 = vcmask 32768
    %v3018 = vsel %vm3017, %v3015, 0.0
    %3019 = vadd.xlane.f32.xlu0 %v3018
    %v3020 = vpop.xlane.xlu0 %3019
    %v3021 = vsel %vm3017, %v3016, 0.0
    %3022 = vadd.xlane.f32.xlu0 %v3021
    %v3023 = vpop.xlane.xlu0 %3022
    %s3024 = sld [smem:[#allocation6]]
    %v3025 = vstv %s3024
    %v3026 = vadd.f32 %v3020, %v3025
    %v3027 = vadd.f32 %v3023, %v3025
    %vm3028 = vcmask 0
    %3029 = vst.msk [vmem:[%s16] sm:$0x1] %vm3028, %v3026
    %3030 = vst.msk [vmem:[%s16 + $0x1] sm:$0x1] %vm3028, %v3027
    // Predicated region
    $region94: #{tpu_custom_call.1} parent=1 // pred_check
      _
    $region95: #{tpu_custom_call.1} parent=1 // pred_check_branch
      %3032 = sbr.rel (0) target = $region97
    $region96: #{tpu_custom_call.1} parent=1 // pred_region
      _
    $region97: #{tpu_custom_call.1} parent=1 // pred_fallthru
      _
    // Predicated region
    $region98: #{tpu_custom_call.1} parent=1 // pred_check
      _
    $region99: #{tpu_custom_call.1} parent=1 // pred_check_branch
      %3034 = sbr.rel (0) target = $region101
    $region100: #{tpu_custom_call.1} parent=1 // pred_region
      _
    $region101: #{tpu_custom_call.1} parent=1 // pred_fallthru
      _
    %3035 = vsyncpa [#allocation8], 1
    %3036 = vsyncpa [#allocation10], 1
    %3037 = vsyncpa [#allocation13], 1
    %3038 = vsyncpa [#allocation16], 1

</llo_original>
